<compile_context>
chip_gen: v6e
topology: v6e:2x2x1
jax: 0.10.0
libtpu: 0.0.40
codegen_flags: <defaults>
</compile_context>

<pallas_src>
import jax
import jax.numpy as jnp
from jax.experimental import pallas as pl
from jax.experimental.pallas import tpu as pltpu

K_IN = 32 * 32 * 3        # 3072
N1 = 1024
N2, N2_PAD = 600, 640     # pad to lane multiple
N3, N3_PAD = 10, 128      # pad to lane multiple


def _round_up(x, m):
    return (x + m - 1) // m * m


def mlp_kernel(x_ref, w1_ref, b1_ref, w2_ref, b2_ref, w3_ref, b3_ref,
               out_ref, acc_ref):
    k = pl.program_id(1)

    @pl.when(k == 0)
    def _init():
        acc_ref[...] = jnp.zeros_like(acc_ref)

    # Layer 1 partial product: (TB, TK) x (TK, 1024), bf16 MXU, f32 accumulate.
    acc_ref[...] += jnp.dot(x_ref[...], w1_ref[...],
                            preferred_element_type=jnp.float32)

    @pl.when(k == pl.num_programs(1) - 1)
    def _finalize():
        # Bias + ReLU only once, on the final K step (no partial activation).
        h1 = jnp.maximum(acc_ref[...] + b1_ref[...], 0.0).astype(jnp.bfloat16)

        # Layer 2: Linear(1024 -> 640 padded) + ReLU
        h2 = jnp.dot(h1, w2_ref[...], preferred_element_type=jnp.float32)
        h2 = jnp.maximum(h2 + b2_ref[...], 0.0).astype(jnp.bfloat16)

        # Output layer: Linear(640 -> 128 padded), no activation
        out = jnp.dot(h2, w3_ref[...], preferred_element_type=jnp.float32)
        out_ref[...] = (out + b3_ref[...]).astype(out_ref.dtype)


def cifar10_forward(x, params, *, batch_tile=512, k_tile=1024):
    """x: (B, 3, 32, 32) float32 NCHW. Returns logits (B, 10) float32."""
    w1, b1, w2, b2, w3, b3 = params
    B = x.shape[0]
    x_flat = x.reshape(B, K_IN)  # same flatten order as torch .view(-1, 3072)

    # ---- batch tiling / sublane padding ----
    if B <= batch_tile:
        b_pad = max(8, _round_up(B, 8))
        tb = b_pad                       # single batch tile
    else:
        tb = batch_tile
        b_pad = _round_up(B, tb)
    if b_pad != B:
        x_flat = jnp.pad(x_flat, ((0, b_pad - B), (0, 0)))

    # ---- lane padding of the narrow dims (zero-padded -> logits unchanged) ----
    w2p = jnp.pad(w2, ((0, 0), (0, N2_PAD - N2)))
    b2p = jnp.pad(b2, ((0, 0), (0, N2_PAD - N2)))
    w3p = jnp.pad(w3, ((0, N2_PAD - N2), (0, N3_PAD - N3)))
    b3p = jnp.pad(b3, ((0, 0), (0, N3_PAD - N3)))

    # ---- bf16 matmul operands; biases / accumulator stay f32 ----
    x_bf = x_flat.astype(jnp.bfloat16)
    w1_bf = w1.astype(jnp.bfloat16)
    w2_bf = w2p.astype(jnp.bfloat16)
    w3_bf = w3p.astype(jnp.bfloat16)

    n_i = b_pad // tb
    n_k = K_IN // k_tile

    grid_spec = pltpu.PrefetchScalarGridSpec(
        num_scalar_prefetch=0,
        grid=(n_i, n_k),                                        # K reduction last
        in_specs=[
            pl.BlockSpec((tb, k_tile), lambda i, k: (i, k)),        # x tile
            pl.BlockSpec((k_tile, N1), lambda i, k: (k, 0)),        # w1 K-chunk (streamed)
            pl.BlockSpec((1, N1), lambda i, k: (0, 0)),             # b1 (resident)
            pl.BlockSpec((N1, N2_PAD), lambda i, k: (0, 0)),        # w2 (resident)
            pl.BlockSpec((1, N2_PAD), lambda i, k: (0, 0)),         # b2 (resident)
            pl.BlockSpec((N2_PAD, N3_PAD), lambda i, k: (0, 0)),    # w3 (resident)
            pl.BlockSpec((1, N3_PAD), lambda i, k: (0, 0)),         # b3 (resident)
        ],
        out_specs=pl.BlockSpec((tb, N3_PAD), lambda i, k: (i, 0)),
        scratch_shapes=[pltpu.VMEM((tb, N1), jnp.float32)],         # layer-1 accumulator
    )

    out = pl.pallas_call(
        mlp_kernel,
        out_shape=jax.ShapeDtypeStruct((b_pad, N3_PAD), jnp.float32),
        grid_spec=grid_spec,
        compiler_params=pltpu.CompilerParams(
            dimension_semantics=("parallel", "arbitrary"),
            vmem_limit_bytes=48 << 20,   # fits v7x's 64 MiB physical VMEM with headroom
        ),
    )(x_bf, w1_bf, b1, w2_bf, b2p, w3_bf, b3p)

    return out[:B, :N3]


def init_params(key):
    """Deterministic init matching the nn.Linear shapes.

    Weights stored as (in_features, out_features) == W.T of the torch layout.
    Biases stored as (1, out_features) for clean TPU broadcasting.
    """
    k1, k2, k3, k4, k5, k6 = jax.random.split(key, 6)

    def lin(kw, kb, fan_in, fan_out):
        bound = 1.0 / jnp.sqrt(fan_in)
        w = jax.random.uniform(kw, (fan_in, fan_out), jnp.float32, -bound, bound)
        b = jax.random.uniform(kb, (1, fan_out), jnp.float32, -bound, bound)
        return w, b

    w1, b1 = lin(k1, k2, K_IN, N1)
    w2, b2 = lin(k3, k4, N1, N2)
    w3, b3 = lin(k5, k6, N2, N3)
    return (w1, b1, w2, b2, w3, b3)


def reference_forward_bf16(x, params):
    """Reference that mirrors the kernel's bf16-operand / f32-accumulate numerics."""
    w1, b1, w2, b2, w3, b3 = params
    bf = lambda a: a.astype(jnp.bfloat16).astype(jnp.float32)
    h = bf(x.reshape(x.shape[0], -1))
    h = bf(jnp.maximum(h @ bf(w1) + b1, 0.0))
    h = bf(jnp.maximum(h @ bf(w2) + b2, 0.0))
    return h @ bf(w3) + b3


def reference_forward_f32(x, params):
    w1, b1, w2, b2, w3, b3 = params
    h = x.reshape(x.shape[0], -1)
    h = jnp.maximum(h @ w1 + b1, 0.0)
    h = jnp.maximum(h @ w2 + b2, 0.0)
    return h @ w3 + b3


if __name__ == "__main__":
    key = jax.random.PRNGKey(0)
    kx, kp = jax.random.split(key)

    B = 2
    x = jax.random.normal(kx, (B, 3, 32, 32), jnp.float32)  # NCHW, CIFAR-10 shape
    params = init_params(kp)

    logits = cifar10_forward(x, params)
    logits = jax.block_until_ready(logits)

    assert logits.shape == (B, 10)

    ref_bf = reference_forward_bf16(x, params)
    assert jnp.allclose(logits, ref_bf, atol=2e-3, rtol=2e-3), \
        "mismatch vs bf16-operand JAX reference"

    # Loose sanity check against the full-precision reference (bf16 weights
    # introduce a small, expected deviation from pure f32 math).
    ref_f32 = reference_forward_f32(x, params)
    assert jnp.allclose(logits, ref_f32, atol=5e-2, rtol=5e-2), \
        "mismatch vs f32 JAX reference (beyond expected bf16 error)"

    print("KERNEL_OK")
</pallas_src>

<mosaic_0001>
module attributes {stable_mosaic.version = 11 : i64} {
  func.func @mlp_kernel(%arg0: i32, %arg1: i32, %arg2: memref<8x1024xbf16, #tpu.memory_space<vmem>>, %arg3: memref<1024x1024xbf16, #tpu.memory_space<vmem>>, %arg4: memref<1x1024xf32, #tpu.memory_space<vmem>>, %arg5: memref<1024x640xbf16, #tpu.memory_space<vmem>>, %arg6: memref<1x640xf32, #tpu.memory_space<vmem>>, %arg7: memref<640x128xbf16, #tpu.memory_space<vmem>>, %arg8: memref<1x128xf32, #tpu.memory_space<vmem>>, %arg9: memref<8x128xf32, #tpu.memory_space<vmem>>, %arg10: memref<8x1024xf32, #tpu.memory_space<vmem>>) attributes {dimension_semantics = [#tpu.dimension_semantics<parallel>, #tpu.dimension_semantics<arbitrary>], iteration_bounds = array<i64: 1, 3>, scalar_prefetch = 0 : i64, scratch_operands = 1 : i64, tpu.core_type = #tpu.core_type<tc>, window_params = [{transform_indices = @transform_0, window_bounds = array<i64: 8, 1024>}, {transform_indices = @transform_1, window_bounds = array<i64: 1024, 1024>}, {pipeline_mode = #tpu.pipeline_mode<synchronous>, transform_indices = @transform_2, window_bounds = array<i64: 1, 1024>}, {pipeline_mode = #tpu.pipeline_mode<synchronous>, transform_indices = @transform_3, window_bounds = array<i64: 1024, 640>}, {pipeline_mode = #tpu.pipeline_mode<synchronous>, transform_indices = @transform_4, window_bounds = array<i64: 1, 640>}, {pipeline_mode = #tpu.pipeline_mode<synchronous>, transform_indices = @transform_5, window_bounds = array<i64: 640, 128>}, {pipeline_mode = #tpu.pipeline_mode<synchronous>, transform_indices = @transform_6, window_bounds = array<i64: 1, 128>}, {transform_indices = @transform_7, window_bounds = array<i64: 8, 128>}]} {
    %c0_i32 = arith.constant 0 : i32
    %0 = arith.cmpi eq, %arg1, %c0_i32 : i32
    %1 = arith.extui %0 : i1 to i32
    %c0_i32_0 = arith.constant 0 : i32
    %2 = arith.cmpi ne, %1, %c0_i32_0 : i32
    scf.if %2 {
      %cst_9 = arith.constant 0.000000e+00 : f32
      %12 = vector.broadcast %cst_9 : f32 to vector<8x1024xf32>
      %c0_10 = arith.constant 0 : index
      %c0_11 = arith.constant 0 : index
      %13 = vector.load %arg10[%c0_10, %c0_11] : memref<8x1024xf32, #tpu.memory_space<vmem>>, vector<8x1024xf32>
      tpu.vector_store %arg10[%c0_10, %c0_11], %12 {strides = array<i32>} : memref<8x1024xf32, #tpu.memory_space<vmem>>, vector<8x1024xf32>,
    } else {
    }
    %c0 = arith.constant 0 : index
    %c0_1 = arith.constant 0 : index
    %3 = vector.load %arg10[%c0, %c0_1] : memref<8x1024xf32, #tpu.memory_space<vmem>>, vector<8x1024xf32>
    %c0_2 = arith.constant 0 : index
    %c0_3 = arith.constant 0 : index
    %4 = vector.load %arg2[%c0_2, %c0_3] : memref<8x1024xbf16, #tpu.memory_space<vmem>>, vector<8x1024xbf16>
    %c0_4 = arith.constant 0 : index
    %c0_5 = arith.constant 0 : index
    %5 = vector.load %arg3[%c0_4, %c0_5] : memref<1024x1024xbf16, #tpu.memory_space<vmem>>, vector<1024x1024xbf16>
    %cst = arith.constant dense<0.000000e+00> : vector<8x1024xf32>
    %6 = tpu.matmul %4, %5, %cst {dimension_numbers = #tpu.dot_dimension_numbers<[1], [0], [0], [1], [0, 0, 1, 1], [], []>} : vector<8x1024xbf16>, vector<1024x1024xbf16>, vector<8x1024xf32> -> vector<8x1024xf32>
    %7 = arith.addf %3, %6 : vector<8x1024xf32>
    %c0_6 = arith.constant 0 : index
    %c0_7 = arith.constant 0 : index
    %8 = vector.load %arg10[%c0_6, %c0_7] : memref<8x1024xf32, #tpu.memory_space<vmem>>, vector<8x1024xf32>
    tpu.vector_store %arg10[%c0_6, %c0_7], %7 {strides = array<i32>} : memref<8x1024xf32, #tpu.memory_space<vmem>>, vector<8x1024xf32>,
    %c2_i32 = arith.constant 2 : i32
    %9 = arith.cmpi eq, %arg1, %c2_i32 : i32
    %10 = arith.extui %9 : i1 to i32
    %c0_i32_8 = arith.constant 0 : i32
    %11 = arith.cmpi ne, %10, %c0_i32_8 : i32
    scf.if %11 {
      %c0_9 = arith.constant 0 : index
      %c0_10 = arith.constant 0 : index
      %12 = vector.load %arg10[%c0_9, %c0_10] : memref<8x1024xf32, #tpu.memory_space<vmem>>, vector<8x1024xf32>
      %c0_11 = arith.constant 0 : index
      %c0_12 = arith.constant 0 : index
      %13 = vector.load %arg4[%c0_11, %c0_12] : memref<1x1024xf32, #tpu.memory_space<vmem>>, vector<1x1024xf32>
      %14 = vector.broadcast %13 : vector<1x1024xf32> to vector<8x1024xf32>
      %15 = arith.addf %12, %14 : vector<8x1024xf32>
      %cst_13 = arith.constant 0.000000e+00 : f32
      %16 = vector.broadcast %cst_13 : f32 to vector<8x1024xf32>
      %17 = arith.maximumf %15, %16 : vector<8x1024xf32>
      %18 = arith.truncf %17 : vector<8x1024xf32> to vector<8x1024xbf16>
      %c0_14 = arith.constant 0 : index
      %c0_15 = arith.constant 0 : index
      %19 = vector.load %arg5[%c0_14, %c0_15] : memref<1024x640xbf16, #tpu.memory_space<vmem>>, vector<1024x640xbf16>
      %cst_16 = arith.constant dense<0.000000e+00> : vector<8x640xf32>
      %20 = tpu.matmul %18, %19, %cst_16 {dimension_numbers = #tpu.dot_dimension_numbers<[1], [0], [0], [1], [0, 0, 1, 1], [], []>} : vector<8x1024xbf16>, vector<1024x640xbf16>, vector<8x640xf32> -> vector<8x640xf32>
      %c0_17 = arith.constant 0 : index
      %c0_18 = arith.constant 0 : index
      %21 = vector.load %arg6[%c0_17, %c0_18] : memref<1x640xf32, #tpu.memory_space<vmem>>, vector<1x640xf32>
      %22 = vector.broadcast %21 : vector<1x640xf32> to vector<8x640xf32>
      %23 = arith.addf %20, %22 : vector<8x640xf32>
      %cst_19 = arith.constant 0.000000e+00 : f32
      %24 = vector.broadcast %cst_19 : f32 to vector<8x640xf32>
      %25 = arith.maximumf %23, %24 : vector<8x640xf32>
      %26 = arith.truncf %25 : vector<8x640xf32> to vector<8x640xbf16>
      %c0_20 = arith.constant 0 : index
      %c0_21 = arith.constant 0 : index
      %27 = vector.load %arg7[%c0_20, %c0_21] : memref<640x128xbf16, #tpu.memory_space<vmem>>, vector<640x128xbf16>
      %cst_22 = arith.constant dense<0.000000e+00> : vector<8x128xf32>
      %28 = tpu.matmul %26, %27, %cst_22 {dimension_numbers = #tpu.dot_dimension_numbers<[1], [0], [0], [1], [0, 0, 1, 1], [], []>} : vector<8x640xbf16>, vector<640x128xbf16>, vector<8x128xf32> -> vector<8x128xf32>
      %c0_23 = arith.constant 0 : index
      %c0_24 = arith.constant 0 : index
      %29 = vector.load %arg8[%c0_23, %c0_24] : memref<1x128xf32, #tpu.memory_space<vmem>>, vector<1x128xf32>
      %30 = vector.broadcast %29 : vector<1x128xf32> to vector<8x128xf32>
      %31 = arith.addf %28, %30 : vector<8x128xf32>
      %c0_25 = arith.constant 0 : index
      %c0_26 = arith.constant 0 : index
      %32 = vector.load %arg9[%c0_25, %c0_26] : memref<8x128xf32, #tpu.memory_space<vmem>>, vector<8x128xf32>
      tpu.vector_store %arg9[%c0_25, %c0_26], %31 {strides = array<i32>} : memref<8x128xf32, #tpu.memory_space<vmem>>, vector<8x128xf32>,
    } else {
    }
    return
  }
  func.func @transform_0(%arg0: i32, %arg1: i32) -> (i32, i32) {
    %c0_i32 = arith.constant 0 : i32
    return %arg0, %arg1 : i32, i32
  }
  func.func @transform_1(%arg0: i32, %arg1: i32) -> (i32, i32) {
    %c0_i32 = arith.constant 0 : i32
    %c0_i32_0 = arith.constant 0 : i32
    return %arg1, %c0_i32 : i32, i32
  }
  func.func @transform_2(%arg0: i32, %arg1: i32) -> (i32, i32) {
    %c0_i32 = arith.constant 0 : i32
    %c0_i32_0 = arith.constant 0 : i32
    %c0_i32_1 = arith.constant 0 : i32
    return %c0_i32, %c0_i32_0 : i32, i32
  }
  func.func @transform_3(%arg0: i32, %arg1: i32) -> (i32, i32) {
    %c0_i32 = arith.constant 0 : i32
    %c0_i32_0 = arith.constant 0 : i32
    %c0_i32_1 = arith.constant 0 : i32
    return %c0_i32, %c0_i32_0 : i32, i32
  }
  func.func @transform_4(%arg0: i32, %arg1: i32) -> (i32, i32) {
    %c0_i32 = arith.constant 0 : i32
    %c0_i32_0 = arith.constant 0 : i32
    %c0_i32_1 = arith.constant 0 : i32
    return %c0_i32, %c0_i32_0 : i32, i32
  }
  func.func @transform_5(%arg0: i32, %arg1: i32) -> (i32, i32) {
    %c0_i32 = arith.constant 0 : i32
    %c0_i32_0 = arith.constant 0 : i32
    %c0_i32_1 = arith.constant 0 : i32
    return %c0_i32, %c0_i32_0 : i32, i32
  }
  func.func @transform_6(%arg0: i32, %arg1: i32) -> (i32, i32) {
    %c0_i32 = arith.constant 0 : i32
    %c0_i32_0 = arith.constant 0 : i32
    %c0_i32_1 = arith.constant 0 : i32
    return %c0_i32, %c0_i32_0 : i32, i32
  }
  func.func @transform_7(%arg0: i32, %arg1: i32) -> (i32, i32) {
    %c0_i32 = arith.constant 0 : i32
    %c0_i32_0 = arith.constant 0 : i32
    return %arg0, %c0_i32 : i32, i32
  }
}

</mosaic_0001>

<llo_original>
// kernel: tpu_custom_call.1
$region0: #{tpu_custom_call.1}
  #allocation0 [shape = 'u32[]', space=smem, size = 0x4, offset = 0x4, fixed_abs, tag = 'smem constant byte address 0x4 - core index']
  #allocation1 [shape = 'u32[144,128]{1,0:T(1,128)}', space=vmem, size = 0x12000, scoped, tag = 'internal scratch']
  #allocation2 [shape = 'f32[8,1024]{1,0:T(8,128)}', space=vmem, size = 0x8000, scoped, tag = 'scratch operand']
  %s0 = inlined_call_operand.hbm [shape: bf16[8,3072], index: 0, kind: input, shape index: {}]
  %s1 = inlined_call_operand.hbm [shape: bf16[3072,1024], index: 1, kind: input, shape index: {}]
  %s2 = inlined_call_operand.hbm [shape: f32[1,1024], index: 2, kind: input, shape index: {}]
  %s3 = inlined_call_operand.hbm [shape: bf16[1024,640], index: 3, kind: input, shape index: {}]
  %s4 = inlined_call_operand.hbm [shape: f32[1,640], index: 4, kind: input, shape index: {}]
  %s5 = inlined_call_operand.hbm [shape: bf16[640,128], index: 5, kind: input, shape index: {}]
  %s6 = inlined_call_operand.hbm [shape: f32[1,128], index: 6, kind: input, shape index: {}]
  %s7 = inlined_call_operand.hbm [shape: f32[8,128], index: 7, kind: output, shape index: {}]
  %s8 = sld [smem:[#allocation0]]
  $region97: #{tpu_custom_call.1} parent=0
    _
  %s10 = ssub.s32 1, %s8
  %s11 = scalar_select 0, %s10, %s8
  $region1: #{tpu_custom_call.1} parent=0
    #allocation3 [shape = 'u8[32768]{0}', space=vmem, size = 0x8000, scoped, tag = 'input window, operand 0']
    #allocation4 [shape = 's32[2]{0}', space=sflag, size = 0x8, scoped, tag = 'scoped memory for tpu_custom_call.1']
    #allocation5 [shape = 's32[2]{0}', space=sflag, size = 0x8, scoped, tag = 'scoped memory for tpu_custom_call.1']
    #allocation6 [shape = 'u8[4194304]{0}', space=vmem, size = 0x400000, scoped, tag = 'input window, operand 1']
    #allocation7 [shape = 's32[2]{0}', space=sflag, size = 0x8, scoped, tag = 'scoped memory for tpu_custom_call.1']
    #allocation8 [shape = 'u8[4096]{0}', space=vmem, size = 0x1000, scoped, tag = 'input window, operand 2, single buffered']
    #allocation9 [shape = 'u8[1310720]{0}', space=vmem, size = 0x140000, scoped, tag = 'input window, operand 3, single buffered']
    #allocation10 [shape = 's32[1]{0}', space=sflag, size = 0x4, scoped, tag = 'scoped memory for tpu_custom_call.1']
    #allocation11 [shape = 'u8[2560]{0}', space=vmem, size = 0xc00, scoped, tag = 'input window, operand 4, single buffered']
    #allocation12 [shape = 'u8[163840]{0}', space=vmem, size = 0x28000, scoped, tag = 'input window, operand 5, single buffered']
    #allocation13 [shape = 's32[1]{0}', space=sflag, size = 0x4, scoped, tag = 'scoped memory for tpu_custom_call.1']
    #allocation14 [shape = 'u8[512]{0}', space=vmem, size = 0x400, scoped, tag = 'input window, operand 6, single buffered']
    #allocation15 [shape = 'u8[4096]{0}', space=vmem, size = 0x1000, scoped, tag = 'output window, operand 0, single buffered']
    %12 = vsyncpa [#allocation4], 0
    %s13 = scalar_lea.sflag [#allocation4], 1
    %14 = vsyncpa %s13, 0
    %15 = vsyncpa [#allocation7], 0
    %s16 = scalar_lea.sflag [#allocation7], 1
    %17 = vsyncpa %s16, 0
    %18 = vsyncpa [#allocation10], 0
    %19 = vsyncpa [#allocation13], 0
    %20 = vsyncpa [#allocation5], 0
    loop: start=0, step=1, limit=5
    $region2: #{tpu_custom_call.1} parent=1 // loop_pre_header
      _
    $region3: #{tpu_custom_call.1} parent=1 // loop_header
      %s22 = sphi 0, %s26
      %p23 = scmp.ge.s32.totalorder %s22, 5
      %s29 = sphi 0, %s41
      %s30 = sphi 0, %s37
      %s31 = sphi 0, %s29
      %s32 = sphi 0, %s30
      %s33 = sphi 0, %s31
      %s34 = sphi 0, %s32
      %s46 = sphi 0, %s48
      %s49 = sphi 0, %s46
      %s50 = sphi 0, %s49
      %s66 = sphi 0, %s50
      %s72 = sphi 0, %s74
      %s75 = sphi 0, %s72
      %s76 = sphi 0, %s75
      %s92 = sphi 0, %s76
      %s96 = sphi 0, %s96
      %s98 = sphi 0, %s96
      %s99 = sphi 0, %s98
      %s113 = sphi 0, %s99
      %s117 = sphi 0, %s117
      %s119 = sphi 0, %s117
      %s120 = sphi 0, %s119
      %s134 = sphi 0, %s120
      %s138 = sphi 0, %s138
      %s140 = sphi 0, %s138
      %s141 = sphi 0, %s140
      %s155 = sphi 0, %s141
      %s159 = sphi 0, %s159
      %s161 = sphi 0, %s159
      %s162 = sphi 0, %s161
      %s176 = sphi 0, %s162
      %s180 = sphi 0, %s180
      %s182 = sphi 0, %s180
      %s183 = sphi 0, %s182
      %s197 = sphi 0, %s183
      %s203 = sphi 0, %s205
      %s206 = sphi 0, %s203
      %s207 = sphi 0, %s206
      %s223 = sphi 0, %s207
    $region4: #{tpu_custom_call.1} parent=1 // loop_header_branch
      %25 = sbr.rel (%p23) target = $region8
    $region5: #{tpu_custom_call.1} parent=1 // loop_body
      %s27 = ssub.s32 %s22, 1
      %s28 = ssub.s32 %s22, 2
      %s35 = sadd.s32 1, %s30
      %p36 = scmp.ge.s32.totalorder %s35, 3
      %s37 = scalar_select %p36, 0, %s35
      %s38 = sadd.s32 1, %s29
      %s39 = scalar_select %p36, %s38, %s29
      %p40 = scmp.ge.s32.totalorder %s39, 1
      %s41 = scalar_select %p40, 0, %s39
      %s42 = ssub.s32 %s29, %s41
      %s43 = ssub.s32 %s30, %s37
      %s44 = sor.u32 %s42, %s43
      %p45 = scmp.eq.s32.totalorder %s44, 0
      %s47 = sadd.s32 %s46, 1
      %s48 = scalar_select %p45, %s46, %s47
      %p51 = pneg %p45
      %p52 = scmp.eq.s32.totalorder %s22, 2
      %p53 = por %p51, %p52
      %p54 = scmp.ne.s32.totalorder %s46, %s49
      %p55 = scmp.eq.s32.totalorder %s22, 0
      %p56 = por %p54, %p55
      %p57 = scmp.ne.s32.totalorder %s46, %s49
      %p58 = scmp.eq.s32.totalorder %s27, 2
      %p59 = por %p57, %p58
      %p60 = scmp.ne.s32.totalorder %s49, %s50
      %p61 = scmp.eq.s32.totalorder %s27, 0
      %p62 = por %p60, %p61
      %p63 = scmp.ne.s32.totalorder %s49, %s50
      %p64 = scmp.eq.s32.totalorder %s28, 2
      %p65 = por %p63, %p64
      %p67 = scmp.ne.s32.totalorder %s50, %s66
      %p68 = scmp.eq.s32.totalorder %s28, 0
      %p69 = por %p67, %p68
      %s70 = ssub.s32 %s30, %s37
      %p71 = scmp.eq.s32.totalorder %s70, 0
      %s73 = sadd.s32 %s72, 1
      %s74 = scalar_select %p71, %s72, %s73
      %p77 = pneg %p71
      %p78 = scmp.eq.s32.totalorder %s22, 2
      %p79 = por %p77, %p78
      %p80 = scmp.ne.s32.totalorder %s72, %s75
      %p81 = scmp.eq.s32.totalorder %s22, 0
      %p82 = por %p80, %p81
      %p83 = scmp.ne.s32.totalorder %s72, %s75
      %p84 = scmp.eq.s32.totalorder %s27, 2
      %p85 = por %p83, %p84
      %p86 = scmp.ne.s32.totalorder %s75, %s76
      %p87 = scmp.eq.s32.totalorder %s27, 0
      %p88 = por %p86, %p87
      %p89 = scmp.ne.s32.totalorder %s75, %s76
      %p90 = scmp.eq.s32.totalorder %s28, 2
      %p91 = por %p89, %p90
      %p93 = scmp.ne.s32.totalorder %s76, %s92
      %p94 = scmp.eq.s32.totalorder %s28, 0
      %p95 = por %p93, %p94
      %s97 = sadd.s32 %s96, 1
      %p100 = scmp.eq.s32.totalorder %s22, 2
      %p101 = scmp.ne.s32.totalorder %s96, %s98
      %p102 = scmp.eq.s32.totalorder %s22, 0
      %p103 = por %p101, %p102
      %p104 = scmp.ne.s32.totalorder %s96, %s98
      %p105 = scmp.eq.s32.totalorder %s27, 2
      %p106 = por %p104, %p105
      %p107 = scmp.ne.s32.totalorder %s98, %s99
      %p108 = scmp.eq.s32.totalorder %s27, 0
      %p109 = por %p107, %p108
      %p110 = scmp.ne.s32.totalorder %s98, %s99
      %p111 = scmp.eq.s32.totalorder %s28, 2
      %p112 = por %p110, %p111
      %p114 = scmp.ne.s32.totalorder %s99, %s113
      %p115 = scmp.eq.s32.totalorder %s28, 0
      %p116 = por %p114, %p115
      %s118 = sadd.s32 %s117, 1
      %p121 = scmp.eq.s32.totalorder %s22, 2
      %p122 = scmp.ne.s32.totalorder %s117, %s119
      %p123 = scmp.eq.s32.totalorder %s22, 0
      %p124 = por %p122, %p123
      %p125 = scmp.ne.s32.totalorder %s117, %s119
      %p126 = scmp.eq.s32.totalorder %s27, 2
      %p127 = por %p125, %p126
      %p128 = scmp.ne.s32.totalorder %s119, %s120
      %p129 = scmp.eq.s32.totalorder %s27, 0
      %p130 = por %p128, %p129
      %p131 = scmp.ne.s32.totalorder %s119, %s120
      %p132 = scmp.eq.s32.totalorder %s28, 2
      %p133 = por %p131, %p132
      %p135 = scmp.ne.s32.totalorder %s120, %s134
      %p136 = scmp.eq.s32.totalorder %s28, 0
      %p137 = por %p135, %p136
      %s139 = sadd.s32 %s138, 1
      %p142 = scmp.eq.s32.totalorder %s22, 2
      %p143 = scmp.ne.s32.totalorder %s138, %s140
      %p144 = scmp.eq.s32.totalorder %s22, 0
      %p145 = por %p143, %p144
      %p146 = scmp.ne.s32.totalorder %s138, %s140
      %p147 = scmp.eq.s32.totalorder %s27, 2
      %p148 = por %p146, %p147
      %p149 = scmp.ne.s32.totalorder %s140, %s141
      %p150 = scmp.eq.s32.totalorder %s27, 0
      %p151 = por %p149, %p150
      %p152 = scmp.ne.s32.totalorder %s140, %s141
      %p153 = scmp.eq.s32.totalorder %s28, 2
      %p154 = por %p152, %p153
      %p156 = scmp.ne.s32.totalorder %s141, %s155
      %p157 = scmp.eq.s32.totalorder %s28, 0
      %p158 = por %p156, %p157
      %s160 = sadd.s32 %s159, 1
      %p163 = scmp.eq.s32.totalorder %s22, 2
      %p164 = scmp.ne.s32.totalorder %s159, %s161
      %p165 = scmp.eq.s32.totalorder %s22, 0
      %p166 = por %p164, %p165
      %p167 = scmp.ne.s32.totalorder %s159, %s161
      %p168 = scmp.eq.s32.totalorder %s27, 2
      %p169 = por %p167, %p168
      %p170 = scmp.ne.s32.totalorder %s161, %s162
      %p171 = scmp.eq.s32.totalorder %s27, 0
      %p172 = por %p170, %p171
      %p173 = scmp.ne.s32.totalorder %s161, %s162
      %p174 = scmp.eq.s32.totalorder %s28, 2
      %p175 = por %p173, %p174
      %p177 = scmp.ne.s32.totalorder %s162, %s176
      %p178 = scmp.eq.s32.totalorder %s28, 0
      %p179 = por %p177, %p178
      %s181 = sadd.s32 %s180, 1
      %p184 = scmp.eq.s32.totalorder %s22, 2
      %p185 = scmp.ne.s32.totalorder %s180, %s182
      %p186 = scmp.eq.s32.totalorder %s22, 0
      %p187 = por %p185, %p186
      %p188 = scmp.ne.s32.totalorder %s180, %s182
      %p189 = scmp.eq.s32.totalorder %s27, 2
      %p190 = por %p188, %p189
      %p191 = scmp.ne.s32.totalorder %s182, %s183
      %p192 = scmp.eq.s32.totalorder %s27, 0
      %p193 = por %p191, %p192
      %p194 = scmp.ne.s32.totalorder %s182, %s183
      %p195 = scmp.eq.s32.totalorder %s28, 2
      %p196 = por %p194, %p195
      %p198 = scmp.ne.s32.totalorder %s183, %s197
      %p199 = scmp.eq.s32.totalorder %s28, 0
      %p200 = por %p198, %p199
      %s201 = ssub.s32 %s29, %s41
      %p202 = scmp.eq.s32.totalorder %s201, 0
      %s204 = sadd.s32 %s203, 1
      %s205 = scalar_select %p202, %s203, %s204
      %p208 = pneg %p202
      %p209 = scmp.eq.s32.totalorder %s22, 2
      %p210 = por %p208, %p209
      %p211 = scmp.ne.s32.totalorder %s203, %s206
      %p212 = scmp.eq.s32.totalorder %s22, 0
      %p213 = por %p211, %p212
      %p214 = scmp.ne.s32.totalorder %s203, %s206
      %p215 = scmp.eq.s32.totalorder %s27, 2
      %p216 = por %p214, %p215
      %p217 = scmp.ne.s32.totalorder %s206, %s207
      %p218 = scmp.eq.s32.totalorder %s27, 0
      %p219 = por %p217, %p218
      %p220 = scmp.ne.s32.totalorder %s206, %s207
      %p221 = scmp.eq.s32.totalorder %s28, 2
      %p222 = por %p220, %p221
      %p224 = scmp.ne.s32.totalorder %s207, %s223
      %p225 = scmp.eq.s32.totalorder %s28, 0
      %p226 = por %p224, %p225
      %p227 = scmp.le.s32.totalorder 1, %s22
      %p228 = scmp.lt.s32.totalorder %s22, 4
      %p229 = pnand %p227, %p228
      %p230 = pneg %p229
      // Predicated region
      $region9: #{tpu_custom_call.1} parent=5 // pred_check
        _
      $region10: #{tpu_custom_call.1} parent=5 // pred_check_branch
        %232 = sbr.rel (%p229) target = $region12
      $region11: #{tpu_custom_call.1} parent=5 // pred_region
        %s233 = ssub.s32 %s22, 1
        // Predicated region
        $region13: #{tpu_custom_call.1} parent=11 // pred_check
          %p234 = pneg %p109
        $region14: #{tpu_custom_call.1} parent=11 // pred_check_branch
          %236 = sbr.rel (%p234) target = $region16
        $region15: #{tpu_custom_call.1} parent=11 // pred_region
          %s238 = ssub.s32 128, 128
          %239 = vsyncadd [#allocation7], %s238
          %s241 = sshll.u32 [#allocation8], 4
          %s242 = int_to_ptr.vmem [resolvable:$true] %s241
          %244 = dma.hbm_to_vmem [thread:$0]  %s2, 128, %s242, [#allocation7]
        $region16: #{tpu_custom_call.1} parent=11 // pred_fallthru
          _
        // Predicated region
        $region17: #{tpu_custom_call.1} parent=11 // pred_check
          %p245 = pneg %p130
        $region18: #{tpu_custom_call.1} parent=11 // pred_check_branch
          %247 = sbr.rel (%p245) target = $region20
        $region19: #{tpu_custom_call.1} parent=11 // pred_region
          %s249 = ssub.s32 40960, 40960
          %250 = vsyncadd [#allocation10], %s249
          %s251 = sshll.u32 [#allocation9], 4
          %s252 = int_to_ptr.vmem [resolvable:$true] %s251
          %257 = dma.hbm_to_vmem [thread:$0]  %s3, 40960, %s252, [#allocation10], 320, 320, 20
        $region20: #{tpu_custom_call.1} parent=11 // pred_fallthru
          _
        // Predicated region
        $region21: #{tpu_custom_call.1} parent=11 // pred_check
          %p258 = pneg %p151
        $region22: #{tpu_custom_call.1} parent=11 // pred_check_branch
          %260 = sbr.rel (%p258) target = $region24
        $region23: #{tpu_custom_call.1} parent=11 // pred_region
          %s262 = ssub.s32 80, 80
          %263 = vsyncadd [#allocation10], %s262
          %s265 = sshll.u32 [#allocation11], 4
          %s266 = int_to_ptr.vmem [resolvable:$true] %s265
          %268 = dma.hbm_to_vmem [thread:$0]  %s4, 80, %s266, [#allocation10]
        $region24: #{tpu_custom_call.1} parent=11 // pred_fallthru
          _
        // Predicated region
        $region25: #{tpu_custom_call.1} parent=11 // pred_check
          %p269 = pneg %p172
        $region26: #{tpu_custom_call.1} parent=11 // pred_check_branch
          %271 = sbr.rel (%p269) target = $region28
        $region27: #{tpu_custom_call.1} parent=11 // pred_region
          %s273 = ssub.s32 5120, 5120
          %274 = vsyncadd [#allocation13], %s273
          %s275 = sshll.u32 [#allocation12], 4
          %s276 = int_to_ptr.vmem [resolvable:$true] %s275
          %281 = dma.hbm_to_vmem [thread:$0]  %s5, 5120, %s276, [#allocation13], 64, 64, 4
        $region28: #{tpu_custom_call.1} parent=11 // pred_fallthru
          _
        // Predicated region
        $region29: #{tpu_custom_call.1} parent=11 // pred_check
          %p282 = pneg %p193
        $region30: #{tpu_custom_call.1} parent=11 // pred_check_branch
          %284 = sbr.rel (%p282) target = $region32
        $region31: #{tpu_custom_call.1} parent=11 // pred_region
          %s286 = ssub.s32 16, 16
          %287 = vsyncadd [#allocation13], %s286
          %s289 = sshll.u32 [#allocation14], 4
          %s290 = int_to_ptr.vmem [resolvable:$true] %s289
          %292 = dma.hbm_to_vmem [thread:$0]  %s6, 16, %s290, [#allocation13]
        $region32: #{tpu_custom_call.1} parent=11 // pred_fallthru
          _
      $region12: #{tpu_custom_call.1} parent=5 // pred_fallthru
        _
      %p293 = scmp.lt.s32.totalorder %s22, 3
      // Predicated region
      $region33: #{tpu_custom_call.1} parent=5 // pred_check
        %p294 = pneg %p293
      $region34: #{tpu_custom_call.1} parent=5 // pred_check_branch
        %296 = sbr.rel (%p294) target = $region36
      $region35: #{tpu_custom_call.1} parent=5 // pred_region
        // Predicated region
        $region37: #{tpu_custom_call.1} parent=35 // pred_check
          %p297 = pneg %p56
        $region38: #{tpu_custom_call.1} parent=35 // pred_check_branch
          %299 = sbr.rel (%p297) target = $region40
        $region39: #{tpu_custom_call.1} parent=35 // pred_region
          %s300 = sand.u32 %s46, 1
          %s301 = scalar_lea.sflag [#allocation4], %s300
          %s302 = sand.u32 %s46, 1
          %s303 = smul.addr %s302, 32
          %s304 = scalar_lea.vmem [#allocation3], %s303
          %s305 = smul.u32 8, %s30
          %s307 = ssub.s32 512, 512
          %308 = vsyncadd %s301, %s307
          %s309 = smul.addr %s29, 24
          %s310 = sadd.s32 %s305, %s309
          %s311 = smul.addr %s310, 64
          %s312 = scalar_lea.hbm %s0, %s311
          %s314 = sshll.u32 %s304, 4
          %s315 = int_to_ptr.vmem [resolvable:$true] %s314
          %317 = dma.hbm_to_vmem [thread:$0]  %s312, 512, %s315, %s301
        $region40: #{tpu_custom_call.1} parent=35 // pred_fallthru
          _
        // Predicated region
        $region41: #{tpu_custom_call.1} parent=35 // pred_check
          %p318 = pneg %p82
        $region42: #{tpu_custom_call.1} parent=35 // pred_check_branch
          %320 = sbr.rel (%p318) target = $region44
        $region43: #{tpu_custom_call.1} parent=35 // pred_region
          %s321 = sand.u32 %s22, 1
          %s322 = scalar_lea.sflag [#allocation7], %s321
          %s323 = sand.u32 %s72, 1
          %s324 = smul.addr %s323, 4096
          %s325 = scalar_lea.vmem [#allocation6], %s324
          %s326 = smul.u32 128, %s30
          %s328 = ssub.s32 65536, 65536
          %329 = vsyncadd %s322, %s328
          %s330 = smul.addr %s326, 8
          %s331 = smul.addr %s330, 64
          %s332 = scalar_lea.hbm %s1, %s331
          %s333 = sshll.u32 %s325, 4
          %s334 = int_to_ptr.vmem [resolvable:$true] %s333
          %339 = dma.hbm_to_vmem [thread:$0]  %s332, 65536, %s334, %s322, 512, 512, 32
        $region44: #{tpu_custom_call.1} parent=35 // pred_fallthru
          _
      $region36: #{tpu_custom_call.1} parent=5 // pred_fallthru
        _
      %p340 = scmp.le.s32.totalorder 1, %s22
      %p341 = scmp.lt.s32.totalorder %s22, 4
      %p342 = pnand %p340, %p341
      %p343 = pneg %p342
      // Predicated region
      $region45: #{tpu_custom_call.1} parent=5 // pred_check
        _
      $region46: #{tpu_custom_call.1} parent=5 // pred_check_branch
        %345 = sbr.rel (%p342) target = $region48
      $region47: #{tpu_custom_call.1} parent=5 // pred_region
        %s346 = ssub.s32 %s22, 1
        %s347 = sand.u32 %s49, 1
        %s348 = scalar_lea.sflag [#allocation4], %s347
        %s349 = sand.u32 %s49, 1
        %s350 = smul.addr %s349, 32
        %s351 = scalar_lea.vmem [#allocation3], %s350
        // Predicated region
        $region49: #{tpu_custom_call.1} parent=47 // pred_check
          %p352 = pneg %p62
        $region50: #{tpu_custom_call.1} parent=47 // pred_check_branch
          %354 = sbr.rel (%p352) target = $region52
        $region51: #{tpu_custom_call.1} parent=47 // pred_region
          %355 = dma.done %s348, 512
        $region52: #{tpu_custom_call.1} parent=47 // pred_fallthru
          _
        %s356 = sand.u32 %s27, 1
        %s357 = scalar_lea.sflag [#allocation7], %s356
        %s358 = sand.u32 %s75, 1
        %s359 = smul.addr %s358, 4096
        %s360 = scalar_lea.vmem [#allocation6], %s359
        // Predicated region
        $region53: #{tpu_custom_call.1} parent=47 // pred_check
          %p361 = pneg %p88
        $region54: #{tpu_custom_call.1} parent=47 // pred_check_branch
          %363 = sbr.rel (%p361) target = $region56
        $region55: #{tpu_custom_call.1} parent=47 // pred_region
          %364 = dma.done %s357, 65536
        $region56: #{tpu_custom_call.1} parent=47 // pred_fallthru
          _
        // Predicated region
        $region57: #{tpu_custom_call.1} parent=47 // pred_check
          %p365 = pneg %p109
        $region58: #{tpu_custom_call.1} parent=47 // pred_check_branch
          %367 = sbr.rel (%p365) target = $region60
        $region59: #{tpu_custom_call.1} parent=47 // pred_region
          %368 = dma.done [#allocation7], 128
        $region60: #{tpu_custom_call.1} parent=47 // pred_fallthru
          _
        // Predicated region
        $region61: #{tpu_custom_call.1} parent=47 // pred_check
          %p369 = pneg %p130
        $region62: #{tpu_custom_call.1} parent=47 // pred_check_branch
          %371 = sbr.rel (%p369) target = $region64
        $region63: #{tpu_custom_call.1} parent=47 // pred_region
          %372 = dma.done [#allocation10], 40960
        $region64: #{tpu_custom_call.1} parent=47 // pred_fallthru
          _
        // Predicated region
        $region65: #{tpu_custom_call.1} parent=47 // pred_check
          %p373 = pneg %p151
        $region66: #{tpu_custom_call.1} parent=47 // pred_check_branch
          %375 = sbr.rel (%p373) target = $region68
        $region67: #{tpu_custom_call.1} parent=47 // pred_region
          %376 = dma.done [#allocation10], 80
        $region68: #{tpu_custom_call.1} parent=47 // pred_fallthru
          _
        // Predicated region
        $region69: #{tpu_custom_call.1} parent=47 // pred_check
          %p377 = pneg %p172
        $region70: #{tpu_custom_call.1} parent=47 // pred_check_branch
          %379 = sbr.rel (%p377) target = $region72
        $region71: #{tpu_custom_call.1} parent=47 // pred_region
          %380 = dma.done [#allocation13], 5120
        $region72: #{tpu_custom_call.1} parent=47 // pred_fallthru
          _
        // Predicated region
        $region73: #{tpu_custom_call.1} parent=47 // pred_check
          %p381 = pneg %p193
        $region74: #{tpu_custom_call.1} parent=47 // pred_check_branch
          %383 = sbr.rel (%p381) target = $region76
        $region75: #{tpu_custom_call.1} parent=47 // pred_region
          %384 = dma.done [#allocation13], 16
        $region76: #{tpu_custom_call.1} parent=47 // pred_fallthru
          _
        %s385 = sand.u32 %s49, 1
        %s386 = scalar_lea.sflag [#allocation4], %s385
        %s387 = sand.u32 %s49, 1
        %s388 = smul.addr %s387, 32
        %s389 = scalar_lea.vmem [#allocation3], %s388
        %p390 = pneg %p62
        %p391 = pneg %p59
        %s392 = sand.u32 %s27, 1
        %s393 = scalar_lea.sflag [#allocation7], %s392
        %s394 = sand.u32 %s75, 1
        %s395 = smul.addr %s394, 4096
        %s396 = scalar_lea.vmem [#allocation6], %s395
        %p397 = pneg %p88
        %p398 = pneg %p85
        %p399 = pneg %p109
        %p400 = pneg %p106
        %p401 = pneg %p130
        %p402 = pneg %p127
        %p403 = pneg %p151
        %p404 = pneg %p148
        %p405 = pneg %p172
        %p406 = pneg %p169
        %p407 = pneg %p193
        %p408 = pneg %p190
        %p409 = pneg %p219
        %p410 = pneg %p216
        %s411 = smul.u32 8, %s32
        %s412 = smul.u32 128, %s32
        %p414 = scmp.eq.s32.totalorder %s32, 0
        // Predicated region
        $region77: #{tpu_custom_call.1} parent=47 // pred_check
          %p415 = pneg %p414
        $region78: #{tpu_custom_call.1} parent=47 // pred_check_branch
          %417 = sbr.rel (%p415) target = $region80
        $region79: #{tpu_custom_call.1} parent=47 // pred_region
          %418 = vst [vmem:[#allocation2] sm:$0xff] 0.0
          %419 = vst [vmem:[#allocation2 + $0x8] sm:$0xff] 0.0
          %420 = vst [vmem:[#allocation2 + $0x10] sm:$0xff] 0.0
          %421 = vst [vmem:[#allocation2 + $0x18] sm:$0xff] 0.0
          %422 = vst [vmem:[#allocation2 + $0x20] sm:$0xff] 0.0
          %423 = vst [vmem:[#allocation2 + $0x28] sm:$0xff] 0.0
          %424 = vst [vmem:[#allocation2 + $0x30] sm:$0xff] 0.0
          %425 = vst [vmem:[#allocation2 + $0x38] sm:$0xff] 0.0
        $region80: #{tpu_custom_call.1} parent=47 // pred_fallthru
          _
        %v426 = vld [vmem:[#allocation2] sm:$0xff]
        %v427 = vld [vmem:[#allocation2 + $0x8] sm:$0xff]
        %v428 = vld [vmem:[#allocation2 + $0x10] sm:$0xff]
        %v429 = vld [vmem:[#allocation2 + $0x18] sm:$0xff]
        %v430 = vld [vmem:[#allocation2 + $0x20] sm:$0xff]
        %v431 = vld [vmem:[#allocation2 + $0x28] sm:$0xff]
        %v432 = vld [vmem:[#allocation2 + $0x30] sm:$0xff]
        %v433 = vld [vmem:[#allocation2 + $0x38] sm:$0xff]
        %v434 = vld [vmem:[%s351] sm:$0xff]
        %v435 = vld [vmem:[%s351 + $0x8] sm:$0xff]
        %v436 = vld [vmem:[%s351 + $0x10] sm:$0xff]
        %v437 = vld [vmem:[%s351 + $0x18] sm:$0xff]
        %v438 = vld [vmem:[%s360] sm:$0xff]
        %v439 = vld [vmem:[%s360 + $0x8] sm:$0xff]
        %v440 = vld [vmem:[%s360 + $0x10] sm:$0xff]
        %v441 = vld [vmem:[%s360 + $0x18] sm:$0xff]
        %v442 = vld [vmem:[%s360 + $0x20] sm:$0xff]
        %v443 = vld [vmem:[%s360 + $0x28] sm:$0xff]
        %v444 = vld [vmem:[%s360 + $0x30] sm:$0xff]
        %v445 = vld [vmem:[%s360 + $0x38] sm:$0xff]
        %v446 = vld [vmem:[%s360 + $0x40] sm:$0xff]
        %v447 = vld [vmem:[%s360 + $0x48] sm:$0xff]
        %v448 = vld [vmem:[%s360 + $0x50] sm:$0xff]
        %v449 = vld [vmem:[%s360 + $0x58] sm:$0xff]
        %v450 = vld [vmem:[%s360 + $0x60] sm:$0xff]
        %v451 = vld [vmem:[%s360 + $0x68] sm:$0xff]
        %v452 = vld [vmem:[%s360 + $0x70] sm:$0xff]
        %v453 = vld [vmem:[%s360 + $0x78] sm:$0xff]
        %v454 = vld [vmem:[%s360 + $0x80] sm:$0xff]
        %v455 = vld [vmem:[%s360 + $0x88] sm:$0xff]
        %v456 = vld [vmem:[%s360 + $0x90] sm:$0xff]
        %v457 = vld [vmem:[%s360 + $0x98] sm:$0xff]
        %v458 = vld [vmem:[%s360 + $0xa0] sm:$0xff]
        %v459 = vld [vmem:[%s360 + $0xa8] sm:$0xff]
        %v460 = vld [vmem:[%s360 + $0xb0] sm:$0xff]
        %v461 = vld [vmem:[%s360 + $0xb8] sm:$0xff]
        %v462 = vld [vmem:[%s360 + $0xc0] sm:$0xff]
        %v463 = vld [vmem:[%s360 + $0xc8] sm:$0xff]
        %v464 = vld [vmem:[%s360 + $0xd0] sm:$0xff]
        %v465 = vld [vmem:[%s360 + $0xd8] sm:$0xff]
        %v466 = vld [vmem:[%s360 + $0xe0] sm:$0xff]
        %v467 = vld [vmem:[%s360 + $0xe8] sm:$0xff]
        %v468 = vld [vmem:[%s360 + $0xf0] sm:$0xff]
        %v469 = vld [vmem:[%s360 + $0xf8] sm:$0xff]
        %v470 = vld [vmem:[%s360 + $0x100] sm:$0xff]
        %v471 = vld [vmem:[%s360 + $0x108] sm:$0xff]
        %v472 = vld [vmem:[%s360 + $0x110] sm:$0xff]
        %v473 = vld [vmem:[%s360 + $0x118] sm:$0xff]
        %v474 = vld [vmem:[%s360 + $0x120] sm:$0xff]
        %v475 = vld [vmem:[%s360 + $0x128] sm:$0xff]
        %v476 = vld [vmem:[%s360 + $0x130] sm:$0xff]
        %v477 = vld [vmem:[%s360 + $0x138] sm:$0xff]
        %v478 = vld [vmem:[%s360 + $0x140] sm:$0xff]
        %v479 = vld [vmem:[%s360 + $0x148] sm:$0xff]
        %v480 = vld [vmem:[%s360 + $0x150] sm:$0xff]
        %v481 = vld [vmem:[%s360 + $0x158] sm:$0xff]
        %v482 = vld [vmem:[%s360 + $0x160] sm:$0xff]
        %v483 = vld [vmem:[%s360 + $0x168] sm:$0xff]
        %v484 = vld [vmem:[%s360 + $0x170] sm:$0xff]
        %v485 = vld [vmem:[%s360 + $0x178] sm:$0xff]
        %v486 = vld [vmem:[%s360 + $0x180] sm:$0xff]
        %v487 = vld [vmem:[%s360 + $0x188] sm:$0xff]
        %v488 = vld [vmem:[%s360 + $0x190] sm:$0xff]
        %v489 = vld [vmem:[%s360 + $0x198] sm:$0xff]
        %v490 = vld [vmem:[%s360 + $0x1a0] sm:$0xff]
        %v491 = vld [vmem:[%s360 + $0x1a8] sm:$0xff]
        %v492 = vld [vmem:[%s360 + $0x1b0] sm:$0xff]
        %v493 = vld [vmem:[%s360 + $0x1b8] sm:$0xff]
        %v494 = vld [vmem:[%s360 + $0x1c0] sm:$0xff]
        %v495 = vld [vmem:[%s360 + $0x1c8] sm:$0xff]
        %v496 = vld [vmem:[%s360 + $0x1d0] sm:$0xff]
        %v497 = vld [vmem:[%s360 + $0x1d8] sm:$0xff]
        %v498 = vld [vmem:[%s360 + $0x1e0] sm:$0xff]
        %v499 = vld [vmem:[%s360 + $0x1e8] sm:$0xff]
        %v500 = vld [vmem:[%s360 + $0x1f0] sm:$0xff]
        %v501 = vld [vmem:[%s360 + $0x1f8] sm:$0xff]
        %v502 = vld [vmem:[%s360 + $0x200] sm:$0xff]
        %v503 = vld [vmem:[%s360 + $0x208] sm:$0xff]
        %v504 = vld [vmem:[%s360 + $0x210] sm:$0xff]
        %v505 = vld [vmem:[%s360 + $0x218] sm:$0xff]
        %v506 = vld [vmem:[%s360 + $0x220] sm:$0xff]
        %v507 = vld [vmem:[%s360 + $0x228] sm:$0xff]
        %v508 = vld [vmem:[%s360 + $0x230] sm:$0xff]
        %v509 = vld [vmem:[%s360 + $0x238] sm:$0xff]
        %v510 = vld [vmem:[%s360 + $0x240] sm:$0xff]
        %v511 = vld [vmem:[%s360 + $0x248] sm:$0xff]
        %v512 = vld [vmem:[%s360 + $0x250] sm:$0xff]
        %v513 = vld [vmem:[%s360 + $0x258] sm:$0xff]
        %v514 = vld [vmem:[%s360 + $0x260] sm:$0xff]
        %v515 = vld [vmem:[%s360 + $0x268] sm:$0xff]
        %v516 = vld [vmem:[%s360 + $0x270] sm:$0xff]
        %v517 = vld [vmem:[%s360 + $0x278] sm:$0xff]
        %v518 = vld [vmem:[%s360 + $0x280] sm:$0xff]
        %v519 = vld [vmem:[%s360 + $0x288] sm:$0xff]
        %v520 = vld [vmem:[%s360 + $0x290] sm:$0xff]
        %v521 = vld [vmem:[%s360 + $0x298] sm:$0xff]
        %v522 = vld [vmem:[%s360 + $0x2a0] sm:$0xff]
        %v523 = vld [vmem:[%s360 + $0x2a8] sm:$0xff]
        %v524 = vld [vmem:[%s360 + $0x2b0] sm:$0xff]
        %v525 = vld [vmem:[%s360 + $0x2b8] sm:$0xff]
        %v526 = vld [vmem:[%s360 + $0x2c0] sm:$0xff]
        %v527 = vld [vmem:[%s360 + $0x2c8] sm:$0xff]
        %v528 = vld [vmem:[%s360 + $0x2d0] sm:$0xff]
        %v529 = vld [vmem:[%s360 + $0x2d8] sm:$0xff]
        %v530 = vld [vmem:[%s360 + $0x2e0] sm:$0xff]
        %v531 = vld [vmem:[%s360 + $0x2e8] sm:$0xff]
        %v532 = vld [vmem:[%s360 + $0x2f0] sm:$0xff]
        %v533 = vld [vmem:[%s360 + $0x2f8] sm:$0xff]
        %v534 = vld [vmem:[%s360 + $0x300] sm:$0xff]
        %v535 = vld [vmem:[%s360 + $0x308] sm:$0xff]
        %v536 = vld [vmem:[%s360 + $0x310] sm:$0xff]
        %v537 = vld [vmem:[%s360 + $0x318] sm:$0xff]
        %v538 = vld [vmem:[%s360 + $0x320] sm:$0xff]
        %v539 = vld [vmem:[%s360 + $0x328] sm:$0xff]
        %v540 = vld [vmem:[%s360 + $0x330] sm:$0xff]
        %v541 = vld [vmem:[%s360 + $0x338] sm:$0xff]
        %v542 = vld [vmem:[%s360 + $0x340] sm:$0xff]
        %v543 = vld [vmem:[%s360 + $0x348] sm:$0xff]
        %v544 = vld [vmem:[%s360 + $0x350] sm:$0xff]
        %v545 = vld [vmem:[%s360 + $0x358] sm:$0xff]
        %v546 = vld [vmem:[%s360 + $0x360] sm:$0xff]
        %v547 = vld [vmem:[%s360 + $0x368] sm:$0xff]
        %v548 = vld [vmem:[%s360 + $0x370] sm:$0xff]
        %v549 = vld [vmem:[%s360 + $0x378] sm:$0xff]
        %v550 = vld [vmem:[%s360 + $0x380] sm:$0xff]
        %v551 = vld [vmem:[%s360 + $0x388] sm:$0xff]
        %v552 = vld [vmem:[%s360 + $0x390] sm:$0xff]
        %v553 = vld [vmem:[%s360 + $0x398] sm:$0xff]
        %v554 = vld [vmem:[%s360 + $0x3a0] sm:$0xff]
        %v555 = vld [vmem:[%s360 + $0x3a8] sm:$0xff]
        %v556 = vld [vmem:[%s360 + $0x3b0] sm:$0xff]
        %v557 = vld [vmem:[%s360 + $0x3b8] sm:$0xff]
        %v558 = vld [vmem:[%s360 + $0x3c0] sm:$0xff]
        %v559 = vld [vmem:[%s360 + $0x3c8] sm:$0xff]
        %v560 = vld [vmem:[%s360 + $0x3d0] sm:$0xff]
        %v561 = vld [vmem:[%s360 + $0x3d8] sm:$0xff]
        %v562 = vld [vmem:[%s360 + $0x3e0] sm:$0xff]
        %v563 = vld [vmem:[%s360 + $0x3e8] sm:$0xff]
        %v564 = vld [vmem:[%s360 + $0x3f0] sm:$0xff]
        %v565 = vld [vmem:[%s360 + $0x3f8] sm:$0xff]
        %v566 = vld [vmem:[%s360 + $0x400] sm:$0xff]
        %v567 = vld [vmem:[%s360 + $0x408] sm:$0xff]
        %v568 = vld [vmem:[%s360 + $0x410] sm:$0xff]
        %v569 = vld [vmem:[%s360 + $0x418] sm:$0xff]
        %v570 = vld [vmem:[%s360 + $0x420] sm:$0xff]
        %v571 = vld [vmem:[%s360 + $0x428] sm:$0xff]
        %v572 = vld [vmem:[%s360 + $0x430] sm:$0xff]
        %v573 = vld [vmem:[%s360 + $0x438] sm:$0xff]
        %v574 = vld [vmem:[%s360 + $0x440] sm:$0xff]
        %v575 = vld [vmem:[%s360 + $0x448] sm:$0xff]
        %v576 = vld [vmem:[%s360 + $0x450] sm:$0xff]
        %v577 = vld [vmem:[%s360 + $0x458] sm:$0xff]
        %v578 = vld [vmem:[%s360 + $0x460] sm:$0xff]
        %v579 = vld [vmem:[%s360 + $0x468] sm:$0xff]
        %v580 = vld [vmem:[%s360 + $0x470] sm:$0xff]
        %v581 = vld [vmem:[%s360 + $0x478] sm:$0xff]
        %v582 = vld [vmem:[%s360 + $0x480] sm:$0xff]
        %v583 = vld [vmem:[%s360 + $0x488] sm:$0xff]
        %v584 = vld [vmem:[%s360 + $0x490] sm:$0xff]
        %v585 = vld [vmem:[%s360 + $0x498] sm:$0xff]
        %v586 = vld [vmem:[%s360 + $0x4a0] sm:$0xff]
        %v587 = vld [vmem:[%s360 + $0x4a8] sm:$0xff]
        %v588 = vld [vmem:[%s360 + $0x4b0] sm:$0xff]
        %v589 = vld [vmem:[%s360 + $0x4b8] sm:$0xff]
        %v590 = vld [vmem:[%s360 + $0x4c0] sm:$0xff]
        %v591 = vld [vmem:[%s360 + $0x4c8] sm:$0xff]
        %v592 = vld [vmem:[%s360 + $0x4d0] sm:$0xff]
        %v593 = vld [vmem:[%s360 + $0x4d8] sm:$0xff]
        %v594 = vld [vmem:[%s360 + $0x4e0] sm:$0xff]
        %v595 = vld [vmem:[%s360 + $0x4e8] sm:$0xff]
        %v596 = vld [vmem:[%s360 + $0x4f0] sm:$0xff]
        %v597 = vld [vmem:[%s360 + $0x4f8] sm:$0xff]
        %v598 = vld [vmem:[%s360 + $0x500] sm:$0xff]
        %v599 = vld [vmem:[%s360 + $0x508] sm:$0xff]
        %v600 = vld [vmem:[%s360 + $0x510] sm:$0xff]
        %v601 = vld [vmem:[%s360 + $0x518] sm:$0xff]
        %v602 = vld [vmem:[%s360 + $0x520] sm:$0xff]
        %v603 = vld [vmem:[%s360 + $0x528] sm:$0xff]
        %v604 = vld [vmem:[%s360 + $0x530] sm:$0xff]
        %v605 = vld [vmem:[%s360 + $0x538] sm:$0xff]
        %v606 = vld [vmem:[%s360 + $0x540] sm:$0xff]
        %v607 = vld [vmem:[%s360 + $0x548] sm:$0xff]
        %v608 = vld [vmem:[%s360 + $0x550] sm:$0xff]
        %v609 = vld [vmem:[%s360 + $0x558] sm:$0xff]
        %v610 = vld [vmem:[%s360 + $0x560] sm:$0xff]
        %v611 = vld [vmem:[%s360 + $0x568] sm:$0xff]
        %v612 = vld [vmem:[%s360 + $0x570] sm:$0xff]
        %v613 = vld [vmem:[%s360 + $0x578] sm:$0xff]
        %v614 = vld [vmem:[%s360 + $0x580] sm:$0xff]
        %v615 = vld [vmem:[%s360 + $0x588] sm:$0xff]
        %v616 = vld [vmem:[%s360 + $0x590] sm:$0xff]
        %v617 = vld [vmem:[%s360 + $0x598] sm:$0xff]
        %v618 = vld [vmem:[%s360 + $0x5a0] sm:$0xff]
        %v619 = vld [vmem:[%s360 + $0x5a8] sm:$0xff]
        %v620 = vld [vmem:[%s360 + $0x5b0] sm:$0xff]
        %v621 = vld [vmem:[%s360 + $0x5b8] sm:$0xff]
        %v622 = vld [vmem:[%s360 + $0x5c0] sm:$0xff]
        %v623 = vld [vmem:[%s360 + $0x5c8] sm:$0xff]
        %v624 = vld [vmem:[%s360 + $0x5d0] sm:$0xff]
        %v625 = vld [vmem:[%s360 + $0x5d8] sm:$0xff]
        %v626 = vld [vmem:[%s360 + $0x5e0] sm:$0xff]
        %v627 = vld [vmem:[%s360 + $0x5e8] sm:$0xff]
        %v628 = vld [vmem:[%s360 + $0x5f0] sm:$0xff]
        %v629 = vld [vmem:[%s360 + $0x5f8] sm:$0xff]
        %v630 = vld [vmem:[%s360 + $0x600] sm:$0xff]
        %v631 = vld [vmem:[%s360 + $0x608] sm:$0xff]
        %v632 = vld [vmem:[%s360 + $0x610] sm:$0xff]
        %v633 = vld [vmem:[%s360 + $0x618] sm:$0xff]
        %v634 = vld [vmem:[%s360 + $0x620] sm:$0xff]
        %v635 = vld [vmem:[%s360 + $0x628] sm:$0xff]
        %v636 = vld [vmem:[%s360 + $0x630] sm:$0xff]
        %v637 = vld [vmem:[%s360 + $0x638] sm:$0xff]
        %v638 = vld [vmem:[%s360 + $0x640] sm:$0xff]
        %v639 = vld [vmem:[%s360 + $0x648] sm:$0xff]
        %v640 = vld [vmem:[%s360 + $0x650] sm:$0xff]
        %v641 = vld [vmem:[%s360 + $0x658] sm:$0xff]
        %v642 = vld [vmem:[%s360 + $0x660] sm:$0xff]
        %v643 = vld [vmem:[%s360 + $0x668] sm:$0xff]
        %v644 = vld [vmem:[%s360 + $0x670] sm:$0xff]
        %v645 = vld [vmem:[%s360 + $0x678] sm:$0xff]
        %v646 = vld [vmem:[%s360 + $0x680] sm:$0xff]
        %v647 = vld [vmem:[%s360 + $0x688] sm:$0xff]
        %v648 = vld [vmem:[%s360 + $0x690] sm:$0xff]
        %v649 = vld [vmem:[%s360 + $0x698] sm:$0xff]
        %v650 = vld [vmem:[%s360 + $0x6a0] sm:$0xff]
        %v651 = vld [vmem:[%s360 + $0x6a8] sm:$0xff]
        %v652 = vld [vmem:[%s360 + $0x6b0] sm:$0xff]
        %v653 = vld [vmem:[%s360 + $0x6b8] sm:$0xff]
        %v654 = vld [vmem:[%s360 + $0x6c0] sm:$0xff]
        %v655 = vld [vmem:[%s360 + $0x6c8] sm:$0xff]
        %v656 = vld [vmem:[%s360 + $0x6d0] sm:$0xff]
        %v657 = vld [vmem:[%s360 + $0x6d8] sm:$0xff]
        %v658 = vld [vmem:[%s360 + $0x6e0] sm:$0xff]
        %v659 = vld [vmem:[%s360 + $0x6e8] sm:$0xff]
        %v660 = vld [vmem:[%s360 + $0x6f0] sm:$0xff]
        %v661 = vld [vmem:[%s360 + $0x6f8] sm:$0xff]
        %v662 = vld [vmem:[%s360 + $0x700] sm:$0xff]
        %v663 = vld [vmem:[%s360 + $0x708] sm:$0xff]
        %v664 = vld [vmem:[%s360 + $0x710] sm:$0xff]
        %v665 = vld [vmem:[%s360 + $0x718] sm:$0xff]
        %v666 = vld [vmem:[%s360 + $0x720] sm:$0xff]
        %v667 = vld [vmem:[%s360 + $0x728] sm:$0xff]
        %v668 = vld [vmem:[%s360 + $0x730] sm:$0xff]
        %v669 = vld [vmem:[%s360 + $0x738] sm:$0xff]
        %v670 = vld [vmem:[%s360 + $0x740] sm:$0xff]
        %v671 = vld [vmem:[%s360 + $0x748] sm:$0xff]
        %v672 = vld [vmem:[%s360 + $0x750] sm:$0xff]
        %v673 = vld [vmem:[%s360 + $0x758] sm:$0xff]
        %v674 = vld [vmem:[%s360 + $0x760] sm:$0xff]
        %v675 = vld [vmem:[%s360 + $0x768] sm:$0xff]
        %v676 = vld [vmem:[%s360 + $0x770] sm:$0xff]
        %v677 = vld [vmem:[%s360 + $0x778] sm:$0xff]
        %v678 = vld [vmem:[%s360 + $0x780] sm:$0xff]
        %v679 = vld [vmem:[%s360 + $0x788] sm:$0xff]
        %v680 = vld [vmem:[%s360 + $0x790] sm:$0xff]
        %v681 = vld [vmem:[%s360 + $0x798] sm:$0xff]
        %v682 = vld [vmem:[%s360 + $0x7a0] sm:$0xff]
        %v683 = vld [vmem:[%s360 + $0x7a8] sm:$0xff]
        %v684 = vld [vmem:[%s360 + $0x7b0] sm:$0xff]
        %v685 = vld [vmem:[%s360 + $0x7b8] sm:$0xff]
        %v686 = vld [vmem:[%s360 + $0x7c0] sm:$0xff]
        %v687 = vld [vmem:[%s360 + $0x7c8] sm:$0xff]
        %v688 = vld [vmem:[%s360 + $0x7d0] sm:$0xff]
        %v689 = vld [vmem:[%s360 + $0x7d8] sm:$0xff]
        %v690 = vld [vmem:[%s360 + $0x7e0] sm:$0xff]
        %v691 = vld [vmem:[%s360 + $0x7e8] sm:$0xff]
        %v692 = vld [vmem:[%s360 + $0x7f0] sm:$0xff]
        %v693 = vld [vmem:[%s360 + $0x7f8] sm:$0xff]
        %v694 = vld [vmem:[%s360 + $0x800] sm:$0xff]
        %v695 = vld [vmem:[%s360 + $0x808] sm:$0xff]
        %v696 = vld [vmem:[%s360 + $0x810] sm:$0xff]
        %v697 = vld [vmem:[%s360 + $0x818] sm:$0xff]
        %v698 = vld [vmem:[%s360 + $0x820] sm:$0xff]
        %v699 = vld [vmem:[%s360 + $0x828] sm:$0xff]
        %v700 = vld [vmem:[%s360 + $0x830] sm:$0xff]
        %v701 = vld [vmem:[%s360 + $0x838] sm:$0xff]
        %v702 = vld [vmem:[%s360 + $0x840] sm:$0xff]
        %v703 = vld [vmem:[%s360 + $0x848] sm:$0xff]
        %v704 = vld [vmem:[%s360 + $0x850] sm:$0xff]
        %v705 = vld [vmem:[%s360 + $0x858] sm:$0xff]
        %v706 = vld [vmem:[%s360 + $0x860] sm:$0xff]
        %v707 = vld [vmem:[%s360 + $0x868] sm:$0xff]
        %v708 = vld [vmem:[%s360 + $0x870] sm:$0xff]
        %v709 = vld [vmem:[%s360 + $0x878] sm:$0xff]
        %v710 = vld [vmem:[%s360 + $0x880] sm:$0xff]
        %v711 = vld [vmem:[%s360 + $0x888] sm:$0xff]
        %v712 = vld [vmem:[%s360 + $0x890] sm:$0xff]
        %v713 = vld [vmem:[%s360 + $0x898] sm:$0xff]
        %v714 = vld [vmem:[%s360 + $0x8a0] sm:$0xff]
        %v715 = vld [vmem:[%s360 + $0x8a8] sm:$0xff]
        %v716 = vld [vmem:[%s360 + $0x8b0] sm:$0xff]
        %v717 = vld [vmem:[%s360 + $0x8b8] sm:$0xff]
        %v718 = vld [vmem:[%s360 + $0x8c0] sm:$0xff]
        %v719 = vld [vmem:[%s360 + $0x8c8] sm:$0xff]
        %v720 = vld [vmem:[%s360 + $0x8d0] sm:$0xff]
        %v721 = vld [vmem:[%s360 + $0x8d8] sm:$0xff]
        %v722 = vld [vmem:[%s360 + $0x8e0] sm:$0xff]
        %v723 = vld [vmem:[%s360 + $0x8e8] sm:$0xff]
        %v724 = vld [vmem:[%s360 + $0x8f0] sm:$0xff]
        %v725 = vld [vmem:[%s360 + $0x8f8] sm:$0xff]
        %v726 = vld [vmem:[%s360 + $0x900] sm:$0xff]
        %v727 = vld [vmem:[%s360 + $0x908] sm:$0xff]
        %v728 = vld [vmem:[%s360 + $0x910] sm:$0xff]
        %v729 = vld [vmem:[%s360 + $0x918] sm:$0xff]
        %v730 = vld [vmem:[%s360 + $0x920] sm:$0xff]
        %v731 = vld [vmem:[%s360 + $0x928] sm:$0xff]
        %v732 = vld [vmem:[%s360 + $0x930] sm:$0xff]
        %v733 = vld [vmem:[%s360 + $0x938] sm:$0xff]
        %v734 = vld [vmem:[%s360 + $0x940] sm:$0xff]
        %v735 = vld [vmem:[%s360 + $0x948] sm:$0xff]
        %v736 = vld [vmem:[%s360 + $0x950] sm:$0xff]
        %v737 = vld [vmem:[%s360 + $0x958] sm:$0xff]
        %v738 = vld [vmem:[%s360 + $0x960] sm:$0xff]
        %v739 = vld [vmem:[%s360 + $0x968] sm:$0xff]
        %v740 = vld [vmem:[%s360 + $0x970] sm:$0xff]
        %v741 = vld [vmem:[%s360 + $0x978] sm:$0xff]
        %v742 = vld [vmem:[%s360 + $0x980] sm:$0xff]
        %v743 = vld [vmem:[%s360 + $0x988] sm:$0xff]
        %v744 = vld [vmem:[%s360 + $0x990] sm:$0xff]
        %v745 = vld [vmem:[%s360 + $0x998] sm:$0xff]
        %v746 = vld [vmem:[%s360 + $0x9a0] sm:$0xff]
        %v747 = vld [vmem:[%s360 + $0x9a8] sm:$0xff]
        %v748 = vld [vmem:[%s360 + $0x9b0] sm:$0xff]
        %v749 = vld [vmem:[%s360 + $0x9b8] sm:$0xff]
        %v750 = vld [vmem:[%s360 + $0x9c0] sm:$0xff]
        %v751 = vld [vmem:[%s360 + $0x9c8] sm:$0xff]
        %v752 = vld [vmem:[%s360 + $0x9d0] sm:$0xff]
        %v753 = vld [vmem:[%s360 + $0x9d8] sm:$0xff]
        %v754 = vld [vmem:[%s360 + $0x9e0] sm:$0xff]
        %v755 = vld [vmem:[%s360 + $0x9e8] sm:$0xff]
        %v756 = vld [vmem:[%s360 + $0x9f0] sm:$0xff]
        %v757 = vld [vmem:[%s360 + $0x9f8] sm:$0xff]
        %v758 = vld [vmem:[%s360 + $0xa00] sm:$0xff]
        %v759 = vld [vmem:[%s360 + $0xa08] sm:$0xff]
        %v760 = vld [vmem:[%s360 + $0xa10] sm:$0xff]
        %v761 = vld [vmem:[%s360 + $0xa18] sm:$0xff]
        %v762 = vld [vmem:[%s360 + $0xa20] sm:$0xff]
        %v763 = vld [vmem:[%s360 + $0xa28] sm:$0xff]
        %v764 = vld [vmem:[%s360 + $0xa30] sm:$0xff]
        %v765 = vld [vmem:[%s360 + $0xa38] sm:$0xff]
        %v766 = vld [vmem:[%s360 + $0xa40] sm:$0xff]
        %v767 = vld [vmem:[%s360 + $0xa48] sm:$0xff]
        %v768 = vld [vmem:[%s360 + $0xa50] sm:$0xff]
        %v769 = vld [vmem:[%s360 + $0xa58] sm:$0xff]
        %v770 = vld [vmem:[%s360 + $0xa60] sm:$0xff]
        %v771 = vld [vmem:[%s360 + $0xa68] sm:$0xff]
        %v772 = vld [vmem:[%s360 + $0xa70] sm:$0xff]
        %v773 = vld [vmem:[%s360 + $0xa78] sm:$0xff]
        %v774 = vld [vmem:[%s360 + $0xa80] sm:$0xff]
        %v775 = vld [vmem:[%s360 + $0xa88] sm:$0xff]
        %v776 = vld [vmem:[%s360 + $0xa90] sm:$0xff]
        %v777 = vld [vmem:[%s360 + $0xa98] sm:$0xff]
        %v778 = vld [vmem:[%s360 + $0xaa0] sm:$0xff]
        %v779 = vld [vmem:[%s360 + $0xaa8] sm:$0xff]
        %v780 = vld [vmem:[%s360 + $0xab0] sm:$0xff]
        %v781 = vld [vmem:[%s360 + $0xab8] sm:$0xff]
        %v782 = vld [vmem:[%s360 + $0xac0] sm:$0xff]
        %v783 = vld [vmem:[%s360 + $0xac8] sm:$0xff]
        %v784 = vld [vmem:[%s360 + $0xad0] sm:$0xff]
        %v785 = vld [vmem:[%s360 + $0xad8] sm:$0xff]
        %v786 = vld [vmem:[%s360 + $0xae0] sm:$0xff]
        %v787 = vld [vmem:[%s360 + $0xae8] sm:$0xff]
        %v788 = vld [vmem:[%s360 + $0xaf0] sm:$0xff]
        %v789 = vld [vmem:[%s360 + $0xaf8] sm:$0xff]
        %v790 = vld [vmem:[%s360 + $0xb00] sm:$0xff]
        %v791 = vld [vmem:[%s360 + $0xb08] sm:$0xff]
        %v792 = vld [vmem:[%s360 + $0xb10] sm:$0xff]
        %v793 = vld [vmem:[%s360 + $0xb18] sm:$0xff]
        %v794 = vld [vmem:[%s360 + $0xb20] sm:$0xff]
        %v795 = vld [vmem:[%s360 + $0xb28] sm:$0xff]
        %v796 = vld [vmem:[%s360 + $0xb30] sm:$0xff]
        %v797 = vld [vmem:[%s360 + $0xb38] sm:$0xff]
        %v798 = vld [vmem:[%s360 + $0xb40] sm:$0xff]
        %v799 = vld [vmem:[%s360 + $0xb48] sm:$0xff]
        %v800 = vld [vmem:[%s360 + $0xb50] sm:$0xff]
        %v801 = vld [vmem:[%s360 + $0xb58] sm:$0xff]
        %v802 = vld [vmem:[%s360 + $0xb60] sm:$0xff]
        %v803 = vld [vmem:[%s360 + $0xb68] sm:$0xff]
        %v804 = vld [vmem:[%s360 + $0xb70] sm:$0xff]
        %v805 = vld [vmem:[%s360 + $0xb78] sm:$0xff]
        %v806 = vld [vmem:[%s360 + $0xb80] sm:$0xff]
        %v807 = vld [vmem:[%s360 + $0xb88] sm:$0xff]
        %v808 = vld [vmem:[%s360 + $0xb90] sm:$0xff]
        %v809 = vld [vmem:[%s360 + $0xb98] sm:$0xff]
        %v810 = vld [vmem:[%s360 + $0xba0] sm:$0xff]
        %v811 = vld [vmem:[%s360 + $0xba8] sm:$0xff]
        %v812 = vld [vmem:[%s360 + $0xbb0] sm:$0xff]
        %v813 = vld [vmem:[%s360 + $0xbb8] sm:$0xff]
        %v814 = vld [vmem:[%s360 + $0xbc0] sm:$0xff]
        %v815 = vld [vmem:[%s360 + $0xbc8] sm:$0xff]
        %v816 = vld [vmem:[%s360 + $0xbd0] sm:$0xff]
        %v817 = vld [vmem:[%s360 + $0xbd8] sm:$0xff]
        %v818 = vld [vmem:[%s360 + $0xbe0] sm:$0xff]
        %v819 = vld [vmem:[%s360 + $0xbe8] sm:$0xff]
        %v820 = vld [vmem:[%s360 + $0xbf0] sm:$0xff]
        %v821 = vld [vmem:[%s360 + $0xbf8] sm:$0xff]
        %v822 = vld [vmem:[%s360 + $0xc00] sm:$0xff]
        %v823 = vld [vmem:[%s360 + $0xc08] sm:$0xff]
        %v824 = vld [vmem:[%s360 + $0xc10] sm:$0xff]
        %v825 = vld [vmem:[%s360 + $0xc18] sm:$0xff]
        %v826 = vld [vmem:[%s360 + $0xc20] sm:$0xff]
        %v827 = vld [vmem:[%s360 + $0xc28] sm:$0xff]
        %v828 = vld [vmem:[%s360 + $0xc30] sm:$0xff]
        %v829 = vld [vmem:[%s360 + $0xc38] sm:$0xff]
        %v830 = vld [vmem:[%s360 + $0xc40] sm:$0xff]
        %v831 = vld [vmem:[%s360 + $0xc48] sm:$0xff]
        %v832 = vld [vmem:[%s360 + $0xc50] sm:$0xff]
        %v833 = vld [vmem:[%s360 + $0xc58] sm:$0xff]
        %v834 = vld [vmem:[%s360 + $0xc60] sm:$0xff]
        %v835 = vld [vmem:[%s360 + $0xc68] sm:$0xff]
        %v836 = vld [vmem:[%s360 + $0xc70] sm:$0xff]
        %v837 = vld [vmem:[%s360 + $0xc78] sm:$0xff]
        %v838 = vld [vmem:[%s360 + $0xc80] sm:$0xff]
        %v839 = vld [vmem:[%s360 + $0xc88] sm:$0xff]
        %v840 = vld [vmem:[%s360 + $0xc90] sm:$0xff]
        %v841 = vld [vmem:[%s360 + $0xc98] sm:$0xff]
        %v842 = vld [vmem:[%s360 + $0xca0] sm:$0xff]
        %v843 = vld [vmem:[%s360 + $0xca8] sm:$0xff]
        %v844 = vld [vmem:[%s360 + $0xcb0] sm:$0xff]
        %v845 = vld [vmem:[%s360 + $0xcb8] sm:$0xff]
        %v846 = vld [vmem:[%s360 + $0xcc0] sm:$0xff]
        %v847 = vld [vmem:[%s360 + $0xcc8] sm:$0xff]
        %v848 = vld [vmem:[%s360 + $0xcd0] sm:$0xff]
        %v849 = vld [vmem:[%s360 + $0xcd8] sm:$0xff]
        %v850 = vld [vmem:[%s360 + $0xce0] sm:$0xff]
        %v851 = vld [vmem:[%s360 + $0xce8] sm:$0xff]
        %v852 = vld [vmem:[%s360 + $0xcf0] sm:$0xff]
        %v853 = vld [vmem:[%s360 + $0xcf8] sm:$0xff]
        %v854 = vld [vmem:[%s360 + $0xd00] sm:$0xff]
        %v855 = vld [vmem:[%s360 + $0xd08] sm:$0xff]
        %v856 = vld [vmem:[%s360 + $0xd10] sm:$0xff]
        %v857 = vld [vmem:[%s360 + $0xd18] sm:$0xff]
        %v858 = vld [vmem:[%s360 + $0xd20] sm:$0xff]
        %v859 = vld [vmem:[%s360 + $0xd28] sm:$0xff]
        %v860 = vld [vmem:[%s360 + $0xd30] sm:$0xff]
        %v861 = vld [vmem:[%s360 + $0xd38] sm:$0xff]
        %v862 = vld [vmem:[%s360 + $0xd40] sm:$0xff]
        %v863 = vld [vmem:[%s360 + $0xd48] sm:$0xff]
        %v864 = vld [vmem:[%s360 + $0xd50] sm:$0xff]
        %v865 = vld [vmem:[%s360 + $0xd58] sm:$0xff]
        %v866 = vld [vmem:[%s360 + $0xd60] sm:$0xff]
        %v867 = vld [vmem:[%s360 + $0xd68] sm:$0xff]
        %v868 = vld [vmem:[%s360 + $0xd70] sm:$0xff]
        %v869 = vld [vmem:[%s360 + $0xd78] sm:$0xff]
        %v870 = vld [vmem:[%s360 + $0xd80] sm:$0xff]
        %v871 = vld [vmem:[%s360 + $0xd88] sm:$0xff]
        %v872 = vld [vmem:[%s360 + $0xd90] sm:$0xff]
        %v873 = vld [vmem:[%s360 + $0xd98] sm:$0xff]
        %v874 = vld [vmem:[%s360 + $0xda0] sm:$0xff]
        %v875 = vld [vmem:[%s360 + $0xda8] sm:$0xff]
        %v876 = vld [vmem:[%s360 + $0xdb0] sm:$0xff]
        %v877 = vld [vmem:[%s360 + $0xdb8] sm:$0xff]
        %v878 = vld [vmem:[%s360 + $0xdc0] sm:$0xff]
        %v879 = vld [vmem:[%s360 + $0xdc8] sm:$0xff]
        %v880 = vld [vmem:[%s360 + $0xdd0] sm:$0xff]
        %v881 = vld [vmem:[%s360 + $0xdd8] sm:$0xff]
        %v882 = vld [vmem:[%s360 + $0xde0] sm:$0xff]
        %v883 = vld [vmem:[%s360 + $0xde8] sm:$0xff]
        %v884 = vld [vmem:[%s360 + $0xdf0] sm:$0xff]
        %v885 = vld [vmem:[%s360 + $0xdf8] sm:$0xff]
        %v886 = vld [vmem:[%s360 + $0xe00] sm:$0xff]
        %v887 = vld [vmem:[%s360 + $0xe08] sm:$0xff]
        %v888 = vld [vmem:[%s360 + $0xe10] sm:$0xff]
        %v889 = vld [vmem:[%s360 + $0xe18] sm:$0xff]
        %v890 = vld [vmem:[%s360 + $0xe20] sm:$0xff]
        %v891 = vld [vmem:[%s360 + $0xe28] sm:$0xff]
        %v892 = vld [vmem:[%s360 + $0xe30] sm:$0xff]
        %v893 = vld [vmem:[%s360 + $0xe38] sm:$0xff]
        %v894 = vld [vmem:[%s360 + $0xe40] sm:$0xff]
        %v895 = vld [vmem:[%s360 + $0xe48] sm:$0xff]
        %v896 = vld [vmem:[%s360 + $0xe50] sm:$0xff]
        %v897 = vld [vmem:[%s360 + $0xe58] sm:$0xff]
        %v898 = vld [vmem:[%s360 + $0xe60] sm:$0xff]
        %v899 = vld [vmem:[%s360 + $0xe68] sm:$0xff]
        %v900 = vld [vmem:[%s360 + $0xe70] sm:$0xff]
        %v901 = vld [vmem:[%s360 + $0xe78] sm:$0xff]
        %v902 = vld [vmem:[%s360 + $0xe80] sm:$0xff]
        %v903 = vld [vmem:[%s360 + $0xe88] sm:$0xff]
        %v904 = vld [vmem:[%s360 + $0xe90] sm:$0xff]
        %v905 = vld [vmem:[%s360 + $0xe98] sm:$0xff]
        %v906 = vld [vmem:[%s360 + $0xea0] sm:$0xff]
        %v907 = vld [vmem:[%s360 + $0xea8] sm:$0xff]
        %v908 = vld [vmem:[%s360 + $0xeb0] sm:$0xff]
        %v909 = vld [vmem:[%s360 + $0xeb8] sm:$0xff]
        %v910 = vld [vmem:[%s360 + $0xec0] sm:$0xff]
        %v911 = vld [vmem:[%s360 + $0xec8] sm:$0xff]
        %v912 = vld [vmem:[%s360 + $0xed0] sm:$0xff]
        %v913 = vld [vmem:[%s360 + $0xed8] sm:$0xff]
        %v914 = vld [vmem:[%s360 + $0xee0] sm:$0xff]
        %v915 = vld [vmem:[%s360 + $0xee8] sm:$0xff]
        %v916 = vld [vmem:[%s360 + $0xef0] sm:$0xff]
        %v917 = vld [vmem:[%s360 + $0xef8] sm:$0xff]
        %v918 = vld [vmem:[%s360 + $0xf00] sm:$0xff]
        %v919 = vld [vmem:[%s360 + $0xf08] sm:$0xff]
        %v920 = vld [vmem:[%s360 + $0xf10] sm:$0xff]
        %v921 = vld [vmem:[%s360 + $0xf18] sm:$0xff]
        %v922 = vld [vmem:[%s360 + $0xf20] sm:$0xff]
        %v923 = vld [vmem:[%s360 + $0xf28] sm:$0xff]
        %v924 = vld [vmem:[%s360 + $0xf30] sm:$0xff]
        %v925 = vld [vmem:[%s360 + $0xf38] sm:$0xff]
        %v926 = vld [vmem:[%s360 + $0xf40] sm:$0xff]
        %v927 = vld [vmem:[%s360 + $0xf48] sm:$0xff]
        %v928 = vld [vmem:[%s360 + $0xf50] sm:$0xff]
        %v929 = vld [vmem:[%s360 + $0xf58] sm:$0xff]
        %v930 = vld [vmem:[%s360 + $0xf60] sm:$0xff]
        %v931 = vld [vmem:[%s360 + $0xf68] sm:$0xff]
        %v932 = vld [vmem:[%s360 + $0xf70] sm:$0xff]
        %v933 = vld [vmem:[%s360 + $0xf78] sm:$0xff]
        %v934 = vld [vmem:[%s360 + $0xf80] sm:$0xff]
        %v935 = vld [vmem:[%s360 + $0xf88] sm:$0xff]
        %v936 = vld [vmem:[%s360 + $0xf90] sm:$0xff]
        %v937 = vld [vmem:[%s360 + $0xf98] sm:$0xff]
        %v938 = vld [vmem:[%s360 + $0xfa0] sm:$0xff]
        %v939 = vld [vmem:[%s360 + $0xfa8] sm:$0xff]
        %v940 = vld [vmem:[%s360 + $0xfb0] sm:$0xff]
        %v941 = vld [vmem:[%s360 + $0xfb8] sm:$0xff]
        %v942 = vld [vmem:[%s360 + $0xfc0] sm:$0xff]
        %v943 = vld [vmem:[%s360 + $0xfc8] sm:$0xff]
        %v944 = vld [vmem:[%s360 + $0xfd0] sm:$0xff]
        %v945 = vld [vmem:[%s360 + $0xfd8] sm:$0xff]
        %v946 = vld [vmem:[%s360 + $0xfe0] sm:$0xff]
        %v947 = vld [vmem:[%s360 + $0xfe8] sm:$0xff]
        %v948 = vld [vmem:[%s360 + $0xff0] sm:$0xff]
        %v949 = vld [vmem:[%s360 + $0xff8] sm:$0xff]
        %v954 = vunpack.c.l.b16 %v434
        %v955 = vunpack.c.h.b16 %v434
        %v956 = vunpack.c.l.b16 %v435
        %v957 = vunpack.c.h.b16 %v435
        %v958 = vunpack.c.l.b16 %v436
        %v959 = vunpack.c.h.b16 %v436
        %v960 = vunpack.c.l.b16 %v437
        %v961 = vunpack.c.h.b16 %v437
        %v962 = vpack.c.b16 %v954, %v954
        %v963 = vpack.c.b16 %v955, %v955
        %v964 = vpack.c.b16 %v956, %v956
        %v965 = vpack.c.b16 %v957, %v957
        %v966 = vpack.c.b16 %v958, %v958
        %v967 = vpack.c.b16 %v959, %v959
        %v968 = vpack.c.b16 %v960, %v960
        %v969 = vpack.c.b16 %v961, %v961
        %v1490 = vunpack.c.l.b16 %v438
        %v1491 = vunpack.c.h.b16 %v438
        %v1492 = vunpack.c.l.b16 %v439
        %v1493 = vunpack.c.h.b16 %v439
        %v1494 = vunpack.c.l.b16 %v440
        %v1495 = vunpack.c.h.b16 %v440
        %v1496 = vunpack.c.l.b16 %v441
        %v1497 = vunpack.c.h.b16 %v441
        %v1498 = vunpack.c.l.b16 %v442
        %v1499 = vunpack.c.h.b16 %v442
        %v1500 = vunpack.c.l.b16 %v443
        %v1501 = vunpack.c.h.b16 %v443
        %v1502 = vunpack.c.l.b16 %v444
        %v1503 = vunpack.c.h.b16 %v444
        %v1504 = vunpack.c.l.b16 %v445
        %v1505 = vunpack.c.h.b16 %v445
        %v1506 = vunpack.c.l.b16 %v446
        %v1507 = vunpack.c.h.b16 %v446
        %v1508 = vunpack.c.l.b16 %v447
        %v1509 = vunpack.c.h.b16 %v447
        %v1510 = vunpack.c.l.b16 %v448
        %v1511 = vunpack.c.h.b16 %v448
        %v1512 = vunpack.c.l.b16 %v449
        %v1513 = vunpack.c.h.b16 %v449
        %v1514 = vunpack.c.l.b16 %v450
        %v1515 = vunpack.c.h.b16 %v450
        %v1516 = vunpack.c.l.b16 %v451
        %v1517 = vunpack.c.h.b16 %v451
        %v1518 = vunpack.c.l.b16 %v452
        %v1519 = vunpack.c.h.b16 %v452
        %v1520 = vunpack.c.l.b16 %v453
        %v1521 = vunpack.c.h.b16 %v453
        %v1522 = vunpack.c.l.b16 %v454
        %v1523 = vunpack.c.h.b16 %v454
        %v1524 = vunpack.c.l.b16 %v455
        %v1525 = vunpack.c.h.b16 %v455
        %v1526 = vunpack.c.l.b16 %v456
        %v1527 = vunpack.c.h.b16 %v456
        %v1528 = vunpack.c.l.b16 %v457
        %v1529 = vunpack.c.h.b16 %v457
        %v1530 = vunpack.c.l.b16 %v458
        %v1531 = vunpack.c.h.b16 %v458
        %v1532 = vunpack.c.l.b16 %v459
        %v1533 = vunpack.c.h.b16 %v459
        %v1534 = vunpack.c.l.b16 %v460
        %v1535 = vunpack.c.h.b16 %v460
        %v1536 = vunpack.c.l.b16 %v461
        %v1537 = vunpack.c.h.b16 %v461
        %v1538 = vunpack.c.l.b16 %v462
        %v1539 = vunpack.c.h.b16 %v462
        %v1540 = vunpack.c.l.b16 %v463
        %v1541 = vunpack.c.h.b16 %v463
        %v1542 = vunpack.c.l.b16 %v464
        %v1543 = vunpack.c.h.b16 %v464
        %v1544 = vunpack.c.l.b16 %v465
        %v1545 = vunpack.c.h.b16 %v465
        %v1546 = vunpack.c.l.b16 %v466
        %v1547 = vunpack.c.h.b16 %v466
        %v1548 = vunpack.c.l.b16 %v467
        %v1549 = vunpack.c.h.b16 %v467
        %v1550 = vunpack.c.l.b16 %v468
        %v1551 = vunpack.c.h.b16 %v468
        %v1552 = vunpack.c.l.b16 %v469
        %v1553 = vunpack.c.h.b16 %v469
        %v1554 = vunpack.c.l.b16 %v470
        %v1555 = vunpack.c.h.b16 %v470
        %v1556 = vunpack.c.l.b16 %v471
        %v1557 = vunpack.c.h.b16 %v471
        %v1558 = vunpack.c.l.b16 %v472
        %v1559 = vunpack.c.h.b16 %v472
        %v1560 = vunpack.c.l.b16 %v473
        %v1561 = vunpack.c.h.b16 %v473
        %v1562 = vunpack.c.l.b16 %v474
        %v1563 = vunpack.c.h.b16 %v474
        %v1564 = vunpack.c.l.b16 %v475
        %v1565 = vunpack.c.h.b16 %v475
        %v1566 = vunpack.c.l.b16 %v476
        %v1567 = vunpack.c.h.b16 %v476
        %v1568 = vunpack.c.l.b16 %v477
        %v1569 = vunpack.c.h.b16 %v477
        %v1570 = vunpack.c.l.b16 %v478
        %v1571 = vunpack.c.h.b16 %v478
        %v1572 = vunpack.c.l.b16 %v479
        %v1573 = vunpack.c.h.b16 %v479
        %v1574 = vunpack.c.l.b16 %v480
        %v1575 = vunpack.c.h.b16 %v480
        %v1576 = vunpack.c.l.b16 %v481
        %v1577 = vunpack.c.h.b16 %v481
        %v1578 = vunpack.c.l.b16 %v482
        %v1579 = vunpack.c.h.b16 %v482
        %v1580 = vunpack.c.l.b16 %v483
        %v1581 = vunpack.c.h.b16 %v483
        %v1582 = vunpack.c.l.b16 %v484
        %v1583 = vunpack.c.h.b16 %v484
        %v1584 = vunpack.c.l.b16 %v485
        %v1585 = vunpack.c.h.b16 %v485
        %v1586 = vunpack.c.l.b16 %v486
        %v1587 = vunpack.c.h.b16 %v486
        %v1588 = vunpack.c.l.b16 %v487
        %v1589 = vunpack.c.h.b16 %v487
        %v1590 = vunpack.c.l.b16 %v488
        %v1591 = vunpack.c.h.b16 %v488
        %v1592 = vunpack.c.l.b16 %v489
        %v1593 = vunpack.c.h.b16 %v489
        %v1594 = vunpack.c.l.b16 %v490
        %v1595 = vunpack.c.h.b16 %v490
        %v1596 = vunpack.c.l.b16 %v491
        %v1597 = vunpack.c.h.b16 %v491
        %v1598 = vunpack.c.l.b16 %v492
        %v1599 = vunpack.c.h.b16 %v492
        %v1600 = vunpack.c.l.b16 %v493
        %v1601 = vunpack.c.h.b16 %v493
        %v1602 = vunpack.c.l.b16 %v494
        %v1603 = vunpack.c.h.b16 %v494
        %v1604 = vunpack.c.l.b16 %v495
        %v1605 = vunpack.c.h.b16 %v495
        %v1606 = vunpack.c.l.b16 %v496
        %v1607 = vunpack.c.h.b16 %v496
        %v1608 = vunpack.c.l.b16 %v497
        %v1609 = vunpack.c.h.b16 %v497
        %v1610 = vunpack.c.l.b16 %v498
        %v1611 = vunpack.c.h.b16 %v498
        %v1612 = vunpack.c.l.b16 %v499
        %v1613 = vunpack.c.h.b16 %v499
        %v1614 = vunpack.c.l.b16 %v500
        %v1615 = vunpack.c.h.b16 %v500
        %v1616 = vunpack.c.l.b16 %v501
        %v1617 = vunpack.c.h.b16 %v501
        %v1618 = vunpack.c.l.b16 %v502
        %v1619 = vunpack.c.h.b16 %v502
        %v1620 = vunpack.c.l.b16 %v503
        %v1621 = vunpack.c.h.b16 %v503
        %v1622 = vunpack.c.l.b16 %v504
        %v1623 = vunpack.c.h.b16 %v504
        %v1624 = vunpack.c.l.b16 %v505
        %v1625 = vunpack.c.h.b16 %v505
        %v1626 = vunpack.c.l.b16 %v506
        %v1627 = vunpack.c.h.b16 %v506
        %v1628 = vunpack.c.l.b16 %v507
        %v1629 = vunpack.c.h.b16 %v507
        %v1630 = vunpack.c.l.b16 %v508
        %v1631 = vunpack.c.h.b16 %v508
        %v1632 = vunpack.c.l.b16 %v509
        %v1633 = vunpack.c.h.b16 %v509
        %v1634 = vunpack.c.l.b16 %v510
        %v1635 = vunpack.c.h.b16 %v510
        %v1636 = vunpack.c.l.b16 %v511
        %v1637 = vunpack.c.h.b16 %v511
        %v1638 = vunpack.c.l.b16 %v512
        %v1639 = vunpack.c.h.b16 %v512
        %v1640 = vunpack.c.l.b16 %v513
        %v1641 = vunpack.c.h.b16 %v513
        %v1642 = vunpack.c.l.b16 %v514
        %v1643 = vunpack.c.h.b16 %v514
        %v1644 = vunpack.c.l.b16 %v515
        %v1645 = vunpack.c.h.b16 %v515
        %v1646 = vunpack.c.l.b16 %v516
        %v1647 = vunpack.c.h.b16 %v516
        %v1648 = vunpack.c.l.b16 %v517
        %v1649 = vunpack.c.h.b16 %v517
        %v1650 = vunpack.c.l.b16 %v518
        %v1651 = vunpack.c.h.b16 %v518
        %v1652 = vunpack.c.l.b16 %v519
        %v1653 = vunpack.c.h.b16 %v519
        %v1654 = vunpack.c.l.b16 %v520
        %v1655 = vunpack.c.h.b16 %v520
        %v1656 = vunpack.c.l.b16 %v521
        %v1657 = vunpack.c.h.b16 %v521
        %v1658 = vunpack.c.l.b16 %v522
        %v1659 = vunpack.c.h.b16 %v522
        %v1660 = vunpack.c.l.b16 %v523
        %v1661 = vunpack.c.h.b16 %v523
        %v1662 = vunpack.c.l.b16 %v524
        %v1663 = vunpack.c.h.b16 %v524
        %v1664 = vunpack.c.l.b16 %v525
        %v1665 = vunpack.c.h.b16 %v525
        %v1666 = vunpack.c.l.b16 %v526
        %v1667 = vunpack.c.h.b16 %v526
        %v1668 = vunpack.c.l.b16 %v527
        %v1669 = vunpack.c.h.b16 %v527
        %v1670 = vunpack.c.l.b16 %v528
        %v1671 = vunpack.c.h.b16 %v528
        %v1672 = vunpack.c.l.b16 %v529
        %v1673 = vunpack.c.h.b16 %v529
        %v1674 = vunpack.c.l.b16 %v530
        %v1675 = vunpack.c.h.b16 %v530
        %v1676 = vunpack.c.l.b16 %v531
        %v1677 = vunpack.c.h.b16 %v531
        %v1678 = vunpack.c.l.b16 %v532
        %v1679 = vunpack.c.h.b16 %v532
        %v1680 = vunpack.c.l.b16 %v533
        %v1681 = vunpack.c.h.b16 %v533
        %v1682 = vunpack.c.l.b16 %v534
        %v1683 = vunpack.c.h.b16 %v534
        %v1684 = vunpack.c.l.b16 %v535
        %v1685 = vunpack.c.h.b16 %v535
        %v1686 = vunpack.c.l.b16 %v536
        %v1687 = vunpack.c.h.b16 %v536
        %v1688 = vunpack.c.l.b16 %v537
        %v1689 = vunpack.c.h.b16 %v537
        %v1690 = vunpack.c.l.b16 %v538
        %v1691 = vunpack.c.h.b16 %v538
        %v1692 = vunpack.c.l.b16 %v539
        %v1693 = vunpack.c.h.b16 %v539
        %v1694 = vunpack.c.l.b16 %v540
        %v1695 = vunpack.c.h.b16 %v540
        %v1696 = vunpack.c.l.b16 %v541
        %v1697 = vunpack.c.h.b16 %v541
        %v1698 = vunpack.c.l.b16 %v542
        %v1699 = vunpack.c.h.b16 %v542
        %v1700 = vunpack.c.l.b16 %v543
        %v1701 = vunpack.c.h.b16 %v543
        %v1702 = vunpack.c.l.b16 %v544
        %v1703 = vunpack.c.h.b16 %v544
        %v1704 = vunpack.c.l.b16 %v545
        %v1705 = vunpack.c.h.b16 %v545
        %v1706 = vunpack.c.l.b16 %v546
        %v1707 = vunpack.c.h.b16 %v546
        %v1708 = vunpack.c.l.b16 %v547
        %v1709 = vunpack.c.h.b16 %v547
        %v1710 = vunpack.c.l.b16 %v548
        %v1711 = vunpack.c.h.b16 %v548
        %v1712 = vunpack.c.l.b16 %v549
        %v1713 = vunpack.c.h.b16 %v549
        %v1714 = vunpack.c.l.b16 %v550
        %v1715 = vunpack.c.h.b16 %v550
        %v1716 = vunpack.c.l.b16 %v551
        %v1717 = vunpack.c.h.b16 %v551
        %v1718 = vunpack.c.l.b16 %v552
        %v1719 = vunpack.c.h.b16 %v552
        %v1720 = vunpack.c.l.b16 %v553
        %v1721 = vunpack.c.h.b16 %v553
        %v1722 = vunpack.c.l.b16 %v554
        %v1723 = vunpack.c.h.b16 %v554
        %v1724 = vunpack.c.l.b16 %v555
        %v1725 = vunpack.c.h.b16 %v555
        %v1726 = vunpack.c.l.b16 %v556
        %v1727 = vunpack.c.h.b16 %v556
        %v1728 = vunpack.c.l.b16 %v557
        %v1729 = vunpack.c.h.b16 %v557
        %v1730 = vunpack.c.l.b16 %v558
        %v1731 = vunpack.c.h.b16 %v558
        %v1732 = vunpack.c.l.b16 %v559
        %v1733 = vunpack.c.h.b16 %v559
        %v1734 = vunpack.c.l.b16 %v560
        %v1735 = vunpack.c.h.b16 %v560
        %v1736 = vunpack.c.l.b16 %v561
        %v1737 = vunpack.c.h.b16 %v561
        %v1738 = vunpack.c.l.b16 %v562
        %v1739 = vunpack.c.h.b16 %v562
        %v1740 = vunpack.c.l.b16 %v563
        %v1741 = vunpack.c.h.b16 %v563
        %v1742 = vunpack.c.l.b16 %v564
        %v1743 = vunpack.c.h.b16 %v564
        %v1744 = vunpack.c.l.b16 %v565
        %v1745 = vunpack.c.h.b16 %v565
        %v1746 = vunpack.c.l.b16 %v566
        %v1747 = vunpack.c.h.b16 %v566
        %v1748 = vunpack.c.l.b16 %v567
        %v1749 = vunpack.c.h.b16 %v567
        %v1750 = vunpack.c.l.b16 %v568
        %v1751 = vunpack.c.h.b16 %v568
        %v1752 = vunpack.c.l.b16 %v569
        %v1753 = vunpack.c.h.b16 %v569
        %v1754 = vunpack.c.l.b16 %v570
        %v1755 = vunpack.c.h.b16 %v570
        %v1756 = vunpack.c.l.b16 %v571
        %v1757 = vunpack.c.h.b16 %v571
        %v1758 = vunpack.c.l.b16 %v572
        %v1759 = vunpack.c.h.b16 %v572
        %v1760 = vunpack.c.l.b16 %v573
        %v1761 = vunpack.c.h.b16 %v573
        %v1762 = vunpack.c.l.b16 %v574
        %v1763 = vunpack.c.h.b16 %v574
        %v1764 = vunpack.c.l.b16 %v575
        %v1765 = vunpack.c.h.b16 %v575
        %v1766 = vunpack.c.l.b16 %v576
        %v1767 = vunpack.c.h.b16 %v576
        %v1768 = vunpack.c.l.b16 %v577
        %v1769 = vunpack.c.h.b16 %v577
        %v1770 = vunpack.c.l.b16 %v578
        %v1771 = vunpack.c.h.b16 %v578
        %v1772 = vunpack.c.l.b16 %v579
        %v1773 = vunpack.c.h.b16 %v579
        %v1774 = vunpack.c.l.b16 %v580
        %v1775 = vunpack.c.h.b16 %v580
        %v1776 = vunpack.c.l.b16 %v581
        %v1777 = vunpack.c.h.b16 %v581
        %v1778 = vunpack.c.l.b16 %v582
        %v1779 = vunpack.c.h.b16 %v582
        %v1780 = vunpack.c.l.b16 %v583
        %v1781 = vunpack.c.h.b16 %v583
        %v1782 = vunpack.c.l.b16 %v584
        %v1783 = vunpack.c.h.b16 %v584
        %v1784 = vunpack.c.l.b16 %v585
        %v1785 = vunpack.c.h.b16 %v585
        %v1786 = vunpack.c.l.b16 %v586
        %v1787 = vunpack.c.h.b16 %v586
        %v1788 = vunpack.c.l.b16 %v587
        %v1789 = vunpack.c.h.b16 %v587
        %v1790 = vunpack.c.l.b16 %v588
        %v1791 = vunpack.c.h.b16 %v588
        %v1792 = vunpack.c.l.b16 %v589
        %v1793 = vunpack.c.h.b16 %v589
        %v1794 = vunpack.c.l.b16 %v590
        %v1795 = vunpack.c.h.b16 %v590
        %v1796 = vunpack.c.l.b16 %v591
        %v1797 = vunpack.c.h.b16 %v591
        %v1798 = vunpack.c.l.b16 %v592
        %v1799 = vunpack.c.h.b16 %v592
        %v1800 = vunpack.c.l.b16 %v593
        %v1801 = vunpack.c.h.b16 %v593
        %v1802 = vunpack.c.l.b16 %v594
        %v1803 = vunpack.c.h.b16 %v594
        %v1804 = vunpack.c.l.b16 %v595
        %v1805 = vunpack.c.h.b16 %v595
        %v1806 = vunpack.c.l.b16 %v596
        %v1807 = vunpack.c.h.b16 %v596
        %v1808 = vunpack.c.l.b16 %v597
        %v1809 = vunpack.c.h.b16 %v597
        %v1810 = vunpack.c.l.b16 %v598
        %v1811 = vunpack.c.h.b16 %v598
        %v1812 = vunpack.c.l.b16 %v599
        %v1813 = vunpack.c.h.b16 %v599
        %v1814 = vunpack.c.l.b16 %v600
        %v1815 = vunpack.c.h.b16 %v600
        %v1816 = vunpack.c.l.b16 %v601
        %v1817 = vunpack.c.h.b16 %v601
        %v1818 = vunpack.c.l.b16 %v602
        %v1819 = vunpack.c.h.b16 %v602
        %v1820 = vunpack.c.l.b16 %v603
        %v1821 = vunpack.c.h.b16 %v603
        %v1822 = vunpack.c.l.b16 %v604
        %v1823 = vunpack.c.h.b16 %v604
        %v1824 = vunpack.c.l.b16 %v605
        %v1825 = vunpack.c.h.b16 %v605
        %v1826 = vunpack.c.l.b16 %v606
        %v1827 = vunpack.c.h.b16 %v606
        %v1828 = vunpack.c.l.b16 %v607
        %v1829 = vunpack.c.h.b16 %v607
        %v1830 = vunpack.c.l.b16 %v608
        %v1831 = vunpack.c.h.b16 %v608
        %v1832 = vunpack.c.l.b16 %v609
        %v1833 = vunpack.c.h.b16 %v609
        %v1834 = vunpack.c.l.b16 %v610
        %v1835 = vunpack.c.h.b16 %v610
        %v1836 = vunpack.c.l.b16 %v611
        %v1837 = vunpack.c.h.b16 %v611
        %v1838 = vunpack.c.l.b16 %v612
        %v1839 = vunpack.c.h.b16 %v612
        %v1840 = vunpack.c.l.b16 %v613
        %v1841 = vunpack.c.h.b16 %v613
        %v1842 = vunpack.c.l.b16 %v614
        %v1843 = vunpack.c.h.b16 %v614
        %v1844 = vunpack.c.l.b16 %v615
        %v1845 = vunpack.c.h.b16 %v615
        %v1846 = vunpack.c.l.b16 %v616
        %v1847 = vunpack.c.h.b16 %v616
        %v1848 = vunpack.c.l.b16 %v617
        %v1849 = vunpack.c.h.b16 %v617
        %v1850 = vunpack.c.l.b16 %v618
        %v1851 = vunpack.c.h.b16 %v618
        %v1852 = vunpack.c.l.b16 %v619
        %v1853 = vunpack.c.h.b16 %v619
        %v1854 = vunpack.c.l.b16 %v620
        %v1855 = vunpack.c.h.b16 %v620
        %v1856 = vunpack.c.l.b16 %v621
        %v1857 = vunpack.c.h.b16 %v621
        %v1858 = vunpack.c.l.b16 %v622
        %v1859 = vunpack.c.h.b16 %v622
        %v1860 = vunpack.c.l.b16 %v623
        %v1861 = vunpack.c.h.b16 %v623
        %v1862 = vunpack.c.l.b16 %v624
        %v1863 = vunpack.c.h.b16 %v624
        %v1864 = vunpack.c.l.b16 %v625
        %v1865 = vunpack.c.h.b16 %v625
        %v1866 = vunpack.c.l.b16 %v626
        %v1867 = vunpack.c.h.b16 %v626
        %v1868 = vunpack.c.l.b16 %v627
        %v1869 = vunpack.c.h.b16 %v627
        %v1870 = vunpack.c.l.b16 %v628
        %v1871 = vunpack.c.h.b16 %v628
        %v1872 = vunpack.c.l.b16 %v629
        %v1873 = vunpack.c.h.b16 %v629
        %v1874 = vunpack.c.l.b16 %v630
        %v1875 = vunpack.c.h.b16 %v630
        %v1876 = vunpack.c.l.b16 %v631
        %v1877 = vunpack.c.h.b16 %v631
        %v1878 = vunpack.c.l.b16 %v632
        %v1879 = vunpack.c.h.b16 %v632
        %v1880 = vunpack.c.l.b16 %v633
        %v1881 = vunpack.c.h.b16 %v633
        %v1882 = vunpack.c.l.b16 %v634
        %v1883 = vunpack.c.h.b16 %v634
        %v1884 = vunpack.c.l.b16 %v635
        %v1885 = vunpack.c.h.b16 %v635
        %v1886 = vunpack.c.l.b16 %v636
        %v1887 = vunpack.c.h.b16 %v636
        %v1888 = vunpack.c.l.b16 %v637
        %v1889 = vunpack.c.h.b16 %v637
        %v1890 = vunpack.c.l.b16 %v638
        %v1891 = vunpack.c.h.b16 %v638
        %v1892 = vunpack.c.l.b16 %v639
        %v1893 = vunpack.c.h.b16 %v639
        %v1894 = vunpack.c.l.b16 %v640
        %v1895 = vunpack.c.h.b16 %v640
        %v1896 = vunpack.c.l.b16 %v641
        %v1897 = vunpack.c.h.b16 %v641
        %v1898 = vunpack.c.l.b16 %v642
        %v1899 = vunpack.c.h.b16 %v642
        %v1900 = vunpack.c.l.b16 %v643
        %v1901 = vunpack.c.h.b16 %v643
        %v1902 = vunpack.c.l.b16 %v644
        %v1903 = vunpack.c.h.b16 %v644
        %v1904 = vunpack.c.l.b16 %v645
        %v1905 = vunpack.c.h.b16 %v645
        %v1906 = vunpack.c.l.b16 %v646
        %v1907 = vunpack.c.h.b16 %v646
        %v1908 = vunpack.c.l.b16 %v647
        %v1909 = vunpack.c.h.b16 %v647
        %v1910 = vunpack.c.l.b16 %v648
        %v1911 = vunpack.c.h.b16 %v648
        %v1912 = vunpack.c.l.b16 %v649
        %v1913 = vunpack.c.h.b16 %v649
        %v1914 = vunpack.c.l.b16 %v650
        %v1915 = vunpack.c.h.b16 %v650
        %v1916 = vunpack.c.l.b16 %v651
        %v1917 = vunpack.c.h.b16 %v651
        %v1918 = vunpack.c.l.b16 %v652
        %v1919 = vunpack.c.h.b16 %v652
        %v1920 = vunpack.c.l.b16 %v653
        %v1921 = vunpack.c.h.b16 %v653
        %v1922 = vunpack.c.l.b16 %v654
        %v1923 = vunpack.c.h.b16 %v654
        %v1924 = vunpack.c.l.b16 %v655
        %v1925 = vunpack.c.h.b16 %v655
        %v1926 = vunpack.c.l.b16 %v656
        %v1927 = vunpack.c.h.b16 %v656
        %v1928 = vunpack.c.l.b16 %v657
        %v1929 = vunpack.c.h.b16 %v657
        %v1930 = vunpack.c.l.b16 %v658
        %v1931 = vunpack.c.h.b16 %v658
        %v1932 = vunpack.c.l.b16 %v659
        %v1933 = vunpack.c.h.b16 %v659
        %v1934 = vunpack.c.l.b16 %v660
        %v1935 = vunpack.c.h.b16 %v660
        %v1936 = vunpack.c.l.b16 %v661
        %v1937 = vunpack.c.h.b16 %v661
        %v1938 = vunpack.c.l.b16 %v662
        %v1939 = vunpack.c.h.b16 %v662
        %v1940 = vunpack.c.l.b16 %v663
        %v1941 = vunpack.c.h.b16 %v663
        %v1942 = vunpack.c.l.b16 %v664
        %v1943 = vunpack.c.h.b16 %v664
        %v1944 = vunpack.c.l.b16 %v665
        %v1945 = vunpack.c.h.b16 %v665
        %v1946 = vunpack.c.l.b16 %v666
        %v1947 = vunpack.c.h.b16 %v666
        %v1948 = vunpack.c.l.b16 %v667
        %v1949 = vunpack.c.h.b16 %v667
        %v1950 = vunpack.c.l.b16 %v668
        %v1951 = vunpack.c.h.b16 %v668
        %v1952 = vunpack.c.l.b16 %v669
        %v1953 = vunpack.c.h.b16 %v669
        %v1954 = vunpack.c.l.b16 %v670
        %v1955 = vunpack.c.h.b16 %v670
        %v1956 = vunpack.c.l.b16 %v671
        %v1957 = vunpack.c.h.b16 %v671
        %v1958 = vunpack.c.l.b16 %v672
        %v1959 = vunpack.c.h.b16 %v672
        %v1960 = vunpack.c.l.b16 %v673
        %v1961 = vunpack.c.h.b16 %v673
        %v1962 = vunpack.c.l.b16 %v674
        %v1963 = vunpack.c.h.b16 %v674
        %v1964 = vunpack.c.l.b16 %v675
        %v1965 = vunpack.c.h.b16 %v675
        %v1966 = vunpack.c.l.b16 %v676
        %v1967 = vunpack.c.h.b16 %v676
        %v1968 = vunpack.c.l.b16 %v677
        %v1969 = vunpack.c.h.b16 %v677
        %v1970 = vunpack.c.l.b16 %v678
        %v1971 = vunpack.c.h.b16 %v678
        %v1972 = vunpack.c.l.b16 %v679
        %v1973 = vunpack.c.h.b16 %v679
        %v1974 = vunpack.c.l.b16 %v680
        %v1975 = vunpack.c.h.b16 %v680
        %v1976 = vunpack.c.l.b16 %v681
        %v1977 = vunpack.c.h.b16 %v681
        %v1978 = vunpack.c.l.b16 %v682
        %v1979 = vunpack.c.h.b16 %v682
        %v1980 = vunpack.c.l.b16 %v683
        %v1981 = vunpack.c.h.b16 %v683
        %v1982 = vunpack.c.l.b16 %v684
        %v1983 = vunpack.c.h.b16 %v684
        %v1984 = vunpack.c.l.b16 %v685
        %v1985 = vunpack.c.h.b16 %v685
        %v1986 = vunpack.c.l.b16 %v686
        %v1987 = vunpack.c.h.b16 %v686
        %v1988 = vunpack.c.l.b16 %v687
        %v1989 = vunpack.c.h.b16 %v687
        %v1990 = vunpack.c.l.b16 %v688
        %v1991 = vunpack.c.h.b16 %v688
        %v1992 = vunpack.c.l.b16 %v689
        %v1993 = vunpack.c.h.b16 %v689
        %v1994 = vunpack.c.l.b16 %v690
        %v1995 = vunpack.c.h.b16 %v690
        %v1996 = vunpack.c.l.b16 %v691
        %v1997 = vunpack.c.h.b16 %v691
        %v1998 = vunpack.c.l.b16 %v692
        %v1999 = vunpack.c.h.b16 %v692
        %v2000 = vunpack.c.l.b16 %v693
        %v2001 = vunpack.c.h.b16 %v693
        %v2002 = vunpack.c.l.b16 %v694
        %v2003 = vunpack.c.h.b16 %v694
        %v2004 = vunpack.c.l.b16 %v695
        %v2005 = vunpack.c.h.b16 %v695
        %v2006 = vunpack.c.l.b16 %v696
        %v2007 = vunpack.c.h.b16 %v696
        %v2008 = vunpack.c.l.b16 %v697
        %v2009 = vunpack.c.h.b16 %v697
        %v2010 = vunpack.c.l.b16 %v698
        %v2011 = vunpack.c.h.b16 %v698
        %v2012 = vunpack.c.l.b16 %v699
        %v2013 = vunpack.c.h.b16 %v699
        %v2014 = vunpack.c.l.b16 %v700
        %v2015 = vunpack.c.h.b16 %v700
        %v2016 = vunpack.c.l.b16 %v701
        %v2017 = vunpack.c.h.b16 %v701
        %v2018 = vunpack.c.l.b16 %v702
        %v2019 = vunpack.c.h.b16 %v702
        %v2020 = vunpack.c.l.b16 %v703
        %v2021 = vunpack.c.h.b16 %v703
        %v2022 = vunpack.c.l.b16 %v704
        %v2023 = vunpack.c.h.b16 %v704
        %v2024 = vunpack.c.l.b16 %v705
        %v2025 = vunpack.c.h.b16 %v705
        %v2026 = vunpack.c.l.b16 %v706
        %v2027 = vunpack.c.h.b16 %v706
        %v2028 = vunpack.c.l.b16 %v707
        %v2029 = vunpack.c.h.b16 %v707
        %v2030 = vunpack.c.l.b16 %v708
        %v2031 = vunpack.c.h.b16 %v708
        %v2032 = vunpack.c.l.b16 %v709
        %v2033 = vunpack.c.h.b16 %v709
        %v2034 = vunpack.c.l.b16 %v710
        %v2035 = vunpack.c.h.b16 %v710
        %v2036 = vunpack.c.l.b16 %v711
        %v2037 = vunpack.c.h.b16 %v711
        %v2038 = vunpack.c.l.b16 %v712
        %v2039 = vunpack.c.h.b16 %v712
        %v2040 = vunpack.c.l.b16 %v713
        %v2041 = vunpack.c.h.b16 %v713
        %v2042 = vunpack.c.l.b16 %v714
        %v2043 = vunpack.c.h.b16 %v714
        %v2044 = vunpack.c.l.b16 %v715
        %v2045 = vunpack.c.h.b16 %v715
        %v2046 = vunpack.c.l.b16 %v716
        %v2047 = vunpack.c.h.b16 %v716
        %v2048 = vunpack.c.l.b16 %v717
        %v2049 = vunpack.c.h.b16 %v717
        %v2050 = vunpack.c.l.b16 %v718
        %v2051 = vunpack.c.h.b16 %v718
        %v2052 = vunpack.c.l.b16 %v719
        %v2053 = vunpack.c.h.b16 %v719
        %v2054 = vunpack.c.l.b16 %v720
        %v2055 = vunpack.c.h.b16 %v720
        %v2056 = vunpack.c.l.b16 %v721
        %v2057 = vunpack.c.h.b16 %v721
        %v2058 = vunpack.c.l.b16 %v722
        %v2059 = vunpack.c.h.b16 %v722
        %v2060 = vunpack.c.l.b16 %v723
        %v2061 = vunpack.c.h.b16 %v723
        %v2062 = vunpack.c.l.b16 %v724
        %v2063 = vunpack.c.h.b16 %v724
        %v2064 = vunpack.c.l.b16 %v725
        %v2065 = vunpack.c.h.b16 %v725
        %v2066 = vunpack.c.l.b16 %v726
        %v2067 = vunpack.c.h.b16 %v726
        %v2068 = vunpack.c.l.b16 %v727
        %v2069 = vunpack.c.h.b16 %v727
        %v2070 = vunpack.c.l.b16 %v728
        %v2071 = vunpack.c.h.b16 %v728
        %v2072 = vunpack.c.l.b16 %v729
        %v2073 = vunpack.c.h.b16 %v729
        %v2074 = vunpack.c.l.b16 %v730
        %v2075 = vunpack.c.h.b16 %v730
        %v2076 = vunpack.c.l.b16 %v731
        %v2077 = vunpack.c.h.b16 %v731
        %v2078 = vunpack.c.l.b16 %v732
        %v2079 = vunpack.c.h.b16 %v732
        %v2080 = vunpack.c.l.b16 %v733
        %v2081 = vunpack.c.h.b16 %v733
        %v2082 = vunpack.c.l.b16 %v734
        %v2083 = vunpack.c.h.b16 %v734
        %v2084 = vunpack.c.l.b16 %v735
        %v2085 = vunpack.c.h.b16 %v735
        %v2086 = vunpack.c.l.b16 %v736
        %v2087 = vunpack.c.h.b16 %v736
        %v2088 = vunpack.c.l.b16 %v737
        %v2089 = vunpack.c.h.b16 %v737
        %v2090 = vunpack.c.l.b16 %v738
        %v2091 = vunpack.c.h.b16 %v738
        %v2092 = vunpack.c.l.b16 %v739
        %v2093 = vunpack.c.h.b16 %v739
        %v2094 = vunpack.c.l.b16 %v740
        %v2095 = vunpack.c.h.b16 %v740
        %v2096 = vunpack.c.l.b16 %v741
        %v2097 = vunpack.c.h.b16 %v741
        %v2098 = vunpack.c.l.b16 %v742
        %v2099 = vunpack.c.h.b16 %v742
        %v2100 = vunpack.c.l.b16 %v743
        %v2101 = vunpack.c.h.b16 %v743
        %v2102 = vunpack.c.l.b16 %v744
        %v2103 = vunpack.c.h.b16 %v744
        %v2104 = vunpack.c.l.b16 %v745
        %v2105 = vunpack.c.h.b16 %v745
        %v2106 = vunpack.c.l.b16 %v746
        %v2107 = vunpack.c.h.b16 %v746
        %v2108 = vunpack.c.l.b16 %v747
        %v2109 = vunpack.c.h.b16 %v747
        %v2110 = vunpack.c.l.b16 %v748
        %v2111 = vunpack.c.h.b16 %v748
        %v2112 = vunpack.c.l.b16 %v749
        %v2113 = vunpack.c.h.b16 %v749
        %v2114 = vunpack.c.l.b16 %v750
        %v2115 = vunpack.c.h.b16 %v750
        %v2116 = vunpack.c.l.b16 %v751
        %v2117 = vunpack.c.h.b16 %v751
        %v2118 = vunpack.c.l.b16 %v752
        %v2119 = vunpack.c.h.b16 %v752
        %v2120 = vunpack.c.l.b16 %v753
        %v2121 = vunpack.c.h.b16 %v753
        %v2122 = vunpack.c.l.b16 %v754
        %v2123 = vunpack.c.h.b16 %v754
        %v2124 = vunpack.c.l.b16 %v755
        %v2125 = vunpack.c.h.b16 %v755
        %v2126 = vunpack.c.l.b16 %v756
        %v2127 = vunpack.c.h.b16 %v756
        %v2128 = vunpack.c.l.b16 %v757
        %v2129 = vunpack.c.h.b16 %v757
        %v2130 = vunpack.c.l.b16 %v758
        %v2131 = vunpack.c.h.b16 %v758
        %v2132 = vunpack.c.l.b16 %v759
        %v2133 = vunpack.c.h.b16 %v759
        %v2134 = vunpack.c.l.b16 %v760
        %v2135 = vunpack.c.h.b16 %v760
        %v2136 = vunpack.c.l.b16 %v761
        %v2137 = vunpack.c.h.b16 %v761
        %v2138 = vunpack.c.l.b16 %v762
        %v2139 = vunpack.c.h.b16 %v762
        %v2140 = vunpack.c.l.b16 %v763
        %v2141 = vunpack.c.h.b16 %v763
        %v2142 = vunpack.c.l.b16 %v764
        %v2143 = vunpack.c.h.b16 %v764
        %v2144 = vunpack.c.l.b16 %v765
        %v2145 = vunpack.c.h.b16 %v765
        %v2146 = vunpack.c.l.b16 %v766
        %v2147 = vunpack.c.h.b16 %v766
        %v2148 = vunpack.c.l.b16 %v767
        %v2149 = vunpack.c.h.b16 %v767
        %v2150 = vunpack.c.l.b16 %v768
        %v2151 = vunpack.c.h.b16 %v768
        %v2152 = vunpack.c.l.b16 %v769
        %v2153 = vunpack.c.h.b16 %v769
        %v2154 = vunpack.c.l.b16 %v770
        %v2155 = vunpack.c.h.b16 %v770
        %v2156 = vunpack.c.l.b16 %v771
        %v2157 = vunpack.c.h.b16 %v771
        %v2158 = vunpack.c.l.b16 %v772
        %v2159 = vunpack.c.h.b16 %v772
        %v2160 = vunpack.c.l.b16 %v773
        %v2161 = vunpack.c.h.b16 %v773
        %v2162 = vunpack.c.l.b16 %v774
        %v2163 = vunpack.c.h.b16 %v774
        %v2164 = vunpack.c.l.b16 %v775
        %v2165 = vunpack.c.h.b16 %v775
        %v2166 = vunpack.c.l.b16 %v776
        %v2167 = vunpack.c.h.b16 %v776
        %v2168 = vunpack.c.l.b16 %v777
        %v2169 = vunpack.c.h.b16 %v777
        %v2170 = vunpack.c.l.b16 %v778
        %v2171 = vunpack.c.h.b16 %v778
        %v2172 = vunpack.c.l.b16 %v779
        %v2173 = vunpack.c.h.b16 %v779
        %v2174 = vunpack.c.l.b16 %v780
        %v2175 = vunpack.c.h.b16 %v780
        %v2176 = vunpack.c.l.b16 %v781
        %v2177 = vunpack.c.h.b16 %v781
        %v2178 = vunpack.c.l.b16 %v782
        %v2179 = vunpack.c.h.b16 %v782
        %v2180 = vunpack.c.l.b16 %v783
        %v2181 = vunpack.c.h.b16 %v783
        %v2182 = vunpack.c.l.b16 %v784
        %v2183 = vunpack.c.h.b16 %v784
        %v2184 = vunpack.c.l.b16 %v785
        %v2185 = vunpack.c.h.b16 %v785
        %v2186 = vunpack.c.l.b16 %v786
        %v2187 = vunpack.c.h.b16 %v786
        %v2188 = vunpack.c.l.b16 %v787
        %v2189 = vunpack.c.h.b16 %v787
        %v2190 = vunpack.c.l.b16 %v788
        %v2191 = vunpack.c.h.b16 %v788
        %v2192 = vunpack.c.l.b16 %v789
        %v2193 = vunpack.c.h.b16 %v789
        %v2194 = vunpack.c.l.b16 %v790
        %v2195 = vunpack.c.h.b16 %v790
        %v2196 = vunpack.c.l.b16 %v791
        %v2197 = vunpack.c.h.b16 %v791
        %v2198 = vunpack.c.l.b16 %v792
        %v2199 = vunpack.c.h.b16 %v792
        %v2200 = vunpack.c.l.b16 %v793
        %v2201 = vunpack.c.h.b16 %v793
        %v2202 = vunpack.c.l.b16 %v794
        %v2203 = vunpack.c.h.b16 %v794
        %v2204 = vunpack.c.l.b16 %v795
        %v2205 = vunpack.c.h.b16 %v795
        %v2206 = vunpack.c.l.b16 %v796
        %v2207 = vunpack.c.h.b16 %v796
        %v2208 = vunpack.c.l.b16 %v797
        %v2209 = vunpack.c.h.b16 %v797
        %v2210 = vunpack.c.l.b16 %v798
        %v2211 = vunpack.c.h.b16 %v798
        %v2212 = vunpack.c.l.b16 %v799
        %v2213 = vunpack.c.h.b16 %v799
        %v2214 = vunpack.c.l.b16 %v800
        %v2215 = vunpack.c.h.b16 %v800
        %v2216 = vunpack.c.l.b16 %v801
        %v2217 = vunpack.c.h.b16 %v801
        %v2218 = vunpack.c.l.b16 %v802
        %v2219 = vunpack.c.h.b16 %v802
        %v2220 = vunpack.c.l.b16 %v803
        %v2221 = vunpack.c.h.b16 %v803
        %v2222 = vunpack.c.l.b16 %v804
        %v2223 = vunpack.c.h.b16 %v804
        %v2224 = vunpack.c.l.b16 %v805
        %v2225 = vunpack.c.h.b16 %v805
        %v2226 = vunpack.c.l.b16 %v806
        %v2227 = vunpack.c.h.b16 %v806
        %v2228 = vunpack.c.l.b16 %v807
        %v2229 = vunpack.c.h.b16 %v807
        %v2230 = vunpack.c.l.b16 %v808
        %v2231 = vunpack.c.h.b16 %v808
        %v2232 = vunpack.c.l.b16 %v809
        %v2233 = vunpack.c.h.b16 %v809
        %v2234 = vunpack.c.l.b16 %v810
        %v2235 = vunpack.c.h.b16 %v810
        %v2236 = vunpack.c.l.b16 %v811
        %v2237 = vunpack.c.h.b16 %v811
        %v2238 = vunpack.c.l.b16 %v812
        %v2239 = vunpack.c.h.b16 %v812
        %v2240 = vunpack.c.l.b16 %v813
        %v2241 = vunpack.c.h.b16 %v813
        %v2242 = vunpack.c.l.b16 %v814
        %v2243 = vunpack.c.h.b16 %v814
        %v2244 = vunpack.c.l.b16 %v815
        %v2245 = vunpack.c.h.b16 %v815
        %v2246 = vunpack.c.l.b16 %v816
        %v2247 = vunpack.c.h.b16 %v816
        %v2248 = vunpack.c.l.b16 %v817
        %v2249 = vunpack.c.h.b16 %v817
        %v2250 = vunpack.c.l.b16 %v818
        %v2251 = vunpack.c.h.b16 %v818
        %v2252 = vunpack.c.l.b16 %v819
        %v2253 = vunpack.c.h.b16 %v819
        %v2254 = vunpack.c.l.b16 %v820
        %v2255 = vunpack.c.h.b16 %v820
        %v2256 = vunpack.c.l.b16 %v821
        %v2257 = vunpack.c.h.b16 %v821
        %v2258 = vunpack.c.l.b16 %v822
        %v2259 = vunpack.c.h.b16 %v822
        %v2260 = vunpack.c.l.b16 %v823
        %v2261 = vunpack.c.h.b16 %v823
        %v2262 = vunpack.c.l.b16 %v824
        %v2263 = vunpack.c.h.b16 %v824
        %v2264 = vunpack.c.l.b16 %v825
        %v2265 = vunpack.c.h.b16 %v825
        %v2266 = vunpack.c.l.b16 %v826
        %v2267 = vunpack.c.h.b16 %v826
        %v2268 = vunpack.c.l.b16 %v827
        %v2269 = vunpack.c.h.b16 %v827
        %v2270 = vunpack.c.l.b16 %v828
        %v2271 = vunpack.c.h.b16 %v828
        %v2272 = vunpack.c.l.b16 %v829
        %v2273 = vunpack.c.h.b16 %v829
        %v2274 = vunpack.c.l.b16 %v830
        %v2275 = vunpack.c.h.b16 %v830
        %v2276 = vunpack.c.l.b16 %v831
        %v2277 = vunpack.c.h.b16 %v831
        %v2278 = vunpack.c.l.b16 %v832
        %v2279 = vunpack.c.h.b16 %v832
        %v2280 = vunpack.c.l.b16 %v833
        %v2281 = vunpack.c.h.b16 %v833
        %v2282 = vunpack.c.l.b16 %v834
        %v2283 = vunpack.c.h.b16 %v834
        %v2284 = vunpack.c.l.b16 %v835
        %v2285 = vunpack.c.h.b16 %v835
        %v2286 = vunpack.c.l.b16 %v836
        %v2287 = vunpack.c.h.b16 %v836
        %v2288 = vunpack.c.l.b16 %v837
        %v2289 = vunpack.c.h.b16 %v837
        %v2290 = vunpack.c.l.b16 %v838
        %v2291 = vunpack.c.h.b16 %v838
        %v2292 = vunpack.c.l.b16 %v839
        %v2293 = vunpack.c.h.b16 %v839
        %v2294 = vunpack.c.l.b16 %v840
        %v2295 = vunpack.c.h.b16 %v840
        %v2296 = vunpack.c.l.b16 %v841
        %v2297 = vunpack.c.h.b16 %v841
        %v2298 = vunpack.c.l.b16 %v842
        %v2299 = vunpack.c.h.b16 %v842
        %v2300 = vunpack.c.l.b16 %v843
        %v2301 = vunpack.c.h.b16 %v843
        %v2302 = vunpack.c.l.b16 %v844
        %v2303 = vunpack.c.h.b16 %v844
        %v2304 = vunpack.c.l.b16 %v845
        %v2305 = vunpack.c.h.b16 %v845
        %v2306 = vunpack.c.l.b16 %v846
        %v2307 = vunpack.c.h.b16 %v846
        %v2308 = vunpack.c.l.b16 %v847
        %v2309 = vunpack.c.h.b16 %v847
        %v2310 = vunpack.c.l.b16 %v848
        %v2311 = vunpack.c.h.b16 %v848
        %v2312 = vunpack.c.l.b16 %v849
        %v2313 = vunpack.c.h.b16 %v849
        %v2314 = vunpack.c.l.b16 %v850
        %v2315 = vunpack.c.h.b16 %v850
        %v2316 = vunpack.c.l.b16 %v851
        %v2317 = vunpack.c.h.b16 %v851
        %v2318 = vunpack.c.l.b16 %v852
        %v2319 = vunpack.c.h.b16 %v852
        %v2320 = vunpack.c.l.b16 %v853
        %v2321 = vunpack.c.h.b16 %v853
        %v2322 = vunpack.c.l.b16 %v854
        %v2323 = vunpack.c.h.b16 %v854
        %v2324 = vunpack.c.l.b16 %v855
        %v2325 = vunpack.c.h.b16 %v855
        %v2326 = vunpack.c.l.b16 %v856
        %v2327 = vunpack.c.h.b16 %v856
        %v2328 = vunpack.c.l.b16 %v857
        %v2329 = vunpack.c.h.b16 %v857
        %v2330 = vunpack.c.l.b16 %v858
        %v2331 = vunpack.c.h.b16 %v858
        %v2332 = vunpack.c.l.b16 %v859
        %v2333 = vunpack.c.h.b16 %v859
        %v2334 = vunpack.c.l.b16 %v860
        %v2335 = vunpack.c.h.b16 %v860
        %v2336 = vunpack.c.l.b16 %v861
        %v2337 = vunpack.c.h.b16 %v861
        %v2338 = vunpack.c.l.b16 %v862
        %v2339 = vunpack.c.h.b16 %v862
        %v2340 = vunpack.c.l.b16 %v863
        %v2341 = vunpack.c.h.b16 %v863
        %v2342 = vunpack.c.l.b16 %v864
        %v2343 = vunpack.c.h.b16 %v864
        %v2344 = vunpack.c.l.b16 %v865
        %v2345 = vunpack.c.h.b16 %v865
        %v2346 = vunpack.c.l.b16 %v866
        %v2347 = vunpack.c.h.b16 %v866
        %v2348 = vunpack.c.l.b16 %v867
        %v2349 = vunpack.c.h.b16 %v867
        %v2350 = vunpack.c.l.b16 %v868
        %v2351 = vunpack.c.h.b16 %v868
        %v2352 = vunpack.c.l.b16 %v869
        %v2353 = vunpack.c.h.b16 %v869
        %v2354 = vunpack.c.l.b16 %v870
        %v2355 = vunpack.c.h.b16 %v870
        %v2356 = vunpack.c.l.b16 %v871
        %v2357 = vunpack.c.h.b16 %v871
        %v2358 = vunpack.c.l.b16 %v872
        %v2359 = vunpack.c.h.b16 %v872
        %v2360 = vunpack.c.l.b16 %v873
        %v2361 = vunpack.c.h.b16 %v873
        %v2362 = vunpack.c.l.b16 %v874
        %v2363 = vunpack.c.h.b16 %v874
        %v2364 = vunpack.c.l.b16 %v875
        %v2365 = vunpack.c.h.b16 %v875
        %v2366 = vunpack.c.l.b16 %v876
        %v2367 = vunpack.c.h.b16 %v876
        %v2368 = vunpack.c.l.b16 %v877
        %v2369 = vunpack.c.h.b16 %v877
        %v2370 = vunpack.c.l.b16 %v878
        %v2371 = vunpack.c.h.b16 %v878
        %v2372 = vunpack.c.l.b16 %v879
        %v2373 = vunpack.c.h.b16 %v879
        %v2374 = vunpack.c.l.b16 %v880
        %v2375 = vunpack.c.h.b16 %v880
        %v2376 = vunpack.c.l.b16 %v881
        %v2377 = vunpack.c.h.b16 %v881
        %v2378 = vunpack.c.l.b16 %v882
        %v2379 = vunpack.c.h.b16 %v882
        %v2380 = vunpack.c.l.b16 %v883
        %v2381 = vunpack.c.h.b16 %v883
        %v2382 = vunpack.c.l.b16 %v884
        %v2383 = vunpack.c.h.b16 %v884
        %v2384 = vunpack.c.l.b16 %v885
        %v2385 = vunpack.c.h.b16 %v885
        %v2386 = vunpack.c.l.b16 %v886
        %v2387 = vunpack.c.h.b16 %v886
        %v2388 = vunpack.c.l.b16 %v887
        %v2389 = vunpack.c.h.b16 %v887
        %v2390 = vunpack.c.l.b16 %v888
        %v2391 = vunpack.c.h.b16 %v888
        %v2392 = vunpack.c.l.b16 %v889
        %v2393 = vunpack.c.h.b16 %v889
        %v2394 = vunpack.c.l.b16 %v890
        %v2395 = vunpack.c.h.b16 %v890
        %v2396 = vunpack.c.l.b16 %v891
        %v2397 = vunpack.c.h.b16 %v891
        %v2398 = vunpack.c.l.b16 %v892
        %v2399 = vunpack.c.h.b16 %v892
        %v2400 = vunpack.c.l.b16 %v893
        %v2401 = vunpack.c.h.b16 %v893
        %v2402 = vunpack.c.l.b16 %v894
        %v2403 = vunpack.c.h.b16 %v894
        %v2404 = vunpack.c.l.b16 %v895
        %v2405 = vunpack.c.h.b16 %v895
        %v2406 = vunpack.c.l.b16 %v896
        %v2407 = vunpack.c.h.b16 %v896
        %v2408 = vunpack.c.l.b16 %v897
        %v2409 = vunpack.c.h.b16 %v897
        %v2410 = vunpack.c.l.b16 %v898
        %v2411 = vunpack.c.h.b16 %v898
        %v2412 = vunpack.c.l.b16 %v899
        %v2413 = vunpack.c.h.b16 %v899
        %v2414 = vunpack.c.l.b16 %v900
        %v2415 = vunpack.c.h.b16 %v900
        %v2416 = vunpack.c.l.b16 %v901
        %v2417 = vunpack.c.h.b16 %v901
        %v2418 = vunpack.c.l.b16 %v902
        %v2419 = vunpack.c.h.b16 %v902
        %v2420 = vunpack.c.l.b16 %v903
        %v2421 = vunpack.c.h.b16 %v903
        %v2422 = vunpack.c.l.b16 %v904
        %v2423 = vunpack.c.h.b16 %v904
        %v2424 = vunpack.c.l.b16 %v905
        %v2425 = vunpack.c.h.b16 %v905
        %v2426 = vunpack.c.l.b16 %v906
        %v2427 = vunpack.c.h.b16 %v906
        %v2428 = vunpack.c.l.b16 %v907
        %v2429 = vunpack.c.h.b16 %v907
        %v2430 = vunpack.c.l.b16 %v908
        %v2431 = vunpack.c.h.b16 %v908
        %v2432 = vunpack.c.l.b16 %v909
        %v2433 = vunpack.c.h.b16 %v909
        %v2434 = vunpack.c.l.b16 %v910
        %v2435 = vunpack.c.h.b16 %v910
        %v2436 = vunpack.c.l.b16 %v911
        %v2437 = vunpack.c.h.b16 %v911
        %v2438 = vunpack.c.l.b16 %v912
        %v2439 = vunpack.c.h.b16 %v912
        %v2440 = vunpack.c.l.b16 %v913
        %v2441 = vunpack.c.h.b16 %v913
        %v2442 = vunpack.c.l.b16 %v914
        %v2443 = vunpack.c.h.b16 %v914
        %v2444 = vunpack.c.l.b16 %v915
        %v2445 = vunpack.c.h.b16 %v915
        %v2446 = vunpack.c.l.b16 %v916
        %v2447 = vunpack.c.h.b16 %v916
        %v2448 = vunpack.c.l.b16 %v917
        %v2449 = vunpack.c.h.b16 %v917
        %v2450 = vunpack.c.l.b16 %v918
        %v2451 = vunpack.c.h.b16 %v918
        %v2452 = vunpack.c.l.b16 %v919
        %v2453 = vunpack.c.h.b16 %v919
        %v2454 = vunpack.c.l.b16 %v920
        %v2455 = vunpack.c.h.b16 %v920
        %v2456 = vunpack.c.l.b16 %v921
        %v2457 = vunpack.c.h.b16 %v921
        %v2458 = vunpack.c.l.b16 %v922
        %v2459 = vunpack.c.h.b16 %v922
        %v2460 = vunpack.c.l.b16 %v923
        %v2461 = vunpack.c.h.b16 %v923
        %v2462 = vunpack.c.l.b16 %v924
        %v2463 = vunpack.c.h.b16 %v924
        %v2464 = vunpack.c.l.b16 %v925
        %v2465 = vunpack.c.h.b16 %v925
        %v2466 = vunpack.c.l.b16 %v926
        %v2467 = vunpack.c.h.b16 %v926
        %v2468 = vunpack.c.l.b16 %v927
        %v2469 = vunpack.c.h.b16 %v927
        %v2470 = vunpack.c.l.b16 %v928
        %v2471 = vunpack.c.h.b16 %v928
        %v2472 = vunpack.c.l.b16 %v929
        %v2473 = vunpack.c.h.b16 %v929
        %v2474 = vunpack.c.l.b16 %v930
        %v2475 = vunpack.c.h.b16 %v930
        %v2476 = vunpack.c.l.b16 %v931
        %v2477 = vunpack.c.h.b16 %v931
        %v2478 = vunpack.c.l.b16 %v932
        %v2479 = vunpack.c.h.b16 %v932
        %v2480 = vunpack.c.l.b16 %v933
        %v2481 = vunpack.c.h.b16 %v933
        %v2482 = vunpack.c.l.b16 %v934
        %v2483 = vunpack.c.h.b16 %v934
        %v2484 = vunpack.c.l.b16 %v935
        %v2485 = vunpack.c.h.b16 %v935
        %v2486 = vunpack.c.l.b16 %v936
        %v2487 = vunpack.c.h.b16 %v936
        %v2488 = vunpack.c.l.b16 %v937
        %v2489 = vunpack.c.h.b16 %v937
        %v2490 = vunpack.c.l.b16 %v938
        %v2491 = vunpack.c.h.b16 %v938
        %v2492 = vunpack.c.l.b16 %v939
        %v2493 = vunpack.c.h.b16 %v939
        %v2494 = vunpack.c.l.b16 %v940
        %v2495 = vunpack.c.h.b16 %v940
        %v2496 = vunpack.c.l.b16 %v941
        %v2497 = vunpack.c.h.b16 %v941
        %v2498 = vunpack.c.l.b16 %v942
        %v2499 = vunpack.c.h.b16 %v942
        %v2500 = vunpack.c.l.b16 %v943
        %v2501 = vunpack.c.h.b16 %v943
        %v2502 = vunpack.c.l.b16 %v944
        %v2503 = vunpack.c.h.b16 %v944
        %v2504 = vunpack.c.l.b16 %v945
        %v2505 = vunpack.c.h.b16 %v945
        %v2506 = vunpack.c.l.b16 %v946
        %v2507 = vunpack.c.h.b16 %v946
        %v2508 = vunpack.c.l.b16 %v947
        %v2509 = vunpack.c.h.b16 %v947
        %v2510 = vunpack.c.l.b16 %v948
        %v2511 = vunpack.c.h.b16 %v948
        %v2512 = vunpack.c.l.b16 %v949
        %v2513 = vunpack.c.h.b16 %v949
        %v2514 = vpack.c.b16 %v1498, %v1490
        %v2515 = vpack.c.b16 %v1499, %v1491
        %v2516 = vpack.c.b16 %v1500, %v1492
        %v2517 = vpack.c.b16 %v1501, %v1493
        %v2518 = vpack.c.b16 %v1502, %v1494
        %v2519 = vpack.c.b16 %v1503, %v1495
        %v2520 = vpack.c.b16 %v1504, %v1496
        %v2521 = vpack.c.b16 %v1505, %v1497
        %v2522 = vpack.c.b16 %v1514, %v1506
        %v2523 = vpack.c.b16 %v1515, %v1507
        %v2524 = vpack.c.b16 %v1516, %v1508
        %v2525 = vpack.c.b16 %v1517, %v1509
        %v2526 = vpack.c.b16 %v1518, %v1510
        %v2527 = vpack.c.b16 %v1519, %v1511
        %v2528 = vpack.c.b16 %v1520, %v1512
        %v2529 = vpack.c.b16 %v1521, %v1513
        %v2530 = vpack.c.b16 %v1530, %v1522
        %v2531 = vpack.c.b16 %v1531, %v1523
        %v2532 = vpack.c.b16 %v1532, %v1524
        %v2533 = vpack.c.b16 %v1533, %v1525
        %v2534 = vpack.c.b16 %v1534, %v1526
        %v2535 = vpack.c.b16 %v1535, %v1527
        %v2536 = vpack.c.b16 %v1536, %v1528
        %v2537 = vpack.c.b16 %v1537, %v1529
        %v2538 = vpack.c.b16 %v1546, %v1538
        %v2539 = vpack.c.b16 %v1547, %v1539
        %v2540 = vpack.c.b16 %v1548, %v1540
        %v2541 = vpack.c.b16 %v1549, %v1541
        %v2542 = vpack.c.b16 %v1550, %v1542
        %v2543 = vpack.c.b16 %v1551, %v1543
        %v2544 = vpack.c.b16 %v1552, %v1544
        %v2545 = vpack.c.b16 %v1553, %v1545
        %v2546 = vpack.c.b16 %v1562, %v1554
        %v2547 = vpack.c.b16 %v1563, %v1555
        %v2548 = vpack.c.b16 %v1564, %v1556
        %v2549 = vpack.c.b16 %v1565, %v1557
        %v2550 = vpack.c.b16 %v1566, %v1558
        %v2551 = vpack.c.b16 %v1567, %v1559
        %v2552 = vpack.c.b16 %v1568, %v1560
        %v2553 = vpack.c.b16 %v1569, %v1561
        %v2554 = vpack.c.b16 %v1578, %v1570
        %v2555 = vpack.c.b16 %v1579, %v1571
        %v2556 = vpack.c.b16 %v1580, %v1572
        %v2557 = vpack.c.b16 %v1581, %v1573
        %v2558 = vpack.c.b16 %v1582, %v1574
        %v2559 = vpack.c.b16 %v1583, %v1575
        %v2560 = vpack.c.b16 %v1584, %v1576
        %v2561 = vpack.c.b16 %v1585, %v1577
        %v2562 = vpack.c.b16 %v1594, %v1586
        %v2563 = vpack.c.b16 %v1595, %v1587
        %v2564 = vpack.c.b16 %v1596, %v1588
        %v2565 = vpack.c.b16 %v1597, %v1589
        %v2566 = vpack.c.b16 %v1598, %v1590
        %v2567 = vpack.c.b16 %v1599, %v1591
        %v2568 = vpack.c.b16 %v1600, %v1592
        %v2569 = vpack.c.b16 %v1601, %v1593
        %v2570 = vpack.c.b16 %v1610, %v1602
        %v2571 = vpack.c.b16 %v1611, %v1603
        %v2572 = vpack.c.b16 %v1612, %v1604
        %v2573 = vpack.c.b16 %v1613, %v1605
        %v2574 = vpack.c.b16 %v1614, %v1606
        %v2575 = vpack.c.b16 %v1615, %v1607
        %v2576 = vpack.c.b16 %v1616, %v1608
        %v2577 = vpack.c.b16 %v1617, %v1609
        %v2578 = vpack.c.b16 %v1626, %v1618
        %v2579 = vpack.c.b16 %v1627, %v1619
        %v2580 = vpack.c.b16 %v1628, %v1620
        %v2581 = vpack.c.b16 %v1629, %v1621
        %v2582 = vpack.c.b16 %v1630, %v1622
        %v2583 = vpack.c.b16 %v1631, %v1623
        %v2584 = vpack.c.b16 %v1632, %v1624
        %v2585 = vpack.c.b16 %v1633, %v1625
        %v2586 = vpack.c.b16 %v1642, %v1634
        %v2587 = vpack.c.b16 %v1643, %v1635
        %v2588 = vpack.c.b16 %v1644, %v1636
        %v2589 = vpack.c.b16 %v1645, %v1637
        %v2590 = vpack.c.b16 %v1646, %v1638
        %v2591 = vpack.c.b16 %v1647, %v1639
        %v2592 = vpack.c.b16 %v1648, %v1640
        %v2593 = vpack.c.b16 %v1649, %v1641
        %v2594 = vpack.c.b16 %v1658, %v1650
        %v2595 = vpack.c.b16 %v1659, %v1651
        %v2596 = vpack.c.b16 %v1660, %v1652
        %v2597 = vpack.c.b16 %v1661, %v1653
        %v2598 = vpack.c.b16 %v1662, %v1654
        %v2599 = vpack.c.b16 %v1663, %v1655
        %v2600 = vpack.c.b16 %v1664, %v1656
        %v2601 = vpack.c.b16 %v1665, %v1657
        %v2602 = vpack.c.b16 %v1674, %v1666
        %v2603 = vpack.c.b16 %v1675, %v1667
        %v2604 = vpack.c.b16 %v1676, %v1668
        %v2605 = vpack.c.b16 %v1677, %v1669
        %v2606 = vpack.c.b16 %v1678, %v1670
        %v2607 = vpack.c.b16 %v1679, %v1671
        %v2608 = vpack.c.b16 %v1680, %v1672
        %v2609 = vpack.c.b16 %v1681, %v1673
        %v2610 = vpack.c.b16 %v1690, %v1682
        %v2611 = vpack.c.b16 %v1691, %v1683
        %v2612 = vpack.c.b16 %v1692, %v1684
        %v2613 = vpack.c.b16 %v1693, %v1685
        %v2614 = vpack.c.b16 %v1694, %v1686
        %v2615 = vpack.c.b16 %v1695, %v1687
        %v2616 = vpack.c.b16 %v1696, %v1688
        %v2617 = vpack.c.b16 %v1697, %v1689
        %v2618 = vpack.c.b16 %v1706, %v1698
        %v2619 = vpack.c.b16 %v1707, %v1699
        %v2620 = vpack.c.b16 %v1708, %v1700
        %v2621 = vpack.c.b16 %v1709, %v1701
        %v2622 = vpack.c.b16 %v1710, %v1702
        %v2623 = vpack.c.b16 %v1711, %v1703
        %v2624 = vpack.c.b16 %v1712, %v1704
        %v2625 = vpack.c.b16 %v1713, %v1705
        %v2626 = vpack.c.b16 %v1722, %v1714
        %v2627 = vpack.c.b16 %v1723, %v1715
        %v2628 = vpack.c.b16 %v1724, %v1716
        %v2629 = vpack.c.b16 %v1725, %v1717
        %v2630 = vpack.c.b16 %v1726, %v1718
        %v2631 = vpack.c.b16 %v1727, %v1719
        %v2632 = vpack.c.b16 %v1728, %v1720
        %v2633 = vpack.c.b16 %v1729, %v1721
        %v2634 = vpack.c.b16 %v1738, %v1730
        %v2635 = vpack.c.b16 %v1739, %v1731
        %v2636 = vpack.c.b16 %v1740, %v1732
        %v2637 = vpack.c.b16 %v1741, %v1733
        %v2638 = vpack.c.b16 %v1742, %v1734
        %v2639 = vpack.c.b16 %v1743, %v1735
        %v2640 = vpack.c.b16 %v1744, %v1736
        %v2641 = vpack.c.b16 %v1745, %v1737
        %v2642 = vpack.c.b16 %v1754, %v1746
        %v2643 = vpack.c.b16 %v1755, %v1747
        %v2644 = vpack.c.b16 %v1756, %v1748
        %v2645 = vpack.c.b16 %v1757, %v1749
        %v2646 = vpack.c.b16 %v1758, %v1750
        %v2647 = vpack.c.b16 %v1759, %v1751
        %v2648 = vpack.c.b16 %v1760, %v1752
        %v2649 = vpack.c.b16 %v1761, %v1753
        %v2650 = vpack.c.b16 %v1770, %v1762
        %v2651 = vpack.c.b16 %v1771, %v1763
        %v2652 = vpack.c.b16 %v1772, %v1764
        %v2653 = vpack.c.b16 %v1773, %v1765
        %v2654 = vpack.c.b16 %v1774, %v1766
        %v2655 = vpack.c.b16 %v1775, %v1767
        %v2656 = vpack.c.b16 %v1776, %v1768
        %v2657 = vpack.c.b16 %v1777, %v1769
        %v2658 = vpack.c.b16 %v1786, %v1778
        %v2659 = vpack.c.b16 %v1787, %v1779
        %v2660 = vpack.c.b16 %v1788, %v1780
        %v2661 = vpack.c.b16 %v1789, %v1781
        %v2662 = vpack.c.b16 %v1790, %v1782
        %v2663 = vpack.c.b16 %v1791, %v1783
        %v2664 = vpack.c.b16 %v1792, %v1784
        %v2665 = vpack.c.b16 %v1793, %v1785
        %v2666 = vpack.c.b16 %v1802, %v1794
        %v2667 = vpack.c.b16 %v1803, %v1795
        %v2668 = vpack.c.b16 %v1804, %v1796
        %v2669 = vpack.c.b16 %v1805, %v1797
        %v2670 = vpack.c.b16 %v1806, %v1798
        %v2671 = vpack.c.b16 %v1807, %v1799
        %v2672 = vpack.c.b16 %v1808, %v1800
        %v2673 = vpack.c.b16 %v1809, %v1801
        %v2674 = vpack.c.b16 %v1818, %v1810
        %v2675 = vpack.c.b16 %v1819, %v1811
        %v2676 = vpack.c.b16 %v1820, %v1812
        %v2677 = vpack.c.b16 %v1821, %v1813
        %v2678 = vpack.c.b16 %v1822, %v1814
        %v2679 = vpack.c.b16 %v1823, %v1815
        %v2680 = vpack.c.b16 %v1824, %v1816
        %v2681 = vpack.c.b16 %v1825, %v1817
        %v2682 = vpack.c.b16 %v1834, %v1826
        %v2683 = vpack.c.b16 %v1835, %v1827
        %v2684 = vpack.c.b16 %v1836, %v1828
        %v2685 = vpack.c.b16 %v1837, %v1829
        %v2686 = vpack.c.b16 %v1838, %v1830
        %v2687 = vpack.c.b16 %v1839, %v1831
        %v2688 = vpack.c.b16 %v1840, %v1832
        %v2689 = vpack.c.b16 %v1841, %v1833
        %v2690 = vpack.c.b16 %v1850, %v1842
        %v2691 = vpack.c.b16 %v1851, %v1843
        %v2692 = vpack.c.b16 %v1852, %v1844
        %v2693 = vpack.c.b16 %v1853, %v1845
        %v2694 = vpack.c.b16 %v1854, %v1846
        %v2695 = vpack.c.b16 %v1855, %v1847
        %v2696 = vpack.c.b16 %v1856, %v1848
        %v2697 = vpack.c.b16 %v1857, %v1849
        %v2698 = vpack.c.b16 %v1866, %v1858
        %v2699 = vpack.c.b16 %v1867, %v1859
        %v2700 = vpack.c.b16 %v1868, %v1860
        %v2701 = vpack.c.b16 %v1869, %v1861
        %v2702 = vpack.c.b16 %v1870, %v1862
        %v2703 = vpack.c.b16 %v1871, %v1863
        %v2704 = vpack.c.b16 %v1872, %v1864
        %v2705 = vpack.c.b16 %v1873, %v1865
        %v2706 = vpack.c.b16 %v1882, %v1874
        %v2707 = vpack.c.b16 %v1883, %v1875
        %v2708 = vpack.c.b16 %v1884, %v1876
        %v2709 = vpack.c.b16 %v1885, %v1877
        %v2710 = vpack.c.b16 %v1886, %v1878
        %v2711 = vpack.c.b16 %v1887, %v1879
        %v2712 = vpack.c.b16 %v1888, %v1880
        %v2713 = vpack.c.b16 %v1889, %v1881
        %v2714 = vpack.c.b16 %v1898, %v1890
        %v2715 = vpack.c.b16 %v1899, %v1891
        %v2716 = vpack.c.b16 %v1900, %v1892
        %v2717 = vpack.c.b16 %v1901, %v1893
        %v2718 = vpack.c.b16 %v1902, %v1894
        %v2719 = vpack.c.b16 %v1903, %v1895
        %v2720 = vpack.c.b16 %v1904, %v1896
        %v2721 = vpack.c.b16 %v1905, %v1897
        %v2722 = vpack.c.b16 %v1914, %v1906
        %v2723 = vpack.c.b16 %v1915, %v1907
        %v2724 = vpack.c.b16 %v1916, %v1908
        %v2725 = vpack.c.b16 %v1917, %v1909
        %v2726 = vpack.c.b16 %v1918, %v1910
        %v2727 = vpack.c.b16 %v1919, %v1911
        %v2728 = vpack.c.b16 %v1920, %v1912
        %v2729 = vpack.c.b16 %v1921, %v1913
        %v2730 = vpack.c.b16 %v1930, %v1922
        %v2731 = vpack.c.b16 %v1931, %v1923
        %v2732 = vpack.c.b16 %v1932, %v1924
        %v2733 = vpack.c.b16 %v1933, %v1925
        %v2734 = vpack.c.b16 %v1934, %v1926
        %v2735 = vpack.c.b16 %v1935, %v1927
        %v2736 = vpack.c.b16 %v1936, %v1928
        %v2737 = vpack.c.b16 %v1937, %v1929
        %v2738 = vpack.c.b16 %v1946, %v1938
        %v2739 = vpack.c.b16 %v1947, %v1939
        %v2740 = vpack.c.b16 %v1948, %v1940
        %v2741 = vpack.c.b16 %v1949, %v1941
        %v2742 = vpack.c.b16 %v1950, %v1942
        %v2743 = vpack.c.b16 %v1951, %v1943
        %v2744 = vpack.c.b16 %v1952, %v1944
        %v2745 = vpack.c.b16 %v1953, %v1945
        %v2746 = vpack.c.b16 %v1962, %v1954
        %v2747 = vpack.c.b16 %v1963, %v1955
        %v2748 = vpack.c.b16 %v1964, %v1956
        %v2749 = vpack.c.b16 %v1965, %v1957
        %v2750 = vpack.c.b16 %v1966, %v1958
        %v2751 = vpack.c.b16 %v1967, %v1959
        %v2752 = vpack.c.b16 %v1968, %v1960
        %v2753 = vpack.c.b16 %v1969, %v1961
        %v2754 = vpack.c.b16 %v1978, %v1970
        %v2755 = vpack.c.b16 %v1979, %v1971
        %v2756 = vpack.c.b16 %v1980, %v1972
        %v2757 = vpack.c.b16 %v1981, %v1973
        %v2758 = vpack.c.b16 %v1982, %v1974
        %v2759 = vpack.c.b16 %v1983, %v1975
        %v2760 = vpack.c.b16 %v1984, %v1976
        %v2761 = vpack.c.b16 %v1985, %v1977
        %v2762 = vpack.c.b16 %v1994, %v1986
        %v2763 = vpack.c.b16 %v1995, %v1987
        %v2764 = vpack.c.b16 %v1996, %v1988
        %v2765 = vpack.c.b16 %v1997, %v1989
        %v2766 = vpack.c.b16 %v1998, %v1990
        %v2767 = vpack.c.b16 %v1999, %v1991
        %v2768 = vpack.c.b16 %v2000, %v1992
        %v2769 = vpack.c.b16 %v2001, %v1993
        %v2770 = vpack.c.b16 %v2010, %v2002
        %v2771 = vpack.c.b16 %v2011, %v2003
        %v2772 = vpack.c.b16 %v2012, %v2004
        %v2773 = vpack.c.b16 %v2013, %v2005
        %v2774 = vpack.c.b16 %v2014, %v2006
        %v2775 = vpack.c.b16 %v2015, %v2007
        %v2776 = vpack.c.b16 %v2016, %v2008
        %v2777 = vpack.c.b16 %v2017, %v2009
        %v2778 = vpack.c.b16 %v2026, %v2018
        %v2779 = vpack.c.b16 %v2027, %v2019
        %v2780 = vpack.c.b16 %v2028, %v2020
        %v2781 = vpack.c.b16 %v2029, %v2021
        %v2782 = vpack.c.b16 %v2030, %v2022
        %v2783 = vpack.c.b16 %v2031, %v2023
        %v2784 = vpack.c.b16 %v2032, %v2024
        %v2785 = vpack.c.b16 %v2033, %v2025
        %v2786 = vpack.c.b16 %v2042, %v2034
        %v2787 = vpack.c.b16 %v2043, %v2035
        %v2788 = vpack.c.b16 %v2044, %v2036
        %v2789 = vpack.c.b16 %v2045, %v2037
        %v2790 = vpack.c.b16 %v2046, %v2038
        %v2791 = vpack.c.b16 %v2047, %v2039
        %v2792 = vpack.c.b16 %v2048, %v2040
        %v2793 = vpack.c.b16 %v2049, %v2041
        %v2794 = vpack.c.b16 %v2058, %v2050
        %v2795 = vpack.c.b16 %v2059, %v2051
        %v2796 = vpack.c.b16 %v2060, %v2052
        %v2797 = vpack.c.b16 %v2061, %v2053
        %v2798 = vpack.c.b16 %v2062, %v2054
        %v2799 = vpack.c.b16 %v2063, %v2055
        %v2800 = vpack.c.b16 %v2064, %v2056
        %v2801 = vpack.c.b16 %v2065, %v2057
        %v2802 = vpack.c.b16 %v2074, %v2066
        %v2803 = vpack.c.b16 %v2075, %v2067
        %v2804 = vpack.c.b16 %v2076, %v2068
        %v2805 = vpack.c.b16 %v2077, %v2069
        %v2806 = vpack.c.b16 %v2078, %v2070
        %v2807 = vpack.c.b16 %v2079, %v2071
        %v2808 = vpack.c.b16 %v2080, %v2072
        %v2809 = vpack.c.b16 %v2081, %v2073
        %v2810 = vpack.c.b16 %v2090, %v2082
        %v2811 = vpack.c.b16 %v2091, %v2083
        %v2812 = vpack.c.b16 %v2092, %v2084
        %v2813 = vpack.c.b16 %v2093, %v2085
        %v2814 = vpack.c.b16 %v2094, %v2086
        %v2815 = vpack.c.b16 %v2095, %v2087
        %v2816 = vpack.c.b16 %v2096, %v2088
        %v2817 = vpack.c.b16 %v2097, %v2089
        %v2818 = vpack.c.b16 %v2106, %v2098
        %v2819 = vpack.c.b16 %v2107, %v2099
        %v2820 = vpack.c.b16 %v2108, %v2100
        %v2821 = vpack.c.b16 %v2109, %v2101
        %v2822 = vpack.c.b16 %v2110, %v2102
        %v2823 = vpack.c.b16 %v2111, %v2103
        %v2824 = vpack.c.b16 %v2112, %v2104
        %v2825 = vpack.c.b16 %v2113, %v2105
        %v2826 = vpack.c.b16 %v2122, %v2114
        %v2827 = vpack.c.b16 %v2123, %v2115
        %v2828 = vpack.c.b16 %v2124, %v2116
        %v2829 = vpack.c.b16 %v2125, %v2117
        %v2830 = vpack.c.b16 %v2126, %v2118
        %v2831 = vpack.c.b16 %v2127, %v2119
        %v2832 = vpack.c.b16 %v2128, %v2120
        %v2833 = vpack.c.b16 %v2129, %v2121
        %v2834 = vpack.c.b16 %v2138, %v2130
        %v2835 = vpack.c.b16 %v2139, %v2131
        %v2836 = vpack.c.b16 %v2140, %v2132
        %v2837 = vpack.c.b16 %v2141, %v2133
        %v2838 = vpack.c.b16 %v2142, %v2134
        %v2839 = vpack.c.b16 %v2143, %v2135
        %v2840 = vpack.c.b16 %v2144, %v2136
        %v2841 = vpack.c.b16 %v2145, %v2137
        %v2842 = vpack.c.b16 %v2154, %v2146
        %v2843 = vpack.c.b16 %v2155, %v2147
        %v2844 = vpack.c.b16 %v2156, %v2148
        %v2845 = vpack.c.b16 %v2157, %v2149
        %v2846 = vpack.c.b16 %v2158, %v2150
        %v2847 = vpack.c.b16 %v2159, %v2151
        %v2848 = vpack.c.b16 %v2160, %v2152
        %v2849 = vpack.c.b16 %v2161, %v2153
        %v2850 = vpack.c.b16 %v2170, %v2162
        %v2851 = vpack.c.b16 %v2171, %v2163
        %v2852 = vpack.c.b16 %v2172, %v2164
        %v2853 = vpack.c.b16 %v2173, %v2165
        %v2854 = vpack.c.b16 %v2174, %v2166
        %v2855 = vpack.c.b16 %v2175, %v2167
        %v2856 = vpack.c.b16 %v2176, %v2168
        %v2857 = vpack.c.b16 %v2177, %v2169
        %v2858 = vpack.c.b16 %v2186, %v2178
        %v2859 = vpack.c.b16 %v2187, %v2179
        %v2860 = vpack.c.b16 %v2188, %v2180
        %v2861 = vpack.c.b16 %v2189, %v2181
        %v2862 = vpack.c.b16 %v2190, %v2182
        %v2863 = vpack.c.b16 %v2191, %v2183
        %v2864 = vpack.c.b16 %v2192, %v2184
        %v2865 = vpack.c.b16 %v2193, %v2185
        %v2866 = vpack.c.b16 %v2202, %v2194
        %v2867 = vpack.c.b16 %v2203, %v2195
        %v2868 = vpack.c.b16 %v2204, %v2196
        %v2869 = vpack.c.b16 %v2205, %v2197
        %v2870 = vpack.c.b16 %v2206, %v2198
        %v2871 = vpack.c.b16 %v2207, %v2199
        %v2872 = vpack.c.b16 %v2208, %v2200
        %v2873 = vpack.c.b16 %v2209, %v2201
        %v2874 = vpack.c.b16 %v2218, %v2210
        %v2875 = vpack.c.b16 %v2219, %v2211
        %v2876 = vpack.c.b16 %v2220, %v2212
        %v2877 = vpack.c.b16 %v2221, %v2213
        %v2878 = vpack.c.b16 %v2222, %v2214
        %v2879 = vpack.c.b16 %v2223, %v2215
        %v2880 = vpack.c.b16 %v2224, %v2216
        %v2881 = vpack.c.b16 %v2225, %v2217
        %v2882 = vpack.c.b16 %v2234, %v2226
        %v2883 = vpack.c.b16 %v2235, %v2227
        %v2884 = vpack.c.b16 %v2236, %v2228
        %v2885 = vpack.c.b16 %v2237, %v2229
        %v2886 = vpack.c.b16 %v2238, %v2230
        %v2887 = vpack.c.b16 %v2239, %v2231
        %v2888 = vpack.c.b16 %v2240, %v2232
        %v2889 = vpack.c.b16 %v2241, %v2233
        %v2890 = vpack.c.b16 %v2250, %v2242
        %v2891 = vpack.c.b16 %v2251, %v2243
        %v2892 = vpack.c.b16 %v2252, %v2244
        %v2893 = vpack.c.b16 %v2253, %v2245
        %v2894 = vpack.c.b16 %v2254, %v2246
        %v2895 = vpack.c.b16 %v2255, %v2247
        %v2896 = vpack.c.b16 %v2256, %v2248
        %v2897 = vpack.c.b16 %v2257, %v2249
        %v2898 = vpack.c.b16 %v2266, %v2258
        %v2899 = vpack.c.b16 %v2267, %v2259
        %v2900 = vpack.c.b16 %v2268, %v2260
        %v2901 = vpack.c.b16 %v2269, %v2261
        %v2902 = vpack.c.b16 %v2270, %v2262
        %v2903 = vpack.c.b16 %v2271, %v2263
        %v2904 = vpack.c.b16 %v2272, %v2264
        %v2905 = vpack.c.b16 %v2273, %v2265
        %v2906 = vpack.c.b16 %v2282, %v2274
        %v2907 = vpack.c.b16 %v2283, %v2275
        %v2908 = vpack.c.b16 %v2284, %v2276
        %v2909 = vpack.c.b16 %v2285, %v2277
        %v2910 = vpack.c.b16 %v2286, %v2278
        %v2911 = vpack.c.b16 %v2287, %v2279
        %v2912 = vpack.c.b16 %v2288, %v2280
        %v2913 = vpack.c.b16 %v2289, %v2281
        %v2914 = vpack.c.b16 %v2298, %v2290
        %v2915 = vpack.c.b16 %v2299, %v2291
        %v2916 = vpack.c.b16 %v2300, %v2292
        %v2917 = vpack.c.b16 %v2301, %v2293
        %v2918 = vpack.c.b16 %v2302, %v2294
        %v2919 = vpack.c.b16 %v2303, %v2295
        %v2920 = vpack.c.b16 %v2304, %v2296
        %v2921 = vpack.c.b16 %v2305, %v2297
        %v2922 = vpack.c.b16 %v2314, %v2306
        %v2923 = vpack.c.b16 %v2315, %v2307
        %v2924 = vpack.c.b16 %v2316, %v2308
        %v2925 = vpack.c.b16 %v2317, %v2309
        %v2926 = vpack.c.b16 %v2318, %v2310
        %v2927 = vpack.c.b16 %v2319, %v2311
        %v2928 = vpack.c.b16 %v2320, %v2312
        %v2929 = vpack.c.b16 %v2321, %v2313
        %v2930 = vpack.c.b16 %v2330, %v2322
        %v2931 = vpack.c.b16 %v2331, %v2323
        %v2932 = vpack.c.b16 %v2332, %v2324
        %v2933 = vpack.c.b16 %v2333, %v2325
        %v2934 = vpack.c.b16 %v2334, %v2326
        %v2935 = vpack.c.b16 %v2335, %v2327
        %v2936 = vpack.c.b16 %v2336, %v2328
        %v2937 = vpack.c.b16 %v2337, %v2329
        %v2938 = vpack.c.b16 %v2346, %v2338
        %v2939 = vpack.c.b16 %v2347, %v2339
        %v2940 = vpack.c.b16 %v2348, %v2340
        %v2941 = vpack.c.b16 %v2349, %v2341
        %v2942 = vpack.c.b16 %v2350, %v2342
        %v2943 = vpack.c.b16 %v2351, %v2343
        %v2944 = vpack.c.b16 %v2352, %v2344
        %v2945 = vpack.c.b16 %v2353, %v2345
        %v2946 = vpack.c.b16 %v2362, %v2354
        %v2947 = vpack.c.b16 %v2363, %v2355
        %v2948 = vpack.c.b16 %v2364, %v2356
        %v2949 = vpack.c.b16 %v2365, %v2357
        %v2950 = vpack.c.b16 %v2366, %v2358
        %v2951 = vpack.c.b16 %v2367, %v2359
        %v2952 = vpack.c.b16 %v2368, %v2360
        %v2953 = vpack.c.b16 %v2369, %v2361
        %v2954 = vpack.c.b16 %v2378, %v2370
        %v2955 = vpack.c.b16 %v2379, %v2371
        %v2956 = vpack.c.b16 %v2380, %v2372
        %v2957 = vpack.c.b16 %v2381, %v2373
        %v2958 = vpack.c.b16 %v2382, %v2374
        %v2959 = vpack.c.b16 %v2383, %v2375
        %v2960 = vpack.c.b16 %v2384, %v2376
        %v2961 = vpack.c.b16 %v2385, %v2377
        %v2962 = vpack.c.b16 %v2394, %v2386
        %v2963 = vpack.c.b16 %v2395, %v2387
        %v2964 = vpack.c.b16 %v2396, %v2388
        %v2965 = vpack.c.b16 %v2397, %v2389
        %v2966 = vpack.c.b16 %v2398, %v2390
        %v2967 = vpack.c.b16 %v2399, %v2391
        %v2968 = vpack.c.b16 %v2400, %v2392
        %v2969 = vpack.c.b16 %v2401, %v2393
        %v2970 = vpack.c.b16 %v2410, %v2402
        %v2971 = vpack.c.b16 %v2411, %v2403
        %v2972 = vpack.c.b16 %v2412, %v2404
        %v2973 = vpack.c.b16 %v2413, %v2405
        %v2974 = vpack.c.b16 %v2414, %v2406
        %v2975 = vpack.c.b16 %v2415, %v2407
        %v2976 = vpack.c.b16 %v2416, %v2408
        %v2977 = vpack.c.b16 %v2417, %v2409
        %v2978 = vpack.c.b16 %v2426, %v2418
        %v2979 = vpack.c.b16 %v2427, %v2419
        %v2980 = vpack.c.b16 %v2428, %v2420
        %v2981 = vpack.c.b16 %v2429, %v2421
        %v2982 = vpack.c.b16 %v2430, %v2422
        %v2983 = vpack.c.b16 %v2431, %v2423
        %v2984 = vpack.c.b16 %v2432, %v2424
        %v2985 = vpack.c.b16 %v2433, %v2425
        %v2986 = vpack.c.b16 %v2442, %v2434
        %v2987 = vpack.c.b16 %v2443, %v2435
        %v2988 = vpack.c.b16 %v2444, %v2436
        %v2989 = vpack.c.b16 %v2445, %v2437
        %v2990 = vpack.c.b16 %v2446, %v2438
        %v2991 = vpack.c.b16 %v2447, %v2439
        %v2992 = vpack.c.b16 %v2448, %v2440
        %v2993 = vpack.c.b16 %v2449, %v2441
        %v2994 = vpack.c.b16 %v2458, %v2450
        %v2995 = vpack.c.b16 %v2459, %v2451
        %v2996 = vpack.c.b16 %v2460, %v2452
        %v2997 = vpack.c.b16 %v2461, %v2453
        %v2998 = vpack.c.b16 %v2462, %v2454
        %v2999 = vpack.c.b16 %v2463, %v2455
        %v3000 = vpack.c.b16 %v2464, %v2456
        %v3001 = vpack.c.b16 %v2465, %v2457
        %v3002 = vpack.c.b16 %v2474, %v2466
        %v3003 = vpack.c.b16 %v2475, %v2467
        %v3004 = vpack.c.b16 %v2476, %v2468
        %v3005 = vpack.c.b16 %v2477, %v2469
        %v3006 = vpack.c.b16 %v2478, %v2470
        %v3007 = vpack.c.b16 %v2479, %v2471
        %v3008 = vpack.c.b16 %v2480, %v2472
        %v3009 = vpack.c.b16 %v2481, %v2473
        %v3010 = vpack.c.b16 %v2490, %v2482
        %v3011 = vpack.c.b16 %v2491, %v2483
        %v3012 = vpack.c.b16 %v2492, %v2484
        %v3013 = vpack.c.b16 %v2493, %v2485
        %v3014 = vpack.c.b16 %v2494, %v2486
        %v3015 = vpack.c.b16 %v2495, %v2487
        %v3016 = vpack.c.b16 %v2496, %v2488
        %v3017 = vpack.c.b16 %v2497, %v2489
        %v3018 = vpack.c.b16 %v2506, %v2498
        %v3019 = vpack.c.b16 %v2507, %v2499
        %v3020 = vpack.c.b16 %v2508, %v2500
        %v3021 = vpack.c.b16 %v2509, %v2501
        %v3022 = vpack.c.b16 %v2510, %v2502
        %v3023 = vpack.c.b16 %v2511, %v2503
        %v3024 = vpack.c.b16 %v2512, %v2504
        %v3025 = vpack.c.b16 %v2513, %v2505
        %3538 = vmatprep.subr.bf16.mxu0 %v2571
        %3539 = vmatpush1.bf16.msra.mxu0 %v2570
        %3540 = vmatprep.subr.bf16.mxu0 %v2563
        %3541 = vmatpush1.bf16.msra.mxu0 %v2562
        %3542 = vmatprep.subr.bf16.mxu0 %v2555
        %3543 = vmatpush1.bf16.msra.mxu0 %v2554
        %3544 = vmatprep.subr.bf16.mxu0 %v2547
        %3545 = vmatpush1.bf16.msra.mxu0 %v2546
        %3546 = vmatprep.subr.bf16.mxu0 %v2539
        %3547 = vmatpush1.bf16.msra.mxu0 %v2538
        %3548 = vmatprep.subr.bf16.mxu0 %v2531
        %3549 = vmatpush1.bf16.msra.mxu0 %v2530
        %3550 = vmatprep.subr.bf16.mxu0 %v2523
        %3551 = vmatpush1.bf16.msra.mxu0 %v2522
        %3552 = vmatprep.subr.bf16.mxu0 %v2515
        %3553 = vmatpush1.bf16.msra.mxu0 %v2514
        %3554 = vmatprep.subr.bf16.mxu0 %v2635
        %3555 = vmatpush2.bf16.msra.mxu0 %v2634
        %3556 = vmatprep.subr.bf16.mxu0 %v2627
        %3557 = vmatpush2.bf16.msra.mxu0 %v2626
        %3558 = vmatprep.subr.bf16.mxu0 %v2619
        %3559 = vmatpush2.bf16.msra.mxu0 %v2618
        %3560 = vmatprep.subr.bf16.mxu0 %v2611
        %3561 = vmatpush2.bf16.msra.mxu0 %v2610
        %3562 = vmatprep.subr.bf16.mxu0 %v2603
        %3563 = vmatpush2.bf16.msra.mxu0 %v2602
        %3564 = vmatprep.subr.bf16.mxu0 %v2595
        %3565 = vmatpush2.bf16.msra.mxu0 %v2594
        %3566 = vmatprep.subr.bf16.mxu0 %v2587
        %3567 = vmatpush2.bf16.msra.mxu0 %v2586
        %3568 = vmatprep.subr.bf16.mxu0 %v2579
        %3569 = vmatpush2.bf16.msra.mxu0 %v2578
        %3570 = vmatprep.mubr.bf16.mxu0 %v963
        %3571 = vmatmul.mubr.bf16.gmra.mxu0 %v962
        %v3572 = vpop.f32.mrf.mxu0
        %v3573 = vadd.f32 0.0, %v3572
        %v3574 = vpop.f32.mrf.mxu0
        %v3575 = vadd.f32 0.0, %v3574
        %v3576 = vpop.f32.mrf.mxu0
        %v3577 = vpop.f32.mrf.mxu0
        %3578 = vdwg.mxu0
        %3579 = vmatprep.subr.bf16.mxu0 %v2699
        %3580 = vmatpush1.bf16.msra.mxu0 %v2698
        %3581 = vmatprep.subr.bf16.mxu0 %v2691
        %3582 = vmatpush1.bf16.msra.mxu0 %v2690
        %3583 = vmatprep.subr.bf16.mxu0 %v2683
        %3584 = vmatpush1.bf16.msra.mxu0 %v2682
        %3585 = vmatprep.subr.bf16.mxu0 %v2675
        %3586 = vmatpush1.bf16.msra.mxu0 %v2674
        %3587 = vmatprep.subr.bf16.mxu0 %v2667
        %3588 = vmatpush1.bf16.msra.mxu0 %v2666
        %3589 = vmatprep.subr.bf16.mxu0 %v2659
        %3590 = vmatpush1.bf16.msra.mxu0 %v2658
        %3591 = vmatprep.subr.bf16.mxu0 %v2651
        %3592 = vmatpush1.bf16.msra.mxu0 %v2650
        %3593 = vmatprep.subr.bf16.mxu0 %v2643
        %3594 = vmatpush1.bf16.msra.mxu0 %v2642
        %3595 = vmatprep.subr.bf16.mxu0 %v2763
        %3596 = vmatpush2.bf16.msra.mxu0 %v2762
        %3597 = vmatprep.subr.bf16.mxu0 %v2755
        %3598 = vmatpush2.bf16.msra.mxu0 %v2754
        %3599 = vmatprep.subr.bf16.mxu0 %v2747
        %3600 = vmatpush2.bf16.msra.mxu0 %v2746
        %3601 = vmatprep.subr.bf16.mxu0 %v2739
        %3602 = vmatpush2.bf16.msra.mxu0 %v2738
        %3603 = vmatprep.subr.bf16.mxu0 %v2731
        %3604 = vmatpush2.bf16.msra.mxu0 %v2730
        %3605 = vmatprep.subr.bf16.mxu0 %v2723
        %3606 = vmatpush2.bf16.msra.mxu0 %v2722
        %3607 = vmatprep.subr.bf16.mxu0 %v2715
        %3608 = vmatpush2.bf16.msra.mxu0 %v2714
        %3609 = vmatprep.subr.bf16.mxu0 %v2707
        %3610 = vmatpush2.bf16.msra.mxu0 %v2706
        %3611 = vmatprep.mubr.bf16.mxu0 %v965
        %3612 = vmatmul.mubr.bf16.gmra.mxu0 %v964
        %v3613 = vpop.f32.mrf.mxu0
        %v3614 = vadd.f32 %v3573, %v3613
        %v3615 = vpop.f32.mrf.mxu0
        %v3616 = vadd.f32 %v3575, %v3615
        %v3617 = vpop.f32.mrf.mxu0
        %v3618 = vpop.f32.mrf.mxu0
        %3619 = vdwg.mxu0
        %3620 = vmatprep.subr.bf16.mxu0 %v2827
        %3621 = vmatpush1.bf16.msra.mxu0 %v2826
        %3622 = vmatprep.subr.bf16.mxu0 %v2819
        %3623 = vmatpush1.bf16.msra.mxu0 %v2818
        %3624 = vmatprep.subr.bf16.mxu0 %v2811
        %3625 = vmatpush1.bf16.msra.mxu0 %v2810
        %3626 = vmatprep.subr.bf16.mxu0 %v2803
        %3627 = vmatpush1.bf16.msra.mxu0 %v2802
        %3628 = vmatprep.subr.bf16.mxu0 %v2795
        %3629 = vmatpush1.bf16.msra.mxu0 %v2794
        %3630 = vmatprep.subr.bf16.mxu0 %v2787
        %3631 = vmatpush1.bf16.msra.mxu0 %v2786
        %3632 = vmatprep.subr.bf16.mxu0 %v2779
        %3633 = vmatpush1.bf16.msra.mxu0 %v2778
        %3634 = vmatprep.subr.bf16.mxu0 %v2771
        %3635 = vmatpush1.bf16.msra.mxu0 %v2770
        %3636 = vmatprep.subr.bf16.mxu0 %v2891
        %3637 = vmatpush2.bf16.msra.mxu0 %v2890
        %3638 = vmatprep.subr.bf16.mxu0 %v2883
        %3639 = vmatpush2.bf16.msra.mxu0 %v2882
        %3640 = vmatprep.subr.bf16.mxu0 %v2875
        %3641 = vmatpush2.bf16.msra.mxu0 %v2874
        %3642 = vmatprep.subr.bf16.mxu0 %v2867
        %3643 = vmatpush2.bf16.msra.mxu0 %v2866
        %3644 = vmatprep.subr.bf16.mxu0 %v2859
        %3645 = vmatpush2.bf16.msra.mxu0 %v2858
        %3646 = vmatprep.subr.bf16.mxu0 %v2851
        %3647 = vmatpush2.bf16.msra.mxu0 %v2850
        %3648 = vmatprep.subr.bf16.mxu0 %v2843
        %3649 = vmatpush2.bf16.msra.mxu0 %v2842
        %3650 = vmatprep.subr.bf16.mxu0 %v2835
        %3651 = vmatpush2.bf16.msra.mxu0 %v2834
        %3652 = vmatprep.mubr.bf16.mxu0 %v967
        %3653 = vmatmul.mubr.bf16.gmra.mxu0 %v966
        %v3654 = vpop.f32.mrf.mxu0
        %v3655 = vadd.f32 %v3614, %v3654
        %v3656 = vpop.f32.mrf.mxu0
        %v3657 = vadd.f32 %v3616, %v3656
        %v3658 = vpop.f32.mrf.mxu0
        %v3659 = vpop.f32.mrf.mxu0
        %3660 = vdwg.mxu0
        %3661 = vmatprep.subr.bf16.mxu0 %v2955
        %3662 = vmatpush1.bf16.msra.mxu0 %v2954
        %3663 = vmatprep.subr.bf16.mxu0 %v2947
        %3664 = vmatpush1.bf16.msra.mxu0 %v2946
        %3665 = vmatprep.subr.bf16.mxu0 %v2939
        %3666 = vmatpush1.bf16.msra.mxu0 %v2938
        %3667 = vmatprep.subr.bf16.mxu0 %v2931
        %3668 = vmatpush1.bf16.msra.mxu0 %v2930
        %3669 = vmatprep.subr.bf16.mxu0 %v2923
        %3670 = vmatpush1.bf16.msra.mxu0 %v2922
        %3671 = vmatprep.subr.bf16.mxu0 %v2915
        %3672 = vmatpush1.bf16.msra.mxu0 %v2914
        %3673 = vmatprep.subr.bf16.mxu0 %v2907
        %3674 = vmatpush1.bf16.msra.mxu0 %v2906
        %3675 = vmatprep.subr.bf16.mxu0 %v2899
        %3676 = vmatpush1.bf16.msra.mxu0 %v2898
        %3677 = vmatprep.subr.bf16.mxu0 %v3019
        %3678 = vmatpush2.bf16.msra.mxu0 %v3018
        %3679 = vmatprep.subr.bf16.mxu0 %v3011
        %3680 = vmatpush2.bf16.msra.mxu0 %v3010
        %3681 = vmatprep.subr.bf16.mxu0 %v3003
        %3682 = vmatpush2.bf16.msra.mxu0 %v3002
        %3683 = vmatprep.subr.bf16.mxu0 %v2995
        %3684 = vmatpush2.bf16.msra.mxu0 %v2994
        %3685 = vmatprep.subr.bf16.mxu0 %v2987
        %3686 = vmatpush2.bf16.msra.mxu0 %v2986
        %3687 = vmatprep.subr.bf16.mxu0 %v2979
        %3688 = vmatpush2.bf16.msra.mxu0 %v2978
        %3689 = vmatprep.subr.bf16.mxu0 %v2971
        %3690 = vmatpush2.bf16.msra.mxu0 %v2970
        %3691 = vmatprep.subr.bf16.mxu0 %v2963
        %3692 = vmatpush2.bf16.msra.mxu0 %v2962
        %3693 = vmatprep.mubr.bf16.mxu0 %v969
        %3694 = vmatmul.mubr.bf16.gmra.mxu0 %v968
        %v3695 = vpop.f32.mrf.mxu0
        %v3696 = vadd.f32 %v3655, %v3695
        %v3697 = vpop.f32.mrf.mxu0
        %v3698 = vadd.f32 %v3657, %v3697
        %v3699 = vpop.f32.mrf.mxu0
        %v3700 = vpop.f32.mrf.mxu0
        %3701 = vdwg.mxu0
        %3702 = vmatprep.subr.bf16.mxu0 %v2573
        %3703 = vmatpush1.bf16.msra.mxu0 %v2572
        %3704 = vmatprep.subr.bf16.mxu0 %v2565
        %3705 = vmatpush1.bf16.msra.mxu0 %v2564
        %3706 = vmatprep.subr.bf16.mxu0 %v2557
        %3707 = vmatpush1.bf16.msra.mxu0 %v2556
        %3708 = vmatprep.subr.bf16.mxu0 %v2549
        %3709 = vmatpush1.bf16.msra.mxu0 %v2548
        %3710 = vmatprep.subr.bf16.mxu0 %v2541
        %3711 = vmatpush1.bf16.msra.mxu0 %v2540
        %3712 = vmatprep.subr.bf16.mxu0 %v2533
        %3713 = vmatpush1.bf16.msra.mxu0 %v2532
        %3714 = vmatprep.subr.bf16.mxu0 %v2525
        %3715 = vmatpush1.bf16.msra.mxu0 %v2524
        %3716 = vmatprep.subr.bf16.mxu0 %v2517
        %3717 = vmatpush1.bf16.msra.mxu0 %v2516
        %3718 = vmatprep.subr.bf16.mxu0 %v2637
        %3719 = vmatpush2.bf16.msra.mxu0 %v2636
        %3720 = vmatprep.subr.bf16.mxu0 %v2629
        %3721 = vmatpush2.bf16.msra.mxu0 %v2628
        %3722 = vmatprep.subr.bf16.mxu0 %v2621
        %3723 = vmatpush2.bf16.msra.mxu0 %v2620
        %3724 = vmatprep.subr.bf16.mxu0 %v2613
        %3725 = vmatpush2.bf16.msra.mxu0 %v2612
        %3726 = vmatprep.subr.bf16.mxu0 %v2605
        %3727 = vmatpush2.bf16.msra.mxu0 %v2604
        %3728 = vmatprep.subr.bf16.mxu0 %v2597
        %3729 = vmatpush2.bf16.msra.mxu0 %v2596
        %3730 = vmatprep.subr.bf16.mxu0 %v2589
        %3731 = vmatpush2.bf16.msra.mxu0 %v2588
        %3732 = vmatprep.subr.bf16.mxu0 %v2581
        %3733 = vmatpush2.bf16.msra.mxu0 %v2580
        %3734 = vmatprep.mubr.bf16.mxu0 %v963
        %3735 = vmatmul.mubr.bf16.gmra.mxu0 %v962
        %v3736 = vpop.f32.mrf.mxu0
        %v3737 = vadd.f32 0.0, %v3736
        %v3738 = vpop.f32.mrf.mxu0
        %v3739 = vadd.f32 0.0, %v3738
        %v3740 = vpop.f32.mrf.mxu0
        %v3741 = vpop.f32.mrf.mxu0
        %3742 = vdwg.mxu0
        %3743 = vmatprep.subr.bf16.mxu0 %v2701
        %3744 = vmatpush1.bf16.msra.mxu0 %v2700
        %3745 = vmatprep.subr.bf16.mxu0 %v2693
        %3746 = vmatpush1.bf16.msra.mxu0 %v2692
        %3747 = vmatprep.subr.bf16.mxu0 %v2685
        %3748 = vmatpush1.bf16.msra.mxu0 %v2684
        %3749 = vmatprep.subr.bf16.mxu0 %v2677
        %3750 = vmatpush1.bf16.msra.mxu0 %v2676
        %3751 = vmatprep.subr.bf16.mxu0 %v2669
        %3752 = vmatpush1.bf16.msra.mxu0 %v2668
        %3753 = vmatprep.subr.bf16.mxu0 %v2661
        %3754 = vmatpush1.bf16.msra.mxu0 %v2660
        %3755 = vmatprep.subr.bf16.mxu0 %v2653
        %3756 = vmatpush1.bf16.msra.mxu0 %v2652
        %3757 = vmatprep.subr.bf16.mxu0 %v2645
        %3758 = vmatpush1.bf16.msra.mxu0 %v2644
        %3759 = vmatprep.subr.bf16.mxu0 %v2765
        %3760 = vmatpush2.bf16.msra.mxu0 %v2764
        %3761 = vmatprep.subr.bf16.mxu0 %v2757
        %3762 = vmatpush2.bf16.msra.mxu0 %v2756
        %3763 = vmatprep.subr.bf16.mxu0 %v2749
        %3764 = vmatpush2.bf16.msra.mxu0 %v2748
        %3765 = vmatprep.subr.bf16.mxu0 %v2741
        %3766 = vmatpush2.bf16.msra.mxu0 %v2740
        %3767 = vmatprep.subr.bf16.mxu0 %v2733
        %3768 = vmatpush2.bf16.msra.mxu0 %v2732
        %3769 = vmatprep.subr.bf16.mxu0 %v2725
        %3770 = vmatpush2.bf16.msra.mxu0 %v2724
        %3771 = vmatprep.subr.bf16.mxu0 %v2717
        %3772 = vmatpush2.bf16.msra.mxu0 %v2716
        %3773 = vmatprep.subr.bf16.mxu0 %v2709
        %3774 = vmatpush2.bf16.msra.mxu0 %v2708
        %3775 = vmatprep.mubr.bf16.mxu0 %v965
        %3776 = vmatmul.mubr.bf16.gmra.mxu0 %v964
        %v3777 = vpop.f32.mrf.mxu0
        %v3778 = vadd.f32 %v3737, %v3777
        %v3779 = vpop.f32.mrf.mxu0
        %v3780 = vadd.f32 %v3739, %v3779
        %v3781 = vpop.f32.mrf.mxu0
        %v3782 = vpop.f32.mrf.mxu0
        %3783 = vdwg.mxu0
        %3784 = vmatprep.subr.bf16.mxu0 %v2829
        %3785 = vmatpush1.bf16.msra.mxu0 %v2828
        %3786 = vmatprep.subr.bf16.mxu0 %v2821
        %3787 = vmatpush1.bf16.msra.mxu0 %v2820
        %3788 = vmatprep.subr.bf16.mxu0 %v2813
        %3789 = vmatpush1.bf16.msra.mxu0 %v2812
        %3790 = vmatprep.subr.bf16.mxu0 %v2805
        %3791 = vmatpush1.bf16.msra.mxu0 %v2804
        %3792 = vmatprep.subr.bf16.mxu0 %v2797
        %3793 = vmatpush1.bf16.msra.mxu0 %v2796
        %3794 = vmatprep.subr.bf16.mxu0 %v2789
        %3795 = vmatpush1.bf16.msra.mxu0 %v2788
        %3796 = vmatprep.subr.bf16.mxu0 %v2781
        %3797 = vmatpush1.bf16.msra.mxu0 %v2780
        %3798 = vmatprep.subr.bf16.mxu0 %v2773
        %3799 = vmatpush1.bf16.msra.mxu0 %v2772
        %3800 = vmatprep.subr.bf16.mxu0 %v2893
        %3801 = vmatpush2.bf16.msra.mxu0 %v2892
        %3802 = vmatprep.subr.bf16.mxu0 %v2885
        %3803 = vmatpush2.bf16.msra.mxu0 %v2884
        %3804 = vmatprep.subr.bf16.mxu0 %v2877
        %3805 = vmatpush2.bf16.msra.mxu0 %v2876
        %3806 = vmatprep.subr.bf16.mxu0 %v2869
        %3807 = vmatpush2.bf16.msra.mxu0 %v2868
        %3808 = vmatprep.subr.bf16.mxu0 %v2861
        %3809 = vmatpush2.bf16.msra.mxu0 %v2860
        %3810 = vmatprep.subr.bf16.mxu0 %v2853
        %3811 = vmatpush2.bf16.msra.mxu0 %v2852
        %3812 = vmatprep.subr.bf16.mxu0 %v2845
        %3813 = vmatpush2.bf16.msra.mxu0 %v2844
        %3814 = vmatprep.subr.bf16.mxu0 %v2837
        %3815 = vmatpush2.bf16.msra.mxu0 %v2836
        %3816 = vmatprep.mubr.bf16.mxu0 %v967
        %3817 = vmatmul.mubr.bf16.gmra.mxu0 %v966
        %v3818 = vpop.f32.mrf.mxu0
        %v3819 = vadd.f32 %v3778, %v3818
        %v3820 = vpop.f32.mrf.mxu0
        %v3821 = vadd.f32 %v3780, %v3820
        %v3822 = vpop.f32.mrf.mxu0
        %v3823 = vpop.f32.mrf.mxu0
        %3824 = vdwg.mxu0
        %3825 = vmatprep.subr.bf16.mxu0 %v2957
        %3826 = vmatpush1.bf16.msra.mxu0 %v2956
        %3827 = vmatprep.subr.bf16.mxu0 %v2949
        %3828 = vmatpush1.bf16.msra.mxu0 %v2948
        %3829 = vmatprep.subr.bf16.mxu0 %v2941
        %3830 = vmatpush1.bf16.msra.mxu0 %v2940
        %3831 = vmatprep.subr.bf16.mxu0 %v2933
        %3832 = vmatpush1.bf16.msra.mxu0 %v2932
        %3833 = vmatprep.subr.bf16.mxu0 %v2925
        %3834 = vmatpush1.bf16.msra.mxu0 %v2924
        %3835 = vmatprep.subr.bf16.mxu0 %v2917
        %3836 = vmatpush1.bf16.msra.mxu0 %v2916
        %3837 = vmatprep.subr.bf16.mxu0 %v2909
        %3838 = vmatpush1.bf16.msra.mxu0 %v2908
        %3839 = vmatprep.subr.bf16.mxu0 %v2901
        %3840 = vmatpush1.bf16.msra.mxu0 %v2900
        %3841 = vmatprep.subr.bf16.mxu0 %v3021
        %3842 = vmatpush2.bf16.msra.mxu0 %v3020
        %3843 = vmatprep.subr.bf16.mxu0 %v3013
        %3844 = vmatpush2.bf16.msra.mxu0 %v3012
        %3845 = vmatprep.subr.bf16.mxu0 %v3005
        %3846 = vmatpush2.bf16.msra.mxu0 %v3004
        %3847 = vmatprep.subr.bf16.mxu0 %v2997
        %3848 = vmatpush2.bf16.msra.mxu0 %v2996
        %3849 = vmatprep.subr.bf16.mxu0 %v2989
        %3850 = vmatpush2.bf16.msra.mxu0 %v2988
        %3851 = vmatprep.subr.bf16.mxu0 %v2981
        %3852 = vmatpush2.bf16.msra.mxu0 %v2980
        %3853 = vmatprep.subr.bf16.mxu0 %v2973
        %3854 = vmatpush2.bf16.msra.mxu0 %v2972
        %3855 = vmatprep.subr.bf16.mxu0 %v2965
        %3856 = vmatpush2.bf16.msra.mxu0 %v2964
        %3857 = vmatprep.mubr.bf16.mxu0 %v969
        %3858 = vmatmul.mubr.bf16.gmra.mxu0 %v968
        %v3859 = vpop.f32.mrf.mxu0
        %v3860 = vadd.f32 %v3819, %v3859
        %v3861 = vpop.f32.mrf.mxu0
        %v3862 = vadd.f32 %v3821, %v3861
        %v3863 = vpop.f32.mrf.mxu0
        %v3864 = vpop.f32.mrf.mxu0
        %3865 = vdwg.mxu0
        %3866 = vmatprep.subr.bf16.mxu0 %v2575
        %3867 = vmatpush1.bf16.msra.mxu0 %v2574
        %3868 = vmatprep.subr.bf16.mxu0 %v2567
        %3869 = vmatpush1.bf16.msra.mxu0 %v2566
        %3870 = vmatprep.subr.bf16.mxu0 %v2559
        %3871 = vmatpush1.bf16.msra.mxu0 %v2558
        %3872 = vmatprep.subr.bf16.mxu0 %v2551
        %3873 = vmatpush1.bf16.msra.mxu0 %v2550
        %3874 = vmatprep.subr.bf16.mxu0 %v2543
        %3875 = vmatpush1.bf16.msra.mxu0 %v2542
        %3876 = vmatprep.subr.bf16.mxu0 %v2535
        %3877 = vmatpush1.bf16.msra.mxu0 %v2534
        %3878 = vmatprep.subr.bf16.mxu0 %v2527
        %3879 = vmatpush1.bf16.msra.mxu0 %v2526
        %3880 = vmatprep.subr.bf16.mxu0 %v2519
        %3881 = vmatpush1.bf16.msra.mxu0 %v2518
        %3882 = vmatprep.subr.bf16.mxu0 %v2639
        %3883 = vmatpush2.bf16.msra.mxu0 %v2638
        %3884 = vmatprep.subr.bf16.mxu0 %v2631
        %3885 = vmatpush2.bf16.msra.mxu0 %v2630
        %3886 = vmatprep.subr.bf16.mxu0 %v2623
        %3887 = vmatpush2.bf16.msra.mxu0 %v2622
        %3888 = vmatprep.subr.bf16.mxu0 %v2615
        %3889 = vmatpush2.bf16.msra.mxu0 %v2614
        %3890 = vmatprep.subr.bf16.mxu0 %v2607
        %3891 = vmatpush2.bf16.msra.mxu0 %v2606
        %3892 = vmatprep.subr.bf16.mxu0 %v2599
        %3893 = vmatpush2.bf16.msra.mxu0 %v2598
        %3894 = vmatprep.subr.bf16.mxu0 %v2591
        %3895 = vmatpush2.bf16.msra.mxu0 %v2590
        %3896 = vmatprep.subr.bf16.mxu0 %v2583
        %3897 = vmatpush2.bf16.msra.mxu0 %v2582
        %3898 = vmatprep.mubr.bf16.mxu0 %v963
        %3899 = vmatmul.mubr.bf16.gmra.mxu0 %v962
        %v3900 = vpop.f32.mrf.mxu0
        %v3901 = vadd.f32 0.0, %v3900
        %v3902 = vpop.f32.mrf.mxu0
        %v3903 = vadd.f32 0.0, %v3902
        %v3904 = vpop.f32.mrf.mxu0
        %v3905 = vpop.f32.mrf.mxu0
        %3906 = vdwg.mxu0
        %3907 = vmatprep.subr.bf16.mxu0 %v2703
        %3908 = vmatpush1.bf16.msra.mxu0 %v2702
        %3909 = vmatprep.subr.bf16.mxu0 %v2695
        %3910 = vmatpush1.bf16.msra.mxu0 %v2694
        %3911 = vmatprep.subr.bf16.mxu0 %v2687
        %3912 = vmatpush1.bf16.msra.mxu0 %v2686
        %3913 = vmatprep.subr.bf16.mxu0 %v2679
        %3914 = vmatpush1.bf16.msra.mxu0 %v2678
        %3915 = vmatprep.subr.bf16.mxu0 %v2671
        %3916 = vmatpush1.bf16.msra.mxu0 %v2670
        %3917 = vmatprep.subr.bf16.mxu0 %v2663
        %3918 = vmatpush1.bf16.msra.mxu0 %v2662
        %3919 = vmatprep.subr.bf16.mxu0 %v2655
        %3920 = vmatpush1.bf16.msra.mxu0 %v2654
        %3921 = vmatprep.subr.bf16.mxu0 %v2647
        %3922 = vmatpush1.bf16.msra.mxu0 %v2646
        %3923 = vmatprep.subr.bf16.mxu0 %v2767
        %3924 = vmatpush2.bf16.msra.mxu0 %v2766
        %3925 = vmatprep.subr.bf16.mxu0 %v2759
        %3926 = vmatpush2.bf16.msra.mxu0 %v2758
        %3927 = vmatprep.subr.bf16.mxu0 %v2751
        %3928 = vmatpush2.bf16.msra.mxu0 %v2750
        %3929 = vmatprep.subr.bf16.mxu0 %v2743
        %3930 = vmatpush2.bf16.msra.mxu0 %v2742
        %3931 = vmatprep.subr.bf16.mxu0 %v2735
        %3932 = vmatpush2.bf16.msra.mxu0 %v2734
        %3933 = vmatprep.subr.bf16.mxu0 %v2727
        %3934 = vmatpush2.bf16.msra.mxu0 %v2726
        %3935 = vmatprep.subr.bf16.mxu0 %v2719
        %3936 = vmatpush2.bf16.msra.mxu0 %v2718
        %3937 = vmatprep.subr.bf16.mxu0 %v2711
        %3938 = vmatpush2.bf16.msra.mxu0 %v2710
        %3939 = vmatprep.mubr.bf16.mxu0 %v965
        %3940 = vmatmul.mubr.bf16.gmra.mxu0 %v964
        %v3941 = vpop.f32.mrf.mxu0
        %v3942 = vadd.f32 %v3901, %v3941
        %v3943 = vpop.f32.mrf.mxu0
        %v3944 = vadd.f32 %v3903, %v3943
        %v3945 = vpop.f32.mrf.mxu0
        %v3946 = vpop.f32.mrf.mxu0
        %3947 = vdwg.mxu0
        %3948 = vmatprep.subr.bf16.mxu0 %v2831
        %3949 = vmatpush1.bf16.msra.mxu0 %v2830
        %3950 = vmatprep.subr.bf16.mxu0 %v2823
        %3951 = vmatpush1.bf16.msra.mxu0 %v2822
        %3952 = vmatprep.subr.bf16.mxu0 %v2815
        %3953 = vmatpush1.bf16.msra.mxu0 %v2814
        %3954 = vmatprep.subr.bf16.mxu0 %v2807
        %3955 = vmatpush1.bf16.msra.mxu0 %v2806
        %3956 = vmatprep.subr.bf16.mxu0 %v2799
        %3957 = vmatpush1.bf16.msra.mxu0 %v2798
        %3958 = vmatprep.subr.bf16.mxu0 %v2791
        %3959 = vmatpush1.bf16.msra.mxu0 %v2790
        %3960 = vmatprep.subr.bf16.mxu0 %v2783
        %3961 = vmatpush1.bf16.msra.mxu0 %v2782
        %3962 = vmatprep.subr.bf16.mxu0 %v2775
        %3963 = vmatpush1.bf16.msra.mxu0 %v2774
        %3964 = vmatprep.subr.bf16.mxu0 %v2895
        %3965 = vmatpush2.bf16.msra.mxu0 %v2894
        %3966 = vmatprep.subr.bf16.mxu0 %v2887
        %3967 = vmatpush2.bf16.msra.mxu0 %v2886
        %3968 = vmatprep.subr.bf16.mxu0 %v2879
        %3969 = vmatpush2.bf16.msra.mxu0 %v2878
        %3970 = vmatprep.subr.bf16.mxu0 %v2871
        %3971 = vmatpush2.bf16.msra.mxu0 %v2870
        %3972 = vmatprep.subr.bf16.mxu0 %v2863
        %3973 = vmatpush2.bf16.msra.mxu0 %v2862
        %3974 = vmatprep.subr.bf16.mxu0 %v2855
        %3975 = vmatpush2.bf16.msra.mxu0 %v2854
        %3976 = vmatprep.subr.bf16.mxu0 %v2847
        %3977 = vmatpush2.bf16.msra.mxu0 %v2846
        %3978 = vmatprep.subr.bf16.mxu0 %v2839
        %3979 = vmatpush2.bf16.msra.mxu0 %v2838
        %3980 = vmatprep.mubr.bf16.mxu0 %v967
        %3981 = vmatmul.mubr.bf16.gmra.mxu0 %v966
        %v3982 = vpop.f32.mrf.mxu0
        %v3983 = vadd.f32 %v3942, %v3982
        %v3984 = vpop.f32.mrf.mxu0
        %v3985 = vadd.f32 %v3944, %v3984
        %v3986 = vpop.f32.mrf.mxu0
        %v3987 = vpop.f32.mrf.mxu0
        %3988 = vdwg.mxu0
        %3989 = vmatprep.subr.bf16.mxu0 %v2959
        %3990 = vmatpush1.bf16.msra.mxu0 %v2958
        %3991 = vmatprep.subr.bf16.mxu0 %v2951
        %3992 = vmatpush1.bf16.msra.mxu0 %v2950
        %3993 = vmatprep.subr.bf16.mxu0 %v2943
        %3994 = vmatpush1.bf16.msra.mxu0 %v2942
        %3995 = vmatprep.subr.bf16.mxu0 %v2935
        %3996 = vmatpush1.bf16.msra.mxu0 %v2934
        %3997 = vmatprep.subr.bf16.mxu0 %v2927
        %3998 = vmatpush1.bf16.msra.mxu0 %v2926
        %3999 = vmatprep.subr.bf16.mxu0 %v2919
        %4000 = vmatpush1.bf16.msra.mxu0 %v2918
        %4001 = vmatprep.subr.bf16.mxu0 %v2911
        %4002 = vmatpush1.bf16.msra.mxu0 %v2910
        %4003 = vmatprep.subr.bf16.mxu0 %v2903
        %4004 = vmatpush1.bf16.msra.mxu0 %v2902
        %4005 = vmatprep.subr.bf16.mxu0 %v3023
        %4006 = vmatpush2.bf16.msra.mxu0 %v3022
        %4007 = vmatprep.subr.bf16.mxu0 %v3015
        %4008 = vmatpush2.bf16.msra.mxu0 %v3014
        %4009 = vmatprep.subr.bf16.mxu0 %v3007
        %4010 = vmatpush2.bf16.msra.mxu0 %v3006
        %4011 = vmatprep.subr.bf16.mxu0 %v2999
        %4012 = vmatpush2.bf16.msra.mxu0 %v2998
        %4013 = vmatprep.subr.bf16.mxu0 %v2991
        %4014 = vmatpush2.bf16.msra.mxu0 %v2990
        %4015 = vmatprep.subr.bf16.mxu0 %v2983
        %4016 = vmatpush2.bf16.msra.mxu0 %v2982
        %4017 = vmatprep.subr.bf16.mxu0 %v2975
        %4018 = vmatpush2.bf16.msra.mxu0 %v2974
        %4019 = vmatprep.subr.bf16.mxu0 %v2967
        %4020 = vmatpush2.bf16.msra.mxu0 %v2966
        %4021 = vmatprep.mubr.bf16.mxu0 %v969
        %4022 = vmatmul.mubr.bf16.gmra.mxu0 %v968
        %v4023 = vpop.f32.mrf.mxu0
        %v4024 = vadd.f32 %v3983, %v4023
        %v4025 = vpop.f32.mrf.mxu0
        %v4026 = vadd.f32 %v3985, %v4025
        %v4027 = vpop.f32.mrf.mxu0
        %v4028 = vpop.f32.mrf.mxu0
        %4029 = vdwg.mxu0
        %4030 = vmatprep.subr.bf16.mxu0 %v2577
        %4031 = vmatpush1.bf16.msra.mxu0 %v2576
        %4032 = vmatprep.subr.bf16.mxu0 %v2569
        %4033 = vmatpush1.bf16.msra.mxu0 %v2568
        %4034 = vmatprep.subr.bf16.mxu0 %v2561
        %4035 = vmatpush1.bf16.msra.mxu0 %v2560
        %4036 = vmatprep.subr.bf16.mxu0 %v2553
        %4037 = vmatpush1.bf16.msra.mxu0 %v2552
        %4038 = vmatprep.subr.bf16.mxu0 %v2545
        %4039 = vmatpush1.bf16.msra.mxu0 %v2544
        %4040 = vmatprep.subr.bf16.mxu0 %v2537
        %4041 = vmatpush1.bf16.msra.mxu0 %v2536
        %4042 = vmatprep.subr.bf16.mxu0 %v2529
        %4043 = vmatpush1.bf16.msra.mxu0 %v2528
        %4044 = vmatprep.subr.bf16.mxu0 %v2521
        %4045 = vmatpush1.bf16.msra.mxu0 %v2520
        %4046 = vmatprep.subr.bf16.mxu0 %v2641
        %4047 = vmatpush2.bf16.msra.mxu0 %v2640
        %4048 = vmatprep.subr.bf16.mxu0 %v2633
        %4049 = vmatpush2.bf16.msra.mxu0 %v2632
        %4050 = vmatprep.subr.bf16.mxu0 %v2625
        %4051 = vmatpush2.bf16.msra.mxu0 %v2624
        %4052 = vmatprep.subr.bf16.mxu0 %v2617
        %4053 = vmatpush2.bf16.msra.mxu0 %v2616
        %4054 = vmatprep.subr.bf16.mxu0 %v2609
        %4055 = vmatpush2.bf16.msra.mxu0 %v2608
        %4056 = vmatprep.subr.bf16.mxu0 %v2601
        %4057 = vmatpush2.bf16.msra.mxu0 %v2600
        %4058 = vmatprep.subr.bf16.mxu0 %v2593
        %4059 = vmatpush2.bf16.msra.mxu0 %v2592
        %4060 = vmatprep.subr.bf16.mxu0 %v2585
        %4061 = vmatpush2.bf16.msra.mxu0 %v2584
        %4062 = vmatprep.mubr.bf16.mxu0 %v963
        %4063 = vmatmul.mubr.bf16.gmra.mxu0 %v962
        %v4064 = vpop.f32.mrf.mxu0
        %v4065 = vadd.f32 0.0, %v4064
        %v4066 = vpop.f32.mrf.mxu0
        %v4067 = vadd.f32 0.0, %v4066
        %v4068 = vpop.f32.mrf.mxu0
        %v4069 = vpop.f32.mrf.mxu0
        %4070 = vdwg.mxu0
        %4071 = vmatprep.subr.bf16.mxu0 %v2705
        %4072 = vmatpush1.bf16.msra.mxu0 %v2704
        %4073 = vmatprep.subr.bf16.mxu0 %v2697
        %4074 = vmatpush1.bf16.msra.mxu0 %v2696
        %4075 = vmatprep.subr.bf16.mxu0 %v2689
        %4076 = vmatpush1.bf16.msra.mxu0 %v2688
        %4077 = vmatprep.subr.bf16.mxu0 %v2681
        %4078 = vmatpush1.bf16.msra.mxu0 %v2680
        %4079 = vmatprep.subr.bf16.mxu0 %v2673
        %4080 = vmatpush1.bf16.msra.mxu0 %v2672
        %4081 = vmatprep.subr.bf16.mxu0 %v2665
        %4082 = vmatpush1.bf16.msra.mxu0 %v2664
        %4083 = vmatprep.subr.bf16.mxu0 %v2657
        %4084 = vmatpush1.bf16.msra.mxu0 %v2656
        %4085 = vmatprep.subr.bf16.mxu0 %v2649
        %4086 = vmatpush1.bf16.msra.mxu0 %v2648
        %4087 = vmatprep.subr.bf16.mxu0 %v2769
        %4088 = vmatpush2.bf16.msra.mxu0 %v2768
        %4089 = vmatprep.subr.bf16.mxu0 %v2761
        %4090 = vmatpush2.bf16.msra.mxu0 %v2760
        %4091 = vmatprep.subr.bf16.mxu0 %v2753
        %4092 = vmatpush2.bf16.msra.mxu0 %v2752
        %4093 = vmatprep.subr.bf16.mxu0 %v2745
        %4094 = vmatpush2.bf16.msra.mxu0 %v2744
        %4095 = vmatprep.subr.bf16.mxu0 %v2737
        %4096 = vmatpush2.bf16.msra.mxu0 %v2736
        %4097 = vmatprep.subr.bf16.mxu0 %v2729
        %4098 = vmatpush2.bf16.msra.mxu0 %v2728
        %4099 = vmatprep.subr.bf16.mxu0 %v2721
        %4100 = vmatpush2.bf16.msra.mxu0 %v2720
        %4101 = vmatprep.subr.bf16.mxu0 %v2713
        %4102 = vmatpush2.bf16.msra.mxu0 %v2712
        %4103 = vmatprep.mubr.bf16.mxu0 %v965
        %4104 = vmatmul.mubr.bf16.gmra.mxu0 %v964
        %v4105 = vpop.f32.mrf.mxu0
        %v4106 = vadd.f32 %v4065, %v4105
        %v4107 = vpop.f32.mrf.mxu0
        %v4108 = vadd.f32 %v4067, %v4107
        %v4109 = vpop.f32.mrf.mxu0
        %v4110 = vpop.f32.mrf.mxu0
        %4111 = vdwg.mxu0
        %4112 = vmatprep.subr.bf16.mxu0 %v2833
        %4113 = vmatpush1.bf16.msra.mxu0 %v2832
        %4114 = vmatprep.subr.bf16.mxu0 %v2825
        %4115 = vmatpush1.bf16.msra.mxu0 %v2824
        %4116 = vmatprep.subr.bf16.mxu0 %v2817
        %4117 = vmatpush1.bf16.msra.mxu0 %v2816
        %4118 = vmatprep.subr.bf16.mxu0 %v2809
        %4119 = vmatpush1.bf16.msra.mxu0 %v2808
        %4120 = vmatprep.subr.bf16.mxu0 %v2801
        %4121 = vmatpush1.bf16.msra.mxu0 %v2800
        %4122 = vmatprep.subr.bf16.mxu0 %v2793
        %4123 = vmatpush1.bf16.msra.mxu0 %v2792
        %4124 = vmatprep.subr.bf16.mxu0 %v2785
        %4125 = vmatpush1.bf16.msra.mxu0 %v2784
        %4126 = vmatprep.subr.bf16.mxu0 %v2777
        %4127 = vmatpush1.bf16.msra.mxu0 %v2776
        %4128 = vmatprep.subr.bf16.mxu0 %v2897
        %4129 = vmatpush2.bf16.msra.mxu0 %v2896
        %4130 = vmatprep.subr.bf16.mxu0 %v2889
        %4131 = vmatpush2.bf16.msra.mxu0 %v2888
        %4132 = vmatprep.subr.bf16.mxu0 %v2881
        %4133 = vmatpush2.bf16.msra.mxu0 %v2880
        %4134 = vmatprep.subr.bf16.mxu0 %v2873
        %4135 = vmatpush2.bf16.msra.mxu0 %v2872
        %4136 = vmatprep.subr.bf16.mxu0 %v2865
        %4137 = vmatpush2.bf16.msra.mxu0 %v2864
        %4138 = vmatprep.subr.bf16.mxu0 %v2857
        %4139 = vmatpush2.bf16.msra.mxu0 %v2856
        %4140 = vmatprep.subr.bf16.mxu0 %v2849
        %4141 = vmatpush2.bf16.msra.mxu0 %v2848
        %4142 = vmatprep.subr.bf16.mxu0 %v2841
        %4143 = vmatpush2.bf16.msra.mxu0 %v2840
        %4144 = vmatprep.mubr.bf16.mxu0 %v967
        %4145 = vmatmul.mubr.bf16.gmra.mxu0 %v966
        %v4146 = vpop.f32.mrf.mxu0
        %v4147 = vadd.f32 %v4106, %v4146
        %v4148 = vpop.f32.mrf.mxu0
        %v4149 = vadd.f32 %v4108, %v4148
        %v4150 = vpop.f32.mrf.mxu0
        %v4151 = vpop.f32.mrf.mxu0
        %4152 = vdwg.mxu0
        %4153 = vmatprep.subr.bf16.mxu0 %v2961
        %4154 = vmatpush1.bf16.msra.mxu0 %v2960
        %4155 = vmatprep.subr.bf16.mxu0 %v2953
        %4156 = vmatpush1.bf16.msra.mxu0 %v2952
        %4157 = vmatprep.subr.bf16.mxu0 %v2945
        %4158 = vmatpush1.bf16.msra.mxu0 %v2944
        %4159 = vmatprep.subr.bf16.mxu0 %v2937
        %4160 = vmatpush1.bf16.msra.mxu0 %v2936
        %4161 = vmatprep.subr.bf16.mxu0 %v2929
        %4162 = vmatpush1.bf16.msra.mxu0 %v2928
        %4163 = vmatprep.subr.bf16.mxu0 %v2921
        %4164 = vmatpush1.bf16.msra.mxu0 %v2920
        %4165 = vmatprep.subr.bf16.mxu0 %v2913
        %4166 = vmatpush1.bf16.msra.mxu0 %v2912
        %4167 = vmatprep.subr.bf16.mxu0 %v2905
        %4168 = vmatpush1.bf16.msra.mxu0 %v2904
        %4169 = vmatprep.subr.bf16.mxu0 %v3025
        %4170 = vmatpush2.bf16.msra.mxu0 %v3024
        %4171 = vmatprep.subr.bf16.mxu0 %v3017
        %4172 = vmatpush2.bf16.msra.mxu0 %v3016
        %4173 = vmatprep.subr.bf16.mxu0 %v3009
        %4174 = vmatpush2.bf16.msra.mxu0 %v3008
        %4175 = vmatprep.subr.bf16.mxu0 %v3001
        %4176 = vmatpush2.bf16.msra.mxu0 %v3000
        %4177 = vmatprep.subr.bf16.mxu0 %v2993
        %4178 = vmatpush2.bf16.msra.mxu0 %v2992
        %4179 = vmatprep.subr.bf16.mxu0 %v2985
        %4180 = vmatpush2.bf16.msra.mxu0 %v2984
        %4181 = vmatprep.subr.bf16.mxu0 %v2977
        %4182 = vmatpush2.bf16.msra.mxu0 %v2976
        %4183 = vmatprep.subr.bf16.mxu0 %v2969
        %4184 = vmatpush2.bf16.msra.mxu0 %v2968
        %4185 = vmatprep.mubr.bf16.mxu0 %v969
        %4186 = vmatmul.mubr.bf16.gmra.mxu0 %v968
        %v4187 = vpop.f32.mrf.mxu0
        %v4188 = vadd.f32 %v4147, %v4187
        %v4189 = vpop.f32.mrf.mxu0
        %v4190 = vadd.f32 %v4149, %v4189
        %v4191 = vpop.f32.mrf.mxu0
        %v4192 = vpop.f32.mrf.mxu0
        %4193 = vdwg.mxu0
        %v4194 = vadd.f32 %v426, %v3696
        %v4195 = vadd.f32 %v427, %v3698
        %v4196 = vadd.f32 %v428, %v3860
        %v4197 = vadd.f32 %v429, %v3862
        %v4198 = vadd.f32 %v430, %v4024
        %v4199 = vadd.f32 %v431, %v4026
        %v4200 = vadd.f32 %v432, %v4188
        %v4201 = vadd.f32 %v433, %v4190
        %4202 = vst [vmem:[#allocation2] sm:$0xff] %v4194
        %4203 = vst [vmem:[#allocation2 + $0x8] sm:$0xff] %v4195
        %4204 = vst [vmem:[#allocation2 + $0x10] sm:$0xff] %v4196
        %4205 = vst [vmem:[#allocation2 + $0x18] sm:$0xff] %v4197
        %4206 = vst [vmem:[#allocation2 + $0x20] sm:$0xff] %v4198
        %4207 = vst [vmem:[#allocation2 + $0x28] sm:$0xff] %v4199
        %4208 = vst [vmem:[#allocation2 + $0x30] sm:$0xff] %v4200
        %4209 = vst [vmem:[#allocation2 + $0x38] sm:$0xff] %v4201
        %p4210 = scmp.eq.s32.totalorder %s32, 2
        // Predicated region
        $region81: #{tpu_custom_call.1} parent=47 // pred_check
          %p4211 = pneg %p4210
        $region82: #{tpu_custom_call.1} parent=47 // pred_check_branch
          %4213 = sbr.rel (%p4211) target = $region84
        $region83: #{tpu_custom_call.1} parent=47 // pred_region
          %v4214 = vld [vmem:[#allocation2] sm:$0xff]
          %v4215 = vld [vmem:[#allocation2 + $0x8] sm:$0xff]
          %v4216 = vld [vmem:[#allocation2 + $0x10] sm:$0xff]
          %v4217 = vld [vmem:[#allocation2 + $0x18] sm:$0xff]
          %v4218 = vld [vmem:[#allocation2 + $0x20] sm:$0xff]
          %v4219 = vld [vmem:[#allocation2 + $0x28] sm:$0xff]
          %v4220 = vld [vmem:[#allocation2 + $0x30] sm:$0xff]
          %v4221 = vld [vmem:[#allocation2 + $0x38] sm:$0xff]
          %v4222 = vld [vmem:[#allocation8] sm:$0xff]
          %v4224 = vlaneseq
          %v4225 = vshrl.u32 %v4224, 7
          %v4226 = vsub.s32 0, %v4225
          %v4227 = vrot.slane %v4222, %v4226
          %v4228 = vlaneseq
          %v4229 = vshrl.u32 %v4228, 7
          %v4230 = vsub.s32 1, %v4229
          %v4231 = vrot.slane %v4222, %v4230
          %v4232 = vlaneseq
          %v4233 = vshrl.u32 %v4232, 7
          %v4234 = vsub.s32 2, %v4233
          %v4235 = vrot.slane %v4222, %v4234
          %v4236 = vlaneseq
          %v4237 = vshrl.u32 %v4236, 7
          %v4238 = vsub.s32 3, %v4237
          %v4239 = vrot.slane %v4222, %v4238
          %v4240 = vlaneseq
          %v4241 = vshrl.u32 %v4240, 7
          %v4242 = vsub.s32 4, %v4241
          %v4243 = vrot.slane %v4222, %v4242
          %v4244 = vlaneseq
          %v4245 = vshrl.u32 %v4244, 7
          %v4246 = vsub.s32 5, %v4245
          %v4247 = vrot.slane %v4222, %v4246
          %v4248 = vlaneseq
          %v4249 = vshrl.u32 %v4248, 7
          %v4250 = vsub.s32 6, %v4249
          %v4251 = vrot.slane %v4222, %v4250
          %v4252 = vlaneseq
          %v4253 = vshrl.u32 %v4252, 7
          %v4254 = vsub.s32 7, %v4253
          %v4255 = vrot.slane %v4222, %v4254
          %v4264 = vadd.f32 %v4214, %v4227
          %v4265 = vadd.f32 %v4215, %v4231
          %v4266 = vadd.f32 %v4216, %v4235
          %v4267 = vadd.f32 %v4217, %v4239
          %v4268 = vadd.f32 %v4218, %v4243
          %v4269 = vadd.f32 %v4219, %v4247
          %v4270 = vadd.f32 %v4220, %v4251
          %v4271 = vadd.f32 %v4221, %v4255
          %v4272 = vmax.f32 %v4264, 0.0
          %v4273 = vmax.f32 %v4265, 0.0
          %v4274 = vmax.f32 %v4266, 0.0
          %v4275 = vmax.f32 %v4267, 0.0
          %v4276 = vmax.f32 %v4268, 0.0
          %v4277 = vmax.f32 %v4269, 0.0
          %v4278 = vmax.f32 %v4270, 0.0
          %v4279 = vmax.f32 %v4271, 0.0
          %v4280 = vpack.c.bf16 %v4272, %v4272
          %v4281 = vpack.c.bf16 %v4273, %v4273
          %v4282 = vpack.c.bf16 %v4274, %v4274
          %v4283 = vpack.c.bf16 %v4275, %v4275
          %v4284 = vpack.c.bf16 %v4276, %v4276
          %v4285 = vpack.c.bf16 %v4277, %v4277
          %v4286 = vpack.c.bf16 %v4278, %v4278
          %v4287 = vpack.c.bf16 %v4279, %v4279
          %v4288 = vld [vmem:[#allocation9] sm:$0xff]
          %v4289 = vld [vmem:[#allocation9 + $0x8] sm:$0xff]
          %v4290 = vld [vmem:[#allocation9 + $0x10] sm:$0xf]
          %v4291 = vld [vmem:[#allocation9 + $0x14] sm:$0xff]
          %v4292 = vld [vmem:[#allocation9 + $0x1c] sm:$0xff]
          %v4293 = vld [vmem:[#allocation9 + $0x24] sm:$0xf]
          %v4294 = vld [vmem:[#allocation9 + $0x28] sm:$0xff]
          %v4295 = vld [vmem:[#allocation9 + $0x30] sm:$0xff]
          %v4296 = vld [vmem:[#allocation9 + $0x38] sm:$0xf]
          %v4297 = vld [vmem:[#allocation9 + $0x3c] sm:$0xff]
          %v4298 = vld [vmem:[#allocation9 + $0x44] sm:$0xff]
          %v4299 = vld [vmem:[#allocation9 + $0x4c] sm:$0xf]
          %v4300 = vld [vmem:[#allocation9 + $0x50] sm:$0xff]
          %v4301 = vld [vmem:[#allocation9 + $0x58] sm:$0xff]
          %v4302 = vld [vmem:[#allocation9 + $0x60] sm:$0xf]
          %v4303 = vld [vmem:[#allocation9 + $0x64] sm:$0xff]
          %v4304 = vld [vmem:[#allocation9 + $0x6c] sm:$0xff]
          %v4305 = vld [vmem:[#allocation9 + $0x74] sm:$0xf]
          %v4306 = vld [vmem:[#allocation9 + $0x78] sm:$0xff]
          %v4307 = vld [vmem:[#allocation9 + $0x80] sm:$0xff]
          %v4308 = vld [vmem:[#allocation9 + $0x88] sm:$0xf]
          %v4309 = vld [vmem:[#allocation9 + $0x8c] sm:$0xff]
          %v4310 = vld [vmem:[#allocation9 + $0x94] sm:$0xff]
          %v4311 = vld [vmem:[#allocation9 + $0x9c] sm:$0xf]
          %v4312 = vld [vmem:[#allocation9 + $0xa0] sm:$0xff]
          %v4313 = vld [vmem:[#allocation9 + $0xa8] sm:$0xff]
          %v4314 = vld [vmem:[#allocation9 + $0xb0] sm:$0xf]
          %v4315 = vld [vmem:[#allocation9 + $0xb4] sm:$0xff]
          %v4316 = vld [vmem:[#allocation9 + $0xbc] sm:$0xff]
          %v4317 = vld [vmem:[#allocation9 + $0xc4] sm:$0xf]
          %v4318 = vld [vmem:[#allocation9 + $0xc8] sm:$0xff]
          %v4319 = vld [vmem:[#allocation9 + $0xd0] sm:$0xff]
          %v4320 = vld [vmem:[#allocation9 + $0xd8] sm:$0xf]
          %v4321 = vld [vmem:[#allocation9 + $0xdc] sm:$0xff]
          %v4322 = vld [vmem:[#allocation9 + $0xe4] sm:$0xff]
          %v4323 = vld [vmem:[#allocation9 + $0xec] sm:$0xf]
          %v4324 = vld [vmem:[#allocation9 + $0xf0] sm:$0xff]
          %v4325 = vld [vmem:[#allocation9 + $0xf8] sm:$0xff]
          %v4326 = vld [vmem:[#allocation9 + $0x100] sm:$0xf]
          %v4327 = vld [vmem:[#allocation9 + $0x104] sm:$0xff]
          %v4328 = vld [vmem:[#allocation9 + $0x10c] sm:$0xff]
          %v4329 = vld [vmem:[#allocation9 + $0x114] sm:$0xf]
          %v4330 = vld [vmem:[#allocation9 + $0x118] sm:$0xff]
          %v4331 = vld [vmem:[#allocation9 + $0x120] sm:$0xff]
          %v4332 = vld [vmem:[#allocation9 + $0x128] sm:$0xf]
          %v4333 = vld [vmem:[#allocation9 + $0x12c] sm:$0xff]
          %v4334 = vld [vmem:[#allocation9 + $0x134] sm:$0xff]
          %v4335 = vld [vmem:[#allocation9 + $0x13c] sm:$0xf]
          %v4336 = vld [vmem:[#allocation9 + $0x140] sm:$0xff]
          %v4337 = vld [vmem:[#allocation9 + $0x148] sm:$0xff]
          %v4338 = vld [vmem:[#allocation9 + $0x150] sm:$0xf]
          %v4339 = vld [vmem:[#allocation9 + $0x154] sm:$0xff]
          %v4340 = vld [vmem:[#allocation9 + $0x15c] sm:$0xff]
          %v4341 = vld [vmem:[#allocation9 + $0x164] sm:$0xf]
          %v4342 = vld [vmem:[#allocation9 + $0x168] sm:$0xff]
          %v4343 = vld [vmem:[#allocation9 + $0x170] sm:$0xff]
          %v4344 = vld [vmem:[#allocation9 + $0x178] sm:$0xf]
          %v4345 = vld [vmem:[#allocation9 + $0x17c] sm:$0xff]
          %v4346 = vld [vmem:[#allocation9 + $0x184] sm:$0xff]
          %v4347 = vld [vmem:[#allocation9 + $0x18c] sm:$0xf]
          %v4348 = vld [vmem:[#allocation9 + $0x190] sm:$0xff]
          %v4349 = vld [vmem:[#allocation9 + $0x198] sm:$0xff]
          %v4350 = vld [vmem:[#allocation9 + $0x1a0] sm:$0xf]
          %v4351 = vld [vmem:[#allocation9 + $0x1a4] sm:$0xff]
          %v4352 = vld [vmem:[#allocation9 + $0x1ac] sm:$0xff]
          %v4353 = vld [vmem:[#allocation9 + $0x1b4] sm:$0xf]
          %v4354 = vld [vmem:[#allocation9 + $0x1b8] sm:$0xff]
          %v4355 = vld [vmem:[#allocation9 + $0x1c0] sm:$0xff]
          %v4356 = vld [vmem:[#allocation9 + $0x1c8] sm:$0xf]
          %v4357 = vld [vmem:[#allocation9 + $0x1cc] sm:$0xff]
          %v4358 = vld [vmem:[#allocation9 + $0x1d4] sm:$0xff]
          %v4359 = vld [vmem:[#allocation9 + $0x1dc] sm:$0xf]
          %v4360 = vld [vmem:[#allocation9 + $0x1e0] sm:$0xff]
          %v4361 = vld [vmem:[#allocation9 + $0x1e8] sm:$0xff]
          %v4362 = vld [vmem:[#allocation9 + $0x1f0] sm:$0xf]
          %v4363 = vld [vmem:[#allocation9 + $0x1f4] sm:$0xff]
          %v4364 = vld [vmem:[#allocation9 + $0x1fc] sm:$0xff]
          %v4365 = vld [vmem:[#allocation9 + $0x204] sm:$0xf]
          %v4366 = vld [vmem:[#allocation9 + $0x208] sm:$0xff]
          %v4367 = vld [vmem:[#allocation9 + $0x210] sm:$0xff]
          %v4368 = vld [vmem:[#allocation9 + $0x218] sm:$0xf]
          %v4369 = vld [vmem:[#allocation9 + $0x21c] sm:$0xff]
          %v4370 = vld [vmem:[#allocation9 + $0x224] sm:$0xff]
          %v4371 = vld [vmem:[#allocation9 + $0x22c] sm:$0xf]
          %v4372 = vld [vmem:[#allocation9 + $0x230] sm:$0xff]
          %v4373 = vld [vmem:[#allocation9 + $0x238] sm:$0xff]
          %v4374 = vld [vmem:[#allocation9 + $0x240] sm:$0xf]
          %v4375 = vld [vmem:[#allocation9 + $0x244] sm:$0xff]
          %v4376 = vld [vmem:[#allocation9 + $0x24c] sm:$0xff]
          %v4377 = vld [vmem:[#allocation9 + $0x254] sm:$0xf]
          %v4378 = vld [vmem:[#allocation9 + $0x258] sm:$0xff]
          %v4379 = vld [vmem:[#allocation9 + $0x260] sm:$0xff]
          %v4380 = vld [vmem:[#allocation9 + $0x268] sm:$0xf]
          %v4381 = vld [vmem:[#allocation9 + $0x26c] sm:$0xff]
          %v4382 = vld [vmem:[#allocation9 + $0x274] sm:$0xff]
          %v4383 = vld [vmem:[#allocation9 + $0x27c] sm:$0xf]
          %v4384 = vld [vmem:[#allocation9 + $0x280] sm:$0xff]
          %v4385 = vld [vmem:[#allocation9 + $0x288] sm:$0xff]
          %v4386 = vld [vmem:[#allocation9 + $0x290] sm:$0xf]
          %v4387 = vld [vmem:[#allocation9 + $0x294] sm:$0xff]
          %v4388 = vld [vmem:[#allocation9 + $0x29c] sm:$0xff]
          %v4389 = vld [vmem:[#allocation9 + $0x2a4] sm:$0xf]
          %v4390 = vld [vmem:[#allocation9 + $0x2a8] sm:$0xff]
          %v4391 = vld [vmem:[#allocation9 + $0x2b0] sm:$0xff]
          %v4392 = vld [vmem:[#allocation9 + $0x2b8] sm:$0xf]
          %v4393 = vld [vmem:[#allocation9 + $0x2bc] sm:$0xff]
          %v4394 = vld [vmem:[#allocation9 + $0x2c4] sm:$0xff]
          %v4395 = vld [vmem:[#allocation9 + $0x2cc] sm:$0xf]
          %v4396 = vld [vmem:[#allocation9 + $0x2d0] sm:$0xff]
          %v4397 = vld [vmem:[#allocation9 + $0x2d8] sm:$0xff]
          %v4398 = vld [vmem:[#allocation9 + $0x2e0] sm:$0xf]
          %v4399 = vld [vmem:[#allocation9 + $0x2e4] sm:$0xff]
          %v4400 = vld [vmem:[#allocation9 + $0x2ec] sm:$0xff]
          %v4401 = vld [vmem:[#allocation9 + $0x2f4] sm:$0xf]
          %v4402 = vld [vmem:[#allocation9 + $0x2f8] sm:$0xff]
          %v4403 = vld [vmem:[#allocation9 + $0x300] sm:$0xff]
          %v4404 = vld [vmem:[#allocation9 + $0x308] sm:$0xf]
          %v4405 = vld [vmem:[#allocation9 + $0x30c] sm:$0xff]
          %v4406 = vld [vmem:[#allocation9 + $0x314] sm:$0xff]
          %v4407 = vld [vmem:[#allocation9 + $0x31c] sm:$0xf]
          %v4408 = vld [vmem:[#allocation9 + $0x320] sm:$0xff]
          %v4409 = vld [vmem:[#allocation9 + $0x328] sm:$0xff]
          %v4410 = vld [vmem:[#allocation9 + $0x330] sm:$0xf]
          %v4411 = vld [vmem:[#allocation9 + $0x334] sm:$0xff]
          %v4412 = vld [vmem:[#allocation9 + $0x33c] sm:$0xff]
          %v4413 = vld [vmem:[#allocation9 + $0x344] sm:$0xf]
          %v4414 = vld [vmem:[#allocation9 + $0x348] sm:$0xff]
          %v4415 = vld [vmem:[#allocation9 + $0x350] sm:$0xff]
          %v4416 = vld [vmem:[#allocation9 + $0x358] sm:$0xf]
          %v4417 = vld [vmem:[#allocation9 + $0x35c] sm:$0xff]
          %v4418 = vld [vmem:[#allocation9 + $0x364] sm:$0xff]
          %v4419 = vld [vmem:[#allocation9 + $0x36c] sm:$0xf]
          %v4420 = vld [vmem:[#allocation9 + $0x370] sm:$0xff]
          %v4421 = vld [vmem:[#allocation9 + $0x378] sm:$0xff]
          %v4422 = vld [vmem:[#allocation9 + $0x380] sm:$0xf]
          %v4423 = vld [vmem:[#allocation9 + $0x384] sm:$0xff]
          %v4424 = vld [vmem:[#allocation9 + $0x38c] sm:$0xff]
          %v4425 = vld [vmem:[#allocation9 + $0x394] sm:$0xf]
          %v4426 = vld [vmem:[#allocation9 + $0x398] sm:$0xff]
          %v4427 = vld [vmem:[#allocation9 + $0x3a0] sm:$0xff]
          %v4428 = vld [vmem:[#allocation9 + $0x3a8] sm:$0xf]
          %v4429 = vld [vmem:[#allocation9 + $0x3ac] sm:$0xff]
          %v4430 = vld [vmem:[#allocation9 + $0x3b4] sm:$0xff]
          %v4431 = vld [vmem:[#allocation9 + $0x3bc] sm:$0xf]
          %v4432 = vld [vmem:[#allocation9 + $0x3c0] sm:$0xff]
          %v4433 = vld [vmem:[#allocation9 + $0x3c8] sm:$0xff]
          %v4434 = vld [vmem:[#allocation9 + $0x3d0] sm:$0xf]
          %v4435 = vld [vmem:[#allocation9 + $0x3d4] sm:$0xff]
          %v4436 = vld [vmem:[#allocation9 + $0x3dc] sm:$0xff]
          %v4437 = vld [vmem:[#allocation9 + $0x3e4] sm:$0xf]
          %v4438 = vld [vmem:[#allocation9 + $0x3e8] sm:$0xff]
          %v4439 = vld [vmem:[#allocation9 + $0x3f0] sm:$0xff]
          %v4440 = vld [vmem:[#allocation9 + $0x3f8] sm:$0xf]
          %v4441 = vld [vmem:[#allocation9 + $0x3fc] sm:$0xff]
          %v4442 = vld [vmem:[#allocation9 + $0x404] sm:$0xff]
          %v4443 = vld [vmem:[#allocation9 + $0x40c] sm:$0xf]
          %v4444 = vld [vmem:[#allocation9 + $0x410] sm:$0xff]
          %v4445 = vld [vmem:[#allocation9 + $0x418] sm:$0xff]
          %v4446 = vld [vmem:[#allocation9 + $0x420] sm:$0xf]
          %v4447 = vld [vmem:[#allocation9 + $0x424] sm:$0xff]
          %v4448 = vld [vmem:[#allocation9 + $0x42c] sm:$0xff]
          %v4449 = vld [vmem:[#allocation9 + $0x434] sm:$0xf]
          %v4450 = vld [vmem:[#allocation9 + $0x438] sm:$0xff]
          %v4451 = vld [vmem:[#allocation9 + $0x440] sm:$0xff]
          %v4452 = vld [vmem:[#allocation9 + $0x448] sm:$0xf]
          %v4453 = vld [vmem:[#allocation9 + $0x44c] sm:$0xff]
          %v4454 = vld [vmem:[#allocation9 + $0x454] sm:$0xff]
          %v4455 = vld [vmem:[#allocation9 + $0x45c] sm:$0xf]
          %v4456 = vld [vmem:[#allocation9 + $0x460] sm:$0xff]
          %v4457 = vld [vmem:[#allocation9 + $0x468] sm:$0xff]
          %v4458 = vld [vmem:[#allocation9 + $0x470] sm:$0xf]
          %v4459 = vld [vmem:[#allocation9 + $0x474] sm:$0xff]
          %v4460 = vld [vmem:[#allocation9 + $0x47c] sm:$0xff]
          %v4461 = vld [vmem:[#allocation9 + $0x484] sm:$0xf]
          %v4462 = vld [vmem:[#allocation9 + $0x488] sm:$0xff]
          %v4463 = vld [vmem:[#allocation9 + $0x490] sm:$0xff]
          %v4464 = vld [vmem:[#allocation9 + $0x498] sm:$0xf]
          %v4465 = vld [vmem:[#allocation9 + $0x49c] sm:$0xff]
          %v4466 = vld [vmem:[#allocation9 + $0x4a4] sm:$0xff]
          %v4467 = vld [vmem:[#allocation9 + $0x4ac] sm:$0xf]
          %v4468 = vld [vmem:[#allocation9 + $0x4b0] sm:$0xff]
          %v4469 = vld [vmem:[#allocation9 + $0x4b8] sm:$0xff]
          %v4470 = vld [vmem:[#allocation9 + $0x4c0] sm:$0xf]
          %v4471 = vld [vmem:[#allocation9 + $0x4c4] sm:$0xff]
          %v4472 = vld [vmem:[#allocation9 + $0x4cc] sm:$0xff]
          %v4473 = vld [vmem:[#allocation9 + $0x4d4] sm:$0xf]
          %v4474 = vld [vmem:[#allocation9 + $0x4d8] sm:$0xff]
          %v4475 = vld [vmem:[#allocation9 + $0x4e0] sm:$0xff]
          %v4476 = vld [vmem:[#allocation9 + $0x4e8] sm:$0xf]
          %v4477 = vld [vmem:[#allocation9 + $0x4ec] sm:$0xff]
          %v4478 = vld [vmem:[#allocation9 + $0x4f4] sm:$0xff]
          %v4479 = vld [vmem:[#allocation9 + $0x4fc] sm:$0xf]
          %v4480 = vld [vmem:[#allocation9 + $0x500] sm:$0xff]
          %v4481 = vld [vmem:[#allocation9 + $0x508] sm:$0xff]
          %v4482 = vld [vmem:[#allocation9 + $0x510] sm:$0xf]
          %v4483 = vld [vmem:[#allocation9 + $0x514] sm:$0xff]
          %v4484 = vld [vmem:[#allocation9 + $0x51c] sm:$0xff]
          %v4485 = vld [vmem:[#allocation9 + $0x524] sm:$0xf]
          %v4486 = vld [vmem:[#allocation9 + $0x528] sm:$0xff]
          %v4487 = vld [vmem:[#allocation9 + $0x530] sm:$0xff]
          %v4488 = vld [vmem:[#allocation9 + $0x538] sm:$0xf]
          %v4489 = vld [vmem:[#allocation9 + $0x53c] sm:$0xff]
          %v4490 = vld [vmem:[#allocation9 + $0x544] sm:$0xff]
          %v4491 = vld [vmem:[#allocation9 + $0x54c] sm:$0xf]
          %v4492 = vld [vmem:[#allocation9 + $0x550] sm:$0xff]
          %v4493 = vld [vmem:[#allocation9 + $0x558] sm:$0xff]
          %v4494 = vld [vmem:[#allocation9 + $0x560] sm:$0xf]
          %v4495 = vld [vmem:[#allocation9 + $0x564] sm:$0xff]
          %v4496 = vld [vmem:[#allocation9 + $0x56c] sm:$0xff]
          %v4497 = vld [vmem:[#allocation9 + $0x574] sm:$0xf]
          %v4498 = vld [vmem:[#allocation9 + $0x578] sm:$0xff]
          %v4499 = vld [vmem:[#allocation9 + $0x580] sm:$0xff]
          %v4500 = vld [vmem:[#allocation9 + $0x588] sm:$0xf]
          %v4501 = vld [vmem:[#allocation9 + $0x58c] sm:$0xff]
          %v4502 = vld [vmem:[#allocation9 + $0x594] sm:$0xff]
          %v4503 = vld [vmem:[#allocation9 + $0x59c] sm:$0xf]
          %v4504 = vld [vmem:[#allocation9 + $0x5a0] sm:$0xff]
          %v4505 = vld [vmem:[#allocation9 + $0x5a8] sm:$0xff]
          %v4506 = vld [vmem:[#allocation9 + $0x5b0] sm:$0xf]
          %v4507 = vld [vmem:[#allocation9 + $0x5b4] sm:$0xff]
          %v4508 = vld [vmem:[#allocation9 + $0x5bc] sm:$0xff]
          %v4509 = vld [vmem:[#allocation9 + $0x5c4] sm:$0xf]
          %v4510 = vld [vmem:[#allocation9 + $0x5c8] sm:$0xff]
          %v4511 = vld [vmem:[#allocation9 + $0x5d0] sm:$0xff]
          %v4512 = vld [vmem:[#allocation9 + $0x5d8] sm:$0xf]
          %v4513 = vld [vmem:[#allocation9 + $0x5dc] sm:$0xff]
          %v4514 = vld [vmem:[#allocation9 + $0x5e4] sm:$0xff]
          %v4515 = vld [vmem:[#allocation9 + $0x5ec] sm:$0xf]
          %v4516 = vld [vmem:[#allocation9 + $0x5f0] sm:$0xff]
          %v4517 = vld [vmem:[#allocation9 + $0x5f8] sm:$0xff]
          %v4518 = vld [vmem:[#allocation9 + $0x600] sm:$0xf]
          %v4519 = vld [vmem:[#allocation9 + $0x604] sm:$0xff]
          %v4520 = vld [vmem:[#allocation9 + $0x60c] sm:$0xff]
          %v4521 = vld [vmem:[#allocation9 + $0x614] sm:$0xf]
          %v4522 = vld [vmem:[#allocation9 + $0x618] sm:$0xff]
          %v4523 = vld [vmem:[#allocation9 + $0x620] sm:$0xff]
          %v4524 = vld [vmem:[#allocation9 + $0x628] sm:$0xf]
          %v4525 = vld [vmem:[#allocation9 + $0x62c] sm:$0xff]
          %v4526 = vld [vmem:[#allocation9 + $0x634] sm:$0xff]
          %v4527 = vld [vmem:[#allocation9 + $0x63c] sm:$0xf]
          %v4528 = vld [vmem:[#allocation9 + $0x640] sm:$0xff]
          %v4529 = vld [vmem:[#allocation9 + $0x648] sm:$0xff]
          %v4530 = vld [vmem:[#allocation9 + $0x650] sm:$0xf]
          %v4531 = vld [vmem:[#allocation9 + $0x654] sm:$0xff]
          %v4532 = vld [vmem:[#allocation9 + $0x65c] sm:$0xff]
          %v4533 = vld [vmem:[#allocation9 + $0x664] sm:$0xf]
          %v4534 = vld [vmem:[#allocation9 + $0x668] sm:$0xff]
          %v4535 = vld [vmem:[#allocation9 + $0x670] sm:$0xff]
          %v4536 = vld [vmem:[#allocation9 + $0x678] sm:$0xf]
          %v4537 = vld [vmem:[#allocation9 + $0x67c] sm:$0xff]
          %v4538 = vld [vmem:[#allocation9 + $0x684] sm:$0xff]
          %v4539 = vld [vmem:[#allocation9 + $0x68c] sm:$0xf]
          %v4540 = vld [vmem:[#allocation9 + $0x690] sm:$0xff]
          %v4541 = vld [vmem:[#allocation9 + $0x698] sm:$0xff]
          %v4542 = vld [vmem:[#allocation9 + $0x6a0] sm:$0xf]
          %v4543 = vld [vmem:[#allocation9 + $0x6a4] sm:$0xff]
          %v4544 = vld [vmem:[#allocation9 + $0x6ac] sm:$0xff]
          %v4545 = vld [vmem:[#allocation9 + $0x6b4] sm:$0xf]
          %v4546 = vld [vmem:[#allocation9 + $0x6b8] sm:$0xff]
          %v4547 = vld [vmem:[#allocation9 + $0x6c0] sm:$0xff]
          %v4548 = vld [vmem:[#allocation9 + $0x6c8] sm:$0xf]
          %v4549 = vld [vmem:[#allocation9 + $0x6cc] sm:$0xff]
          %v4550 = vld [vmem:[#allocation9 + $0x6d4] sm:$0xff]
          %v4551 = vld [vmem:[#allocation9 + $0x6dc] sm:$0xf]
          %v4552 = vld [vmem:[#allocation9 + $0x6e0] sm:$0xff]
          %v4553 = vld [vmem:[#allocation9 + $0x6e8] sm:$0xff]
          %v4554 = vld [vmem:[#allocation9 + $0x6f0] sm:$0xf]
          %v4555 = vld [vmem:[#allocation9 + $0x6f4] sm:$0xff]
          %v4556 = vld [vmem:[#allocation9 + $0x6fc] sm:$0xff]
          %v4557 = vld [vmem:[#allocation9 + $0x704] sm:$0xf]
          %v4558 = vld [vmem:[#allocation9 + $0x708] sm:$0xff]
          %v4559 = vld [vmem:[#allocation9 + $0x710] sm:$0xff]
          %v4560 = vld [vmem:[#allocation9 + $0x718] sm:$0xf]
          %v4561 = vld [vmem:[#allocation9 + $0x71c] sm:$0xff]
          %v4562 = vld [vmem:[#allocation9 + $0x724] sm:$0xff]
          %v4563 = vld [vmem:[#allocation9 + $0x72c] sm:$0xf]
          %v4564 = vld [vmem:[#allocation9 + $0x730] sm:$0xff]
          %v4565 = vld [vmem:[#allocation9 + $0x738] sm:$0xff]
          %v4566 = vld [vmem:[#allocation9 + $0x740] sm:$0xf]
          %v4567 = vld [vmem:[#allocation9 + $0x744] sm:$0xff]
          %v4568 = vld [vmem:[#allocation9 + $0x74c] sm:$0xff]
          %v4569 = vld [vmem:[#allocation9 + $0x754] sm:$0xf]
          %v4570 = vld [vmem:[#allocation9 + $0x758] sm:$0xff]
          %v4571 = vld [vmem:[#allocation9 + $0x760] sm:$0xff]
          %v4572 = vld [vmem:[#allocation9 + $0x768] sm:$0xf]
          %v4573 = vld [vmem:[#allocation9 + $0x76c] sm:$0xff]
          %v4574 = vld [vmem:[#allocation9 + $0x774] sm:$0xff]
          %v4575 = vld [vmem:[#allocation9 + $0x77c] sm:$0xf]
          %v4576 = vld [vmem:[#allocation9 + $0x780] sm:$0xff]
          %v4577 = vld [vmem:[#allocation9 + $0x788] sm:$0xff]
          %v4578 = vld [vmem:[#allocation9 + $0x790] sm:$0xf]
          %v4579 = vld [vmem:[#allocation9 + $0x794] sm:$0xff]
          %v4580 = vld [vmem:[#allocation9 + $0x79c] sm:$0xff]
          %v4581 = vld [vmem:[#allocation9 + $0x7a4] sm:$0xf]
          %v4582 = vld [vmem:[#allocation9 + $0x7a8] sm:$0xff]
          %v4583 = vld [vmem:[#allocation9 + $0x7b0] sm:$0xff]
          %v4584 = vld [vmem:[#allocation9 + $0x7b8] sm:$0xf]
          %v4585 = vld [vmem:[#allocation9 + $0x7bc] sm:$0xff]
          %v4586 = vld [vmem:[#allocation9 + $0x7c4] sm:$0xff]
          %v4587 = vld [vmem:[#allocation9 + $0x7cc] sm:$0xf]
          %v4588 = vld [vmem:[#allocation9 + $0x7d0] sm:$0xff]
          %v4589 = vld [vmem:[#allocation9 + $0x7d8] sm:$0xff]
          %v4590 = vld [vmem:[#allocation9 + $0x7e0] sm:$0xf]
          %v4591 = vld [vmem:[#allocation9 + $0x7e4] sm:$0xff]
          %v4592 = vld [vmem:[#allocation9 + $0x7ec] sm:$0xff]
          %v4593 = vld [vmem:[#allocation9 + $0x7f4] sm:$0xf]
          %v4594 = vld [vmem:[#allocation9 + $0x7f8] sm:$0xff]
          %v4595 = vld [vmem:[#allocation9 + $0x800] sm:$0xff]
          %v4596 = vld [vmem:[#allocation9 + $0x808] sm:$0xf]
          %v4597 = vld [vmem:[#allocation9 + $0x80c] sm:$0xff]
          %v4598 = vld [vmem:[#allocation9 + $0x814] sm:$0xff]
          %v4599 = vld [vmem:[#allocation9 + $0x81c] sm:$0xf]
          %v4600 = vld [vmem:[#allocation9 + $0x820] sm:$0xff]
          %v4601 = vld [vmem:[#allocation9 + $0x828] sm:$0xff]
          %v4602 = vld [vmem:[#allocation9 + $0x830] sm:$0xf]
          %v4603 = vld [vmem:[#allocation9 + $0x834] sm:$0xff]
          %v4604 = vld [vmem:[#allocation9 + $0x83c] sm:$0xff]
          %v4605 = vld [vmem:[#allocation9 + $0x844] sm:$0xf]
          %v4606 = vld [vmem:[#allocation9 + $0x848] sm:$0xff]
          %v4607 = vld [vmem:[#allocation9 + $0x850] sm:$0xff]
          %v4608 = vld [vmem:[#allocation9 + $0x858] sm:$0xf]
          %v4609 = vld [vmem:[#allocation9 + $0x85c] sm:$0xff]
          %v4610 = vld [vmem:[#allocation9 + $0x864] sm:$0xff]
          %v4611 = vld [vmem:[#allocation9 + $0x86c] sm:$0xf]
          %v4612 = vld [vmem:[#allocation9 + $0x870] sm:$0xff]
          %v4613 = vld [vmem:[#allocation9 + $0x878] sm:$0xff]
          %v4614 = vld [vmem:[#allocation9 + $0x880] sm:$0xf]
          %v4615 = vld [vmem:[#allocation9 + $0x884] sm:$0xff]
          %v4616 = vld [vmem:[#allocation9 + $0x88c] sm:$0xff]
          %v4617 = vld [vmem:[#allocation9 + $0x894] sm:$0xf]
          %v4618 = vld [vmem:[#allocation9 + $0x898] sm:$0xff]
          %v4619 = vld [vmem:[#allocation9 + $0x8a0] sm:$0xff]
          %v4620 = vld [vmem:[#allocation9 + $0x8a8] sm:$0xf]
          %v4621 = vld [vmem:[#allocation9 + $0x8ac] sm:$0xff]
          %v4622 = vld [vmem:[#allocation9 + $0x8b4] sm:$0xff]
          %v4623 = vld [vmem:[#allocation9 + $0x8bc] sm:$0xf]
          %v4624 = vld [vmem:[#allocation9 + $0x8c0] sm:$0xff]
          %v4625 = vld [vmem:[#allocation9 + $0x8c8] sm:$0xff]
          %v4626 = vld [vmem:[#allocation9 + $0x8d0] sm:$0xf]
          %v4627 = vld [vmem:[#allocation9 + $0x8d4] sm:$0xff]
          %v4628 = vld [vmem:[#allocation9 + $0x8dc] sm:$0xff]
          %v4629 = vld [vmem:[#allocation9 + $0x8e4] sm:$0xf]
          %v4630 = vld [vmem:[#allocation9 + $0x8e8] sm:$0xff]
          %v4631 = vld [vmem:[#allocation9 + $0x8f0] sm:$0xff]
          %v4632 = vld [vmem:[#allocation9 + $0x8f8] sm:$0xf]
          %v4633 = vld [vmem:[#allocation9 + $0x8fc] sm:$0xff]
          %v4634 = vld [vmem:[#allocation9 + $0x904] sm:$0xff]
          %v4635 = vld [vmem:[#allocation9 + $0x90c] sm:$0xf]
          %v4636 = vld [vmem:[#allocation9 + $0x910] sm:$0xff]
          %v4637 = vld [vmem:[#allocation9 + $0x918] sm:$0xff]
          %v4638 = vld [vmem:[#allocation9 + $0x920] sm:$0xf]
          %v4639 = vld [vmem:[#allocation9 + $0x924] sm:$0xff]
          %v4640 = vld [vmem:[#allocation9 + $0x92c] sm:$0xff]
          %v4641 = vld [vmem:[#allocation9 + $0x934] sm:$0xf]
          %v4642 = vld [vmem:[#allocation9 + $0x938] sm:$0xff]
          %v4643 = vld [vmem:[#allocation9 + $0x940] sm:$0xff]
          %v4644 = vld [vmem:[#allocation9 + $0x948] sm:$0xf]
          %v4645 = vld [vmem:[#allocation9 + $0x94c] sm:$0xff]
          %v4646 = vld [vmem:[#allocation9 + $0x954] sm:$0xff]
          %v4647 = vld [vmem:[#allocation9 + $0x95c] sm:$0xf]
          %v4648 = vld [vmem:[#allocation9 + $0x960] sm:$0xff]
          %v4649 = vld [vmem:[#allocation9 + $0x968] sm:$0xff]
          %v4650 = vld [vmem:[#allocation9 + $0x970] sm:$0xf]
          %v4651 = vld [vmem:[#allocation9 + $0x974] sm:$0xff]
          %v4652 = vld [vmem:[#allocation9 + $0x97c] sm:$0xff]
          %v4653 = vld [vmem:[#allocation9 + $0x984] sm:$0xf]
          %v4654 = vld [vmem:[#allocation9 + $0x988] sm:$0xff]
          %v4655 = vld [vmem:[#allocation9 + $0x990] sm:$0xff]
          %v4656 = vld [vmem:[#allocation9 + $0x998] sm:$0xf]
          %v4657 = vld [vmem:[#allocation9 + $0x99c] sm:$0xff]
          %v4658 = vld [vmem:[#allocation9 + $0x9a4] sm:$0xff]
          %v4659 = vld [vmem:[#allocation9 + $0x9ac] sm:$0xf]
          %v4660 = vld [vmem:[#allocation9 + $0x9b0] sm:$0xff]
          %v4661 = vld [vmem:[#allocation9 + $0x9b8] sm:$0xff]
          %v4662 = vld [vmem:[#allocation9 + $0x9c0] sm:$0xf]
          %v4663 = vld [vmem:[#allocation9 + $0x9c4] sm:$0xff]
          %v4664 = vld [vmem:[#allocation9 + $0x9cc] sm:$0xff]
          %v4665 = vld [vmem:[#allocation9 + $0x9d4] sm:$0xf]
          %v4666 = vld [vmem:[#allocation9 + $0x9d8] sm:$0xff]
          %v4667 = vld [vmem:[#allocation9 + $0x9e0] sm:$0xff]
          %v4668 = vld [vmem:[#allocation9 + $0x9e8] sm:$0xf]
          %v4669 = vld [vmem:[#allocation9 + $0x9ec] sm:$0xff]
          %v4670 = vld [vmem:[#allocation9 + $0x9f4] sm:$0xff]
          %v4671 = vld [vmem:[#allocation9 + $0x9fc] sm:$0xf]
          %v4672 = vld [vmem:[#allocation11] sm:$0x1f]
          %v4674 = vlaneseq
          %v4675 = vshrl.u32 %v4674, 7
          %v4676 = vsub.s32 0, %v4675
          %v4677 = vrot.slane %v4672, %v4676
          %v4678 = vlaneseq
          %v4679 = vshrl.u32 %v4678, 7
          %v4680 = vsub.s32 1, %v4679
          %v4681 = vrot.slane %v4672, %v4680
          %v4682 = vlaneseq
          %v4683 = vshrl.u32 %v4682, 7
          %v4684 = vsub.s32 2, %v4683
          %v4685 = vrot.slane %v4672, %v4684
          %v4686 = vlaneseq
          %v4687 = vshrl.u32 %v4686, 7
          %v4688 = vsub.s32 3, %v4687
          %v4689 = vrot.slane %v4672, %v4688
          %v4690 = vlaneseq
          %v4691 = vshrl.u32 %v4690, 7
          %v4692 = vsub.s32 4, %v4691
          %v4693 = vrot.slane %v4672, %v4692
          %v5083 = vunpack.c.l.b16 %v4288
          %v5084 = vunpack.c.h.b16 %v4288
          %v5085 = vunpack.c.l.b16 %v4289
          %v5086 = vunpack.c.h.b16 %v4289
          %v5087 = vunpack.c.l.b16 %v4290
          %v5088 = vunpack.c.l.b16 %v4291
          %v5089 = vunpack.c.h.b16 %v4291
          %v5090 = vunpack.c.l.b16 %v4292
          %v5091 = vunpack.c.h.b16 %v4292
          %v5092 = vunpack.c.l.b16 %v4293
          %v5093 = vunpack.c.l.b16 %v4294
          %v5094 = vunpack.c.h.b16 %v4294
          %v5095 = vunpack.c.l.b16 %v4295
          %v5096 = vunpack.c.h.b16 %v4295
          %v5097 = vunpack.c.l.b16 %v4296
          %v5098 = vunpack.c.l.b16 %v4297
          %v5099 = vunpack.c.h.b16 %v4297
          %v5100 = vunpack.c.l.b16 %v4298
          %v5101 = vunpack.c.h.b16 %v4298
          %v5102 = vunpack.c.l.b16 %v4299
          %v5103 = vunpack.c.l.b16 %v4300
          %v5104 = vunpack.c.h.b16 %v4300
          %v5105 = vunpack.c.l.b16 %v4301
          %v5106 = vunpack.c.h.b16 %v4301
          %v5107 = vunpack.c.l.b16 %v4302
          %v5108 = vunpack.c.l.b16 %v4303
          %v5109 = vunpack.c.h.b16 %v4303
          %v5110 = vunpack.c.l.b16 %v4304
          %v5111 = vunpack.c.h.b16 %v4304
          %v5112 = vunpack.c.l.b16 %v4305
          %v5113 = vunpack.c.l.b16 %v4306
          %v5114 = vunpack.c.h.b16 %v4306
          %v5115 = vunpack.c.l.b16 %v4307
          %v5116 = vunpack.c.h.b16 %v4307
          %v5117 = vunpack.c.l.b16 %v4308
          %v5118 = vunpack.c.l.b16 %v4309
          %v5119 = vunpack.c.h.b16 %v4309
          %v5120 = vunpack.c.l.b16 %v4310
          %v5121 = vunpack.c.h.b16 %v4310
          %v5122 = vunpack.c.l.b16 %v4311
          %v5123 = vunpack.c.l.b16 %v4312
          %v5124 = vunpack.c.h.b16 %v4312
          %v5125 = vunpack.c.l.b16 %v4313
          %v5126 = vunpack.c.h.b16 %v4313
          %v5127 = vunpack.c.l.b16 %v4314
          %v5128 = vunpack.c.l.b16 %v4315
          %v5129 = vunpack.c.h.b16 %v4315
          %v5130 = vunpack.c.l.b16 %v4316
          %v5131 = vunpack.c.h.b16 %v4316
          %v5132 = vunpack.c.l.b16 %v4317
          %v5133 = vunpack.c.l.b16 %v4318
          %v5134 = vunpack.c.h.b16 %v4318
          %v5135 = vunpack.c.l.b16 %v4319
          %v5136 = vunpack.c.h.b16 %v4319
          %v5137 = vunpack.c.l.b16 %v4320
          %v5138 = vunpack.c.l.b16 %v4321
          %v5139 = vunpack.c.h.b16 %v4321
          %v5140 = vunpack.c.l.b16 %v4322
          %v5141 = vunpack.c.h.b16 %v4322
          %v5142 = vunpack.c.l.b16 %v4323
          %v5143 = vunpack.c.l.b16 %v4324
          %v5144 = vunpack.c.h.b16 %v4324
          %v5145 = vunpack.c.l.b16 %v4325
          %v5146 = vunpack.c.h.b16 %v4325
          %v5147 = vunpack.c.l.b16 %v4326
          %v5148 = vunpack.c.l.b16 %v4327
          %v5149 = vunpack.c.h.b16 %v4327
          %v5150 = vunpack.c.l.b16 %v4328
          %v5151 = vunpack.c.h.b16 %v4328
          %v5152 = vunpack.c.l.b16 %v4329
          %v5153 = vunpack.c.l.b16 %v4330
          %v5154 = vunpack.c.h.b16 %v4330
          %v5155 = vunpack.c.l.b16 %v4331
          %v5156 = vunpack.c.h.b16 %v4331
          %v5157 = vunpack.c.l.b16 %v4332
          %v5158 = vunpack.c.l.b16 %v4333
          %v5159 = vunpack.c.h.b16 %v4333
          %v5160 = vunpack.c.l.b16 %v4334
          %v5161 = vunpack.c.h.b16 %v4334
          %v5162 = vunpack.c.l.b16 %v4335
          %v5163 = vunpack.c.l.b16 %v4336
          %v5164 = vunpack.c.h.b16 %v4336
          %v5165 = vunpack.c.l.b16 %v4337
          %v5166 = vunpack.c.h.b16 %v4337
          %v5167 = vunpack.c.l.b16 %v4338
          %v5168 = vunpack.c.l.b16 %v4339
          %v5169 = vunpack.c.h.b16 %v4339
          %v5170 = vunpack.c.l.b16 %v4340
          %v5171 = vunpack.c.h.b16 %v4340
          %v5172 = vunpack.c.l.b16 %v4341
          %v5173 = vunpack.c.l.b16 %v4342
          %v5174 = vunpack.c.h.b16 %v4342
          %v5175 = vunpack.c.l.b16 %v4343
          %v5176 = vunpack.c.h.b16 %v4343
          %v5177 = vunpack.c.l.b16 %v4344
          %v5178 = vunpack.c.l.b16 %v4345
          %v5179 = vunpack.c.h.b16 %v4345
          %v5180 = vunpack.c.l.b16 %v4346
          %v5181 = vunpack.c.h.b16 %v4346
          %v5182 = vunpack.c.l.b16 %v4347
          %v5183 = vunpack.c.l.b16 %v4348
          %v5184 = vunpack.c.h.b16 %v4348
          %v5185 = vunpack.c.l.b16 %v4349
          %v5186 = vunpack.c.h.b16 %v4349
          %v5187 = vunpack.c.l.b16 %v4350
          %v5188 = vunpack.c.l.b16 %v4351
          %v5189 = vunpack.c.h.b16 %v4351
          %v5190 = vunpack.c.l.b16 %v4352
          %v5191 = vunpack.c.h.b16 %v4352
          %v5192 = vunpack.c.l.b16 %v4353
          %v5193 = vunpack.c.l.b16 %v4354
          %v5194 = vunpack.c.h.b16 %v4354
          %v5195 = vunpack.c.l.b16 %v4355
          %v5196 = vunpack.c.h.b16 %v4355
          %v5197 = vunpack.c.l.b16 %v4356
          %v5198 = vunpack.c.l.b16 %v4357
          %v5199 = vunpack.c.h.b16 %v4357
          %v5200 = vunpack.c.l.b16 %v4358
          %v5201 = vunpack.c.h.b16 %v4358
          %v5202 = vunpack.c.l.b16 %v4359
          %v5203 = vunpack.c.l.b16 %v4360
          %v5204 = vunpack.c.h.b16 %v4360
          %v5205 = vunpack.c.l.b16 %v4361
          %v5206 = vunpack.c.h.b16 %v4361
          %v5207 = vunpack.c.l.b16 %v4362
          %v5208 = vunpack.c.l.b16 %v4363
          %v5209 = vunpack.c.h.b16 %v4363
          %v5210 = vunpack.c.l.b16 %v4364
          %v5211 = vunpack.c.h.b16 %v4364
          %v5212 = vunpack.c.l.b16 %v4365
          %v5213 = vunpack.c.l.b16 %v4366
          %v5214 = vunpack.c.h.b16 %v4366
          %v5215 = vunpack.c.l.b16 %v4367
          %v5216 = vunpack.c.h.b16 %v4367
          %v5217 = vunpack.c.l.b16 %v4368
          %v5218 = vunpack.c.l.b16 %v4369
          %v5219 = vunpack.c.h.b16 %v4369
          %v5220 = vunpack.c.l.b16 %v4370
          %v5221 = vunpack.c.h.b16 %v4370
          %v5222 = vunpack.c.l.b16 %v4371
          %v5223 = vunpack.c.l.b16 %v4372
          %v5224 = vunpack.c.h.b16 %v4372
          %v5225 = vunpack.c.l.b16 %v4373
          %v5226 = vunpack.c.h.b16 %v4373
          %v5227 = vunpack.c.l.b16 %v4374
          %v5228 = vunpack.c.l.b16 %v4375
          %v5229 = vunpack.c.h.b16 %v4375
          %v5230 = vunpack.c.l.b16 %v4376
          %v5231 = vunpack.c.h.b16 %v4376
          %v5232 = vunpack.c.l.b16 %v4377
          %v5233 = vunpack.c.l.b16 %v4378
          %v5234 = vunpack.c.h.b16 %v4378
          %v5235 = vunpack.c.l.b16 %v4379
          %v5236 = vunpack.c.h.b16 %v4379
          %v5237 = vunpack.c.l.b16 %v4380
          %v5238 = vunpack.c.l.b16 %v4381
          %v5239 = vunpack.c.h.b16 %v4381
          %v5240 = vunpack.c.l.b16 %v4382
          %v5241 = vunpack.c.h.b16 %v4382
          %v5242 = vunpack.c.l.b16 %v4383
          %v5243 = vunpack.c.l.b16 %v4384
          %v5244 = vunpack.c.h.b16 %v4384
          %v5245 = vunpack.c.l.b16 %v4385
          %v5246 = vunpack.c.h.b16 %v4385
          %v5247 = vunpack.c.l.b16 %v4386
          %v5248 = vunpack.c.l.b16 %v4387
          %v5249 = vunpack.c.h.b16 %v4387
          %v5250 = vunpack.c.l.b16 %v4388
          %v5251 = vunpack.c.h.b16 %v4388
          %v5252 = vunpack.c.l.b16 %v4389
          %v5253 = vunpack.c.l.b16 %v4390
          %v5254 = vunpack.c.h.b16 %v4390
          %v5255 = vunpack.c.l.b16 %v4391
          %v5256 = vunpack.c.h.b16 %v4391
          %v5257 = vunpack.c.l.b16 %v4392
          %v5258 = vunpack.c.l.b16 %v4393
          %v5259 = vunpack.c.h.b16 %v4393
          %v5260 = vunpack.c.l.b16 %v4394
          %v5261 = vunpack.c.h.b16 %v4394
          %v5262 = vunpack.c.l.b16 %v4395
          %v5263 = vunpack.c.l.b16 %v4396
          %v5264 = vunpack.c.h.b16 %v4396
          %v5265 = vunpack.c.l.b16 %v4397
          %v5266 = vunpack.c.h.b16 %v4397
          %v5267 = vunpack.c.l.b16 %v4398
          %v5268 = vunpack.c.l.b16 %v4399
          %v5269 = vunpack.c.h.b16 %v4399
          %v5270 = vunpack.c.l.b16 %v4400
          %v5271 = vunpack.c.h.b16 %v4400
          %v5272 = vunpack.c.l.b16 %v4401
          %v5273 = vunpack.c.l.b16 %v4402
          %v5274 = vunpack.c.h.b16 %v4402
          %v5275 = vunpack.c.l.b16 %v4403
          %v5276 = vunpack.c.h.b16 %v4403
          %v5277 = vunpack.c.l.b16 %v4404
          %v5278 = vunpack.c.l.b16 %v4405
          %v5279 = vunpack.c.h.b16 %v4405
          %v5280 = vunpack.c.l.b16 %v4406
          %v5281 = vunpack.c.h.b16 %v4406
          %v5282 = vunpack.c.l.b16 %v4407
          %v5283 = vunpack.c.l.b16 %v4408
          %v5284 = vunpack.c.h.b16 %v4408
          %v5285 = vunpack.c.l.b16 %v4409
          %v5286 = vunpack.c.h.b16 %v4409
          %v5287 = vunpack.c.l.b16 %v4410
          %v5288 = vunpack.c.l.b16 %v4411
          %v5289 = vunpack.c.h.b16 %v4411
          %v5290 = vunpack.c.l.b16 %v4412
          %v5291 = vunpack.c.h.b16 %v4412
          %v5292 = vunpack.c.l.b16 %v4413
          %v5293 = vunpack.c.l.b16 %v4414
          %v5294 = vunpack.c.h.b16 %v4414
          %v5295 = vunpack.c.l.b16 %v4415
          %v5296 = vunpack.c.h.b16 %v4415
          %v5297 = vunpack.c.l.b16 %v4416
          %v5298 = vunpack.c.l.b16 %v4417
          %v5299 = vunpack.c.h.b16 %v4417
          %v5300 = vunpack.c.l.b16 %v4418
          %v5301 = vunpack.c.h.b16 %v4418
          %v5302 = vunpack.c.l.b16 %v4419
          %v5303 = vunpack.c.l.b16 %v4420
          %v5304 = vunpack.c.h.b16 %v4420
          %v5305 = vunpack.c.l.b16 %v4421
          %v5306 = vunpack.c.h.b16 %v4421
          %v5307 = vunpack.c.l.b16 %v4422
          %v5308 = vunpack.c.l.b16 %v4423
          %v5309 = vunpack.c.h.b16 %v4423
          %v5310 = vunpack.c.l.b16 %v4424
          %v5311 = vunpack.c.h.b16 %v4424
          %v5312 = vunpack.c.l.b16 %v4425
          %v5313 = vunpack.c.l.b16 %v4426
          %v5314 = vunpack.c.h.b16 %v4426
          %v5315 = vunpack.c.l.b16 %v4427
          %v5316 = vunpack.c.h.b16 %v4427
          %v5317 = vunpack.c.l.b16 %v4428
          %v5318 = vunpack.c.l.b16 %v4429
          %v5319 = vunpack.c.h.b16 %v4429
          %v5320 = vunpack.c.l.b16 %v4430
          %v5321 = vunpack.c.h.b16 %v4430
          %v5322 = vunpack.c.l.b16 %v4431
          %v5323 = vunpack.c.l.b16 %v4432
          %v5324 = vunpack.c.h.b16 %v4432
          %v5325 = vunpack.c.l.b16 %v4433
          %v5326 = vunpack.c.h.b16 %v4433
          %v5327 = vunpack.c.l.b16 %v4434
          %v5328 = vunpack.c.l.b16 %v4435
          %v5329 = vunpack.c.h.b16 %v4435
          %v5330 = vunpack.c.l.b16 %v4436
          %v5331 = vunpack.c.h.b16 %v4436
          %v5332 = vunpack.c.l.b16 %v4437
          %v5333 = vunpack.c.l.b16 %v4438
          %v5334 = vunpack.c.h.b16 %v4438
          %v5335 = vunpack.c.l.b16 %v4439
          %v5336 = vunpack.c.h.b16 %v4439
          %v5337 = vunpack.c.l.b16 %v4440
          %v5338 = vunpack.c.l.b16 %v4441
          %v5339 = vunpack.c.h.b16 %v4441
          %v5340 = vunpack.c.l.b16 %v4442
          %v5341 = vunpack.c.h.b16 %v4442
          %v5342 = vunpack.c.l.b16 %v4443
          %v5343 = vunpack.c.l.b16 %v4444
          %v5344 = vunpack.c.h.b16 %v4444
          %v5345 = vunpack.c.l.b16 %v4445
          %v5346 = vunpack.c.h.b16 %v4445
          %v5347 = vunpack.c.l.b16 %v4446
          %v5348 = vunpack.c.l.b16 %v4447
          %v5349 = vunpack.c.h.b16 %v4447
          %v5350 = vunpack.c.l.b16 %v4448
          %v5351 = vunpack.c.h.b16 %v4448
          %v5352 = vunpack.c.l.b16 %v4449
          %v5353 = vunpack.c.l.b16 %v4450
          %v5354 = vunpack.c.h.b16 %v4450
          %v5355 = vunpack.c.l.b16 %v4451
          %v5356 = vunpack.c.h.b16 %v4451
          %v5357 = vunpack.c.l.b16 %v4452
          %v5358 = vunpack.c.l.b16 %v4453
          %v5359 = vunpack.c.h.b16 %v4453
          %v5360 = vunpack.c.l.b16 %v4454
          %v5361 = vunpack.c.h.b16 %v4454
          %v5362 = vunpack.c.l.b16 %v4455
          %v5363 = vunpack.c.l.b16 %v4456
          %v5364 = vunpack.c.h.b16 %v4456
          %v5365 = vunpack.c.l.b16 %v4457
          %v5366 = vunpack.c.h.b16 %v4457
          %v5367 = vunpack.c.l.b16 %v4458
          %v5368 = vunpack.c.l.b16 %v4459
          %v5369 = vunpack.c.h.b16 %v4459
          %v5370 = vunpack.c.l.b16 %v4460
          %v5371 = vunpack.c.h.b16 %v4460
          %v5372 = vunpack.c.l.b16 %v4461
          %v5373 = vunpack.c.l.b16 %v4462
          %v5374 = vunpack.c.h.b16 %v4462
          %v5375 = vunpack.c.l.b16 %v4463
          %v5376 = vunpack.c.h.b16 %v4463
          %v5377 = vunpack.c.l.b16 %v4464
          %v5378 = vunpack.c.l.b16 %v4465
          %v5379 = vunpack.c.h.b16 %v4465
          %v5380 = vunpack.c.l.b16 %v4466
          %v5381 = vunpack.c.h.b16 %v4466
          %v5382 = vunpack.c.l.b16 %v4467
          %v5383 = vunpack.c.l.b16 %v4468
          %v5384 = vunpack.c.h.b16 %v4468
          %v5385 = vunpack.c.l.b16 %v4469
          %v5386 = vunpack.c.h.b16 %v4469
          %v5387 = vunpack.c.l.b16 %v4470
          %v5388 = vunpack.c.l.b16 %v4471
          %v5389 = vunpack.c.h.b16 %v4471
          %v5390 = vunpack.c.l.b16 %v4472
          %v5391 = vunpack.c.h.b16 %v4472
          %v5392 = vunpack.c.l.b16 %v4473
          %v5393 = vunpack.c.l.b16 %v4474
          %v5394 = vunpack.c.h.b16 %v4474
          %v5395 = vunpack.c.l.b16 %v4475
          %v5396 = vunpack.c.h.b16 %v4475
          %v5397 = vunpack.c.l.b16 %v4476
          %v5398 = vunpack.c.l.b16 %v4477
          %v5399 = vunpack.c.h.b16 %v4477
          %v5400 = vunpack.c.l.b16 %v4478
          %v5401 = vunpack.c.h.b16 %v4478
          %v5402 = vunpack.c.l.b16 %v4479
          %v5403 = vunpack.c.l.b16 %v4480
          %v5404 = vunpack.c.h.b16 %v4480
          %v5405 = vunpack.c.l.b16 %v4481
          %v5406 = vunpack.c.h.b16 %v4481
          %v5407 = vunpack.c.l.b16 %v4482
          %v5408 = vunpack.c.l.b16 %v4483
          %v5409 = vunpack.c.h.b16 %v4483
          %v5410 = vunpack.c.l.b16 %v4484
          %v5411 = vunpack.c.h.b16 %v4484
          %v5412 = vunpack.c.l.b16 %v4485
          %v5413 = vunpack.c.l.b16 %v4486
          %v5414 = vunpack.c.h.b16 %v4486
          %v5415 = vunpack.c.l.b16 %v4487
          %v5416 = vunpack.c.h.b16 %v4487
          %v5417 = vunpack.c.l.b16 %v4488
          %v5418 = vunpack.c.l.b16 %v4489
          %v5419 = vunpack.c.h.b16 %v4489
          %v5420 = vunpack.c.l.b16 %v4490
          %v5421 = vunpack.c.h.b16 %v4490
          %v5422 = vunpack.c.l.b16 %v4491
          %v5423 = vunpack.c.l.b16 %v4492
          %v5424 = vunpack.c.h.b16 %v4492
          %v5425 = vunpack.c.l.b16 %v4493
          %v5426 = vunpack.c.h.b16 %v4493
          %v5427 = vunpack.c.l.b16 %v4494
          %v5428 = vunpack.c.l.b16 %v4495
          %v5429 = vunpack.c.h.b16 %v4495
          %v5430 = vunpack.c.l.b16 %v4496
          %v5431 = vunpack.c.h.b16 %v4496
          %v5432 = vunpack.c.l.b16 %v4497
          %v5433 = vunpack.c.l.b16 %v4498
          %v5434 = vunpack.c.h.b16 %v4498
          %v5435 = vunpack.c.l.b16 %v4499
          %v5436 = vunpack.c.h.b16 %v4499
          %v5437 = vunpack.c.l.b16 %v4500
          %v5438 = vunpack.c.l.b16 %v4501
          %v5439 = vunpack.c.h.b16 %v4501
          %v5440 = vunpack.c.l.b16 %v4502
          %v5441 = vunpack.c.h.b16 %v4502
          %v5442 = vunpack.c.l.b16 %v4503
          %v5443 = vunpack.c.l.b16 %v4504
          %v5444 = vunpack.c.h.b16 %v4504
          %v5445 = vunpack.c.l.b16 %v4505
          %v5446 = vunpack.c.h.b16 %v4505
          %v5447 = vunpack.c.l.b16 %v4506
          %v5448 = vunpack.c.l.b16 %v4507
          %v5449 = vunpack.c.h.b16 %v4507
          %v5450 = vunpack.c.l.b16 %v4508
          %v5451 = vunpack.c.h.b16 %v4508
          %v5452 = vunpack.c.l.b16 %v4509
          %v5453 = vunpack.c.l.b16 %v4510
          %v5454 = vunpack.c.h.b16 %v4510
          %v5455 = vunpack.c.l.b16 %v4511
          %v5456 = vunpack.c.h.b16 %v4511
          %v5457 = vunpack.c.l.b16 %v4512
          %v5458 = vunpack.c.l.b16 %v4513
          %v5459 = vunpack.c.h.b16 %v4513
          %v5460 = vunpack.c.l.b16 %v4514
          %v5461 = vunpack.c.h.b16 %v4514
          %v5462 = vunpack.c.l.b16 %v4515
          %v5463 = vunpack.c.l.b16 %v4516
          %v5464 = vunpack.c.h.b16 %v4516
          %v5465 = vunpack.c.l.b16 %v4517
          %v5466 = vunpack.c.h.b16 %v4517
          %v5467 = vunpack.c.l.b16 %v4518
          %v5468 = vunpack.c.l.b16 %v4519
          %v5469 = vunpack.c.h.b16 %v4519
          %v5470 = vunpack.c.l.b16 %v4520
          %v5471 = vunpack.c.h.b16 %v4520
          %v5472 = vunpack.c.l.b16 %v4521
          %v5473 = vunpack.c.l.b16 %v4522
          %v5474 = vunpack.c.h.b16 %v4522
          %v5475 = vunpack.c.l.b16 %v4523
          %v5476 = vunpack.c.h.b16 %v4523
          %v5477 = vunpack.c.l.b16 %v4524
          %v5478 = vunpack.c.l.b16 %v4525
          %v5479 = vunpack.c.h.b16 %v4525
          %v5480 = vunpack.c.l.b16 %v4526
          %v5481 = vunpack.c.h.b16 %v4526
          %v5482 = vunpack.c.l.b16 %v4527
          %v5483 = vunpack.c.l.b16 %v4528
          %v5484 = vunpack.c.h.b16 %v4528
          %v5485 = vunpack.c.l.b16 %v4529
          %v5486 = vunpack.c.h.b16 %v4529
          %v5487 = vunpack.c.l.b16 %v4530
          %v5488 = vunpack.c.l.b16 %v4531
          %v5489 = vunpack.c.h.b16 %v4531
          %v5490 = vunpack.c.l.b16 %v4532
          %v5491 = vunpack.c.h.b16 %v4532
          %v5492 = vunpack.c.l.b16 %v4533
          %v5493 = vunpack.c.l.b16 %v4534
          %v5494 = vunpack.c.h.b16 %v4534
          %v5495 = vunpack.c.l.b16 %v4535
          %v5496 = vunpack.c.h.b16 %v4535
          %v5497 = vunpack.c.l.b16 %v4536
          %v5498 = vunpack.c.l.b16 %v4537
          %v5499 = vunpack.c.h.b16 %v4537
          %v5500 = vunpack.c.l.b16 %v4538
          %v5501 = vunpack.c.h.b16 %v4538
          %v5502 = vunpack.c.l.b16 %v4539
          %v5503 = vunpack.c.l.b16 %v4540
          %v5504 = vunpack.c.h.b16 %v4540
          %v5505 = vunpack.c.l.b16 %v4541
          %v5506 = vunpack.c.h.b16 %v4541
          %v5507 = vunpack.c.l.b16 %v4542
          %v5508 = vunpack.c.l.b16 %v4543
          %v5509 = vunpack.c.h.b16 %v4543
          %v5510 = vunpack.c.l.b16 %v4544
          %v5511 = vunpack.c.h.b16 %v4544
          %v5512 = vunpack.c.l.b16 %v4545
          %v5513 = vunpack.c.l.b16 %v4546
          %v5514 = vunpack.c.h.b16 %v4546
          %v5515 = vunpack.c.l.b16 %v4547
          %v5516 = vunpack.c.h.b16 %v4547
          %v5517 = vunpack.c.l.b16 %v4548
          %v5518 = vunpack.c.l.b16 %v4549
          %v5519 = vunpack.c.h.b16 %v4549
          %v5520 = vunpack.c.l.b16 %v4550
          %v5521 = vunpack.c.h.b16 %v4550
          %v5522 = vunpack.c.l.b16 %v4551
          %v5523 = vunpack.c.l.b16 %v4552
          %v5524 = vunpack.c.h.b16 %v4552
          %v5525 = vunpack.c.l.b16 %v4553
          %v5526 = vunpack.c.h.b16 %v4553
          %v5527 = vunpack.c.l.b16 %v4554
          %v5528 = vunpack.c.l.b16 %v4555
          %v5529 = vunpack.c.h.b16 %v4555
          %v5530 = vunpack.c.l.b16 %v4556
          %v5531 = vunpack.c.h.b16 %v4556
          %v5532 = vunpack.c.l.b16 %v4557
          %v5533 = vunpack.c.l.b16 %v4558
          %v5534 = vunpack.c.h.b16 %v4558
          %v5535 = vunpack.c.l.b16 %v4559
          %v5536 = vunpack.c.h.b16 %v4559
          %v5537 = vunpack.c.l.b16 %v4560
          %v5538 = vunpack.c.l.b16 %v4561
          %v5539 = vunpack.c.h.b16 %v4561
          %v5540 = vunpack.c.l.b16 %v4562
          %v5541 = vunpack.c.h.b16 %v4562
          %v5542 = vunpack.c.l.b16 %v4563
          %v5543 = vunpack.c.l.b16 %v4564
          %v5544 = vunpack.c.h.b16 %v4564
          %v5545 = vunpack.c.l.b16 %v4565
          %v5546 = vunpack.c.h.b16 %v4565
          %v5547 = vunpack.c.l.b16 %v4566
          %v5548 = vunpack.c.l.b16 %v4567
          %v5549 = vunpack.c.h.b16 %v4567
          %v5550 = vunpack.c.l.b16 %v4568
          %v5551 = vunpack.c.h.b16 %v4568
          %v5552 = vunpack.c.l.b16 %v4569
          %v5553 = vunpack.c.l.b16 %v4570
          %v5554 = vunpack.c.h.b16 %v4570
          %v5555 = vunpack.c.l.b16 %v4571
          %v5556 = vunpack.c.h.b16 %v4571
          %v5557 = vunpack.c.l.b16 %v4572
          %v5558 = vunpack.c.l.b16 %v4573
          %v5559 = vunpack.c.h.b16 %v4573
          %v5560 = vunpack.c.l.b16 %v4574
          %v5561 = vunpack.c.h.b16 %v4574
          %v5562 = vunpack.c.l.b16 %v4575
          %v5563 = vunpack.c.l.b16 %v4576
          %v5564 = vunpack.c.h.b16 %v4576
          %v5565 = vunpack.c.l.b16 %v4577
          %v5566 = vunpack.c.h.b16 %v4577
          %v5567 = vunpack.c.l.b16 %v4578
          %v5568 = vunpack.c.l.b16 %v4579
          %v5569 = vunpack.c.h.b16 %v4579
          %v5570 = vunpack.c.l.b16 %v4580
          %v5571 = vunpack.c.h.b16 %v4580
          %v5572 = vunpack.c.l.b16 %v4581
          %v5573 = vunpack.c.l.b16 %v4582
          %v5574 = vunpack.c.h.b16 %v4582
          %v5575 = vunpack.c.l.b16 %v4583
          %v5576 = vunpack.c.h.b16 %v4583
          %v5577 = vunpack.c.l.b16 %v4584
          %v5578 = vunpack.c.l.b16 %v4585
          %v5579 = vunpack.c.h.b16 %v4585
          %v5580 = vunpack.c.l.b16 %v4586
          %v5581 = vunpack.c.h.b16 %v4586
          %v5582 = vunpack.c.l.b16 %v4587
          %v5583 = vunpack.c.l.b16 %v4588
          %v5584 = vunpack.c.h.b16 %v4588
          %v5585 = vunpack.c.l.b16 %v4589
          %v5586 = vunpack.c.h.b16 %v4589
          %v5587 = vunpack.c.l.b16 %v4590
          %v5588 = vunpack.c.l.b16 %v4591
          %v5589 = vunpack.c.h.b16 %v4591
          %v5590 = vunpack.c.l.b16 %v4592
          %v5591 = vunpack.c.h.b16 %v4592
          %v5592 = vunpack.c.l.b16 %v4593
          %v5593 = vunpack.c.l.b16 %v4594
          %v5594 = vunpack.c.h.b16 %v4594
          %v5595 = vunpack.c.l.b16 %v4595
          %v5596 = vunpack.c.h.b16 %v4595
          %v5597 = vunpack.c.l.b16 %v4596
          %v5598 = vunpack.c.l.b16 %v4597
          %v5599 = vunpack.c.h.b16 %v4597
          %v5600 = vunpack.c.l.b16 %v4598
          %v5601 = vunpack.c.h.b16 %v4598
          %v5602 = vunpack.c.l.b16 %v4599
          %v5603 = vunpack.c.l.b16 %v4600
          %v5604 = vunpack.c.h.b16 %v4600
          %v5605 = vunpack.c.l.b16 %v4601
          %v5606 = vunpack.c.h.b16 %v4601
          %v5607 = vunpack.c.l.b16 %v4602
          %v5608 = vunpack.c.l.b16 %v4603
          %v5609 = vunpack.c.h.b16 %v4603
          %v5610 = vunpack.c.l.b16 %v4604
          %v5611 = vunpack.c.h.b16 %v4604
          %v5612 = vunpack.c.l.b16 %v4605
          %v5613 = vunpack.c.l.b16 %v4606
          %v5614 = vunpack.c.h.b16 %v4606
          %v5615 = vunpack.c.l.b16 %v4607
          %v5616 = vunpack.c.h.b16 %v4607
          %v5617 = vunpack.c.l.b16 %v4608
          %v5618 = vunpack.c.l.b16 %v4609
          %v5619 = vunpack.c.h.b16 %v4609
          %v5620 = vunpack.c.l.b16 %v4610
          %v5621 = vunpack.c.h.b16 %v4610
          %v5622 = vunpack.c.l.b16 %v4611
          %v5623 = vunpack.c.l.b16 %v4612
          %v5624 = vunpack.c.h.b16 %v4612
          %v5625 = vunpack.c.l.b16 %v4613
          %v5626 = vunpack.c.h.b16 %v4613
          %v5627 = vunpack.c.l.b16 %v4614
          %v5628 = vunpack.c.l.b16 %v4615
          %v5629 = vunpack.c.h.b16 %v4615
          %v5630 = vunpack.c.l.b16 %v4616
          %v5631 = vunpack.c.h.b16 %v4616
          %v5632 = vunpack.c.l.b16 %v4617
          %v5633 = vunpack.c.l.b16 %v4618
          %v5634 = vunpack.c.h.b16 %v4618
          %v5635 = vunpack.c.l.b16 %v4619
          %v5636 = vunpack.c.h.b16 %v4619
          %v5637 = vunpack.c.l.b16 %v4620
          %v5638 = vunpack.c.l.b16 %v4621
          %v5639 = vunpack.c.h.b16 %v4621
          %v5640 = vunpack.c.l.b16 %v4622
          %v5641 = vunpack.c.h.b16 %v4622
          %v5642 = vunpack.c.l.b16 %v4623
          %v5643 = vunpack.c.l.b16 %v4624
          %v5644 = vunpack.c.h.b16 %v4624
          %v5645 = vunpack.c.l.b16 %v4625
          %v5646 = vunpack.c.h.b16 %v4625
          %v5647 = vunpack.c.l.b16 %v4626
          %v5648 = vunpack.c.l.b16 %v4627
          %v5649 = vunpack.c.h.b16 %v4627
          %v5650 = vunpack.c.l.b16 %v4628
          %v5651 = vunpack.c.h.b16 %v4628
          %v5652 = vunpack.c.l.b16 %v4629
          %v5653 = vunpack.c.l.b16 %v4630
          %v5654 = vunpack.c.h.b16 %v4630
          %v5655 = vunpack.c.l.b16 %v4631
          %v5656 = vunpack.c.h.b16 %v4631
          %v5657 = vunpack.c.l.b16 %v4632
          %v5658 = vunpack.c.l.b16 %v4633
          %v5659 = vunpack.c.h.b16 %v4633
          %v5660 = vunpack.c.l.b16 %v4634
          %v5661 = vunpack.c.h.b16 %v4634
          %v5662 = vunpack.c.l.b16 %v4635
          %v5663 = vunpack.c.l.b16 %v4636
          %v5664 = vunpack.c.h.b16 %v4636
          %v5665 = vunpack.c.l.b16 %v4637
          %v5666 = vunpack.c.h.b16 %v4637
          %v5667 = vunpack.c.l.b16 %v4638
          %v5668 = vunpack.c.l.b16 %v4639
          %v5669 = vunpack.c.h.b16 %v4639
          %v5670 = vunpack.c.l.b16 %v4640
          %v5671 = vunpack.c.h.b16 %v4640
          %v5672 = vunpack.c.l.b16 %v4641
          %v5673 = vunpack.c.l.b16 %v4642
          %v5674 = vunpack.c.h.b16 %v4642
          %v5675 = vunpack.c.l.b16 %v4643
          %v5676 = vunpack.c.h.b16 %v4643
          %v5677 = vunpack.c.l.b16 %v4644
          %v5678 = vunpack.c.l.b16 %v4645
          %v5679 = vunpack.c.h.b16 %v4645
          %v5680 = vunpack.c.l.b16 %v4646
          %v5681 = vunpack.c.h.b16 %v4646
          %v5682 = vunpack.c.l.b16 %v4647
          %v5683 = vunpack.c.l.b16 %v4648
          %v5684 = vunpack.c.h.b16 %v4648
          %v5685 = vunpack.c.l.b16 %v4649
          %v5686 = vunpack.c.h.b16 %v4649
          %v5687 = vunpack.c.l.b16 %v4650
          %v5688 = vunpack.c.l.b16 %v4651
          %v5689 = vunpack.c.h.b16 %v4651
          %v5690 = vunpack.c.l.b16 %v4652
          %v5691 = vunpack.c.h.b16 %v4652
          %v5692 = vunpack.c.l.b16 %v4653
          %v5693 = vunpack.c.l.b16 %v4654
          %v5694 = vunpack.c.h.b16 %v4654
          %v5695 = vunpack.c.l.b16 %v4655
          %v5696 = vunpack.c.h.b16 %v4655
          %v5697 = vunpack.c.l.b16 %v4656
          %v5698 = vunpack.c.l.b16 %v4657
          %v5699 = vunpack.c.h.b16 %v4657
          %v5700 = vunpack.c.l.b16 %v4658
          %v5701 = vunpack.c.h.b16 %v4658
          %v5702 = vunpack.c.l.b16 %v4659
          %v5703 = vunpack.c.l.b16 %v4660
          %v5704 = vunpack.c.h.b16 %v4660
          %v5705 = vunpack.c.l.b16 %v4661
          %v5706 = vunpack.c.h.b16 %v4661
          %v5707 = vunpack.c.l.b16 %v4662
          %v5708 = vunpack.c.l.b16 %v4663
          %v5709 = vunpack.c.h.b16 %v4663
          %v5710 = vunpack.c.l.b16 %v4664
          %v5711 = vunpack.c.h.b16 %v4664
          %v5712 = vunpack.c.l.b16 %v4665
          %v5713 = vunpack.c.l.b16 %v4666
          %v5714 = vunpack.c.h.b16 %v4666
          %v5715 = vunpack.c.l.b16 %v4667
          %v5716 = vunpack.c.h.b16 %v4667
          %v5717 = vunpack.c.l.b16 %v4668
          %v5718 = vunpack.c.l.b16 %v4669
          %v5719 = vunpack.c.h.b16 %v4669
          %v5720 = vunpack.c.l.b16 %v4670
          %v5721 = vunpack.c.h.b16 %v4670
          %v5722 = vunpack.c.l.b16 %v4671
          %v5723 = vpack.c.b16 %v5088, %v5083
          %v5724 = vpack.c.b16 %v5089, %v5084
          %v5725 = vpack.c.b16 %v5090, %v5085
          %v5726 = vpack.c.b16 %v5091, %v5086
          %v5727 = vpack.c.b16 %v5092, %v5087
          %v5728 = vpack.c.b16 %v5098, %v5093
          %v5729 = vpack.c.b16 %v5099, %v5094
          %v5730 = vpack.c.b16 %v5100, %v5095
          %v5731 = vpack.c.b16 %v5101, %v5096
          %v5732 = vpack.c.b16 %v5102, %v5097
          %v5733 = vpack.c.b16 %v5108, %v5103
          %v5734 = vpack.c.b16 %v5109, %v5104
          %v5735 = vpack.c.b16 %v5110, %v5105
          %v5736 = vpack.c.b16 %v5111, %v5106
          %v5737 = vpack.c.b16 %v5112, %v5107
          %v5738 = vpack.c.b16 %v5118, %v5113
          %v5739 = vpack.c.b16 %v5119, %v5114
          %v5740 = vpack.c.b16 %v5120, %v5115
          %v5741 = vpack.c.b16 %v5121, %v5116
          %v5742 = vpack.c.b16 %v5122, %v5117
          %v5743 = vpack.c.b16 %v5128, %v5123
          %v5744 = vpack.c.b16 %v5129, %v5124
          %v5745 = vpack.c.b16 %v5130, %v5125
          %v5746 = vpack.c.b16 %v5131, %v5126
          %v5747 = vpack.c.b16 %v5132, %v5127
          %v5748 = vpack.c.b16 %v5138, %v5133
          %v5749 = vpack.c.b16 %v5139, %v5134
          %v5750 = vpack.c.b16 %v5140, %v5135
          %v5751 = vpack.c.b16 %v5141, %v5136
          %v5752 = vpack.c.b16 %v5142, %v5137
          %v5753 = vpack.c.b16 %v5148, %v5143
          %v5754 = vpack.c.b16 %v5149, %v5144
          %v5755 = vpack.c.b16 %v5150, %v5145
          %v5756 = vpack.c.b16 %v5151, %v5146
          %v5757 = vpack.c.b16 %v5152, %v5147
          %v5758 = vpack.c.b16 %v5158, %v5153
          %v5759 = vpack.c.b16 %v5159, %v5154
          %v5760 = vpack.c.b16 %v5160, %v5155
          %v5761 = vpack.c.b16 %v5161, %v5156
          %v5762 = vpack.c.b16 %v5162, %v5157
          %v5763 = vpack.c.b16 %v5168, %v5163
          %v5764 = vpack.c.b16 %v5169, %v5164
          %v5765 = vpack.c.b16 %v5170, %v5165
          %v5766 = vpack.c.b16 %v5171, %v5166
          %v5767 = vpack.c.b16 %v5172, %v5167
          %v5768 = vpack.c.b16 %v5178, %v5173
          %v5769 = vpack.c.b16 %v5179, %v5174
          %v5770 = vpack.c.b16 %v5180, %v5175
          %v5771 = vpack.c.b16 %v5181, %v5176
          %v5772 = vpack.c.b16 %v5182, %v5177
          %v5773 = vpack.c.b16 %v5188, %v5183
          %v5774 = vpack.c.b16 %v5189, %v5184
          %v5775 = vpack.c.b16 %v5190, %v5185
          %v5776 = vpack.c.b16 %v5191, %v5186
          %v5777 = vpack.c.b16 %v5192, %v5187
          %v5778 = vpack.c.b16 %v5198, %v5193
          %v5779 = vpack.c.b16 %v5199, %v5194
          %v5780 = vpack.c.b16 %v5200, %v5195
          %v5781 = vpack.c.b16 %v5201, %v5196
          %v5782 = vpack.c.b16 %v5202, %v5197
          %v5783 = vpack.c.b16 %v5208, %v5203
          %v5784 = vpack.c.b16 %v5209, %v5204
          %v5785 = vpack.c.b16 %v5210, %v5205
          %v5786 = vpack.c.b16 %v5211, %v5206
          %v5787 = vpack.c.b16 %v5212, %v5207
          %v5788 = vpack.c.b16 %v5218, %v5213
          %v5789 = vpack.c.b16 %v5219, %v5214
          %v5790 = vpack.c.b16 %v5220, %v5215
          %v5791 = vpack.c.b16 %v5221, %v5216
          %v5792 = vpack.c.b16 %v5222, %v5217
          %v5793 = vpack.c.b16 %v5228, %v5223
          %v5794 = vpack.c.b16 %v5229, %v5224
          %v5795 = vpack.c.b16 %v5230, %v5225
          %v5796 = vpack.c.b16 %v5231, %v5226
          %v5797 = vpack.c.b16 %v5232, %v5227
          %v5798 = vpack.c.b16 %v5238, %v5233
          %v5799 = vpack.c.b16 %v5239, %v5234
          %v5800 = vpack.c.b16 %v5240, %v5235
          %v5801 = vpack.c.b16 %v5241, %v5236
          %v5802 = vpack.c.b16 %v5242, %v5237
          %v5803 = vpack.c.b16 %v5248, %v5243
          %v5804 = vpack.c.b16 %v5249, %v5244
          %v5805 = vpack.c.b16 %v5250, %v5245
          %v5806 = vpack.c.b16 %v5251, %v5246
          %v5807 = vpack.c.b16 %v5252, %v5247
          %v5808 = vpack.c.b16 %v5258, %v5253
          %v5809 = vpack.c.b16 %v5259, %v5254
          %v5810 = vpack.c.b16 %v5260, %v5255
          %v5811 = vpack.c.b16 %v5261, %v5256
          %v5812 = vpack.c.b16 %v5262, %v5257
          %v5813 = vpack.c.b16 %v5268, %v5263
          %v5814 = vpack.c.b16 %v5269, %v5264
          %v5815 = vpack.c.b16 %v5270, %v5265
          %v5816 = vpack.c.b16 %v5271, %v5266
          %v5817 = vpack.c.b16 %v5272, %v5267
          %v5818 = vpack.c.b16 %v5278, %v5273
          %v5819 = vpack.c.b16 %v5279, %v5274
          %v5820 = vpack.c.b16 %v5280, %v5275
          %v5821 = vpack.c.b16 %v5281, %v5276
          %v5822 = vpack.c.b16 %v5282, %v5277
          %v5823 = vpack.c.b16 %v5288, %v5283
          %v5824 = vpack.c.b16 %v5289, %v5284
          %v5825 = vpack.c.b16 %v5290, %v5285
          %v5826 = vpack.c.b16 %v5291, %v5286
          %v5827 = vpack.c.b16 %v5292, %v5287
          %v5828 = vpack.c.b16 %v5298, %v5293
          %v5829 = vpack.c.b16 %v5299, %v5294
          %v5830 = vpack.c.b16 %v5300, %v5295
          %v5831 = vpack.c.b16 %v5301, %v5296
          %v5832 = vpack.c.b16 %v5302, %v5297
          %v5833 = vpack.c.b16 %v5308, %v5303
          %v5834 = vpack.c.b16 %v5309, %v5304
          %v5835 = vpack.c.b16 %v5310, %v5305
          %v5836 = vpack.c.b16 %v5311, %v5306
          %v5837 = vpack.c.b16 %v5312, %v5307
          %v5838 = vpack.c.b16 %v5318, %v5313
          %v5839 = vpack.c.b16 %v5319, %v5314
          %v5840 = vpack.c.b16 %v5320, %v5315
          %v5841 = vpack.c.b16 %v5321, %v5316
          %v5842 = vpack.c.b16 %v5322, %v5317
          %v5843 = vpack.c.b16 %v5328, %v5323
          %v5844 = vpack.c.b16 %v5329, %v5324
          %v5845 = vpack.c.b16 %v5330, %v5325
          %v5846 = vpack.c.b16 %v5331, %v5326
          %v5847 = vpack.c.b16 %v5332, %v5327
          %v5848 = vpack.c.b16 %v5338, %v5333
          %v5849 = vpack.c.b16 %v5339, %v5334
          %v5850 = vpack.c.b16 %v5340, %v5335
          %v5851 = vpack.c.b16 %v5341, %v5336
          %v5852 = vpack.c.b16 %v5342, %v5337
          %v5853 = vpack.c.b16 %v5348, %v5343
          %v5854 = vpack.c.b16 %v5349, %v5344
          %v5855 = vpack.c.b16 %v5350, %v5345
          %v5856 = vpack.c.b16 %v5351, %v5346
          %v5857 = vpack.c.b16 %v5352, %v5347
          %v5858 = vpack.c.b16 %v5358, %v5353
          %v5859 = vpack.c.b16 %v5359, %v5354
          %v5860 = vpack.c.b16 %v5360, %v5355
          %v5861 = vpack.c.b16 %v5361, %v5356
          %v5862 = vpack.c.b16 %v5362, %v5357
          %v5863 = vpack.c.b16 %v5368, %v5363
          %v5864 = vpack.c.b16 %v5369, %v5364
          %v5865 = vpack.c.b16 %v5370, %v5365
          %v5866 = vpack.c.b16 %v5371, %v5366
          %v5867 = vpack.c.b16 %v5372, %v5367
          %v5868 = vpack.c.b16 %v5378, %v5373
          %v5869 = vpack.c.b16 %v5379, %v5374
          %v5870 = vpack.c.b16 %v5380, %v5375
          %v5871 = vpack.c.b16 %v5381, %v5376
          %v5872 = vpack.c.b16 %v5382, %v5377
          %v5873 = vpack.c.b16 %v5388, %v5383
          %v5874 = vpack.c.b16 %v5389, %v5384
          %v5875 = vpack.c.b16 %v5390, %v5385
          %v5876 = vpack.c.b16 %v5391, %v5386
          %v5877 = vpack.c.b16 %v5392, %v5387
          %v5878 = vpack.c.b16 %v5398, %v5393
          %v5879 = vpack.c.b16 %v5399, %v5394
          %v5880 = vpack.c.b16 %v5400, %v5395
          %v5881 = vpack.c.b16 %v5401, %v5396
          %v5882 = vpack.c.b16 %v5402, %v5397
          %v5883 = vpack.c.b16 %v5408, %v5403
          %v5884 = vpack.c.b16 %v5409, %v5404
          %v5885 = vpack.c.b16 %v5410, %v5405
          %v5886 = vpack.c.b16 %v5411, %v5406
          %v5887 = vpack.c.b16 %v5412, %v5407
          %v5888 = vpack.c.b16 %v5418, %v5413
          %v5889 = vpack.c.b16 %v5419, %v5414
          %v5890 = vpack.c.b16 %v5420, %v5415
          %v5891 = vpack.c.b16 %v5421, %v5416
          %v5892 = vpack.c.b16 %v5422, %v5417
          %v5893 = vpack.c.b16 %v5428, %v5423
          %v5894 = vpack.c.b16 %v5429, %v5424
          %v5895 = vpack.c.b16 %v5430, %v5425
          %v5896 = vpack.c.b16 %v5431, %v5426
          %v5897 = vpack.c.b16 %v5432, %v5427
          %v5898 = vpack.c.b16 %v5438, %v5433
          %v5899 = vpack.c.b16 %v5439, %v5434
          %v5900 = vpack.c.b16 %v5440, %v5435
          %v5901 = vpack.c.b16 %v5441, %v5436
          %v5902 = vpack.c.b16 %v5442, %v5437
          %v5903 = vpack.c.b16 %v5448, %v5443
          %v5904 = vpack.c.b16 %v5449, %v5444
          %v5905 = vpack.c.b16 %v5450, %v5445
          %v5906 = vpack.c.b16 %v5451, %v5446
          %v5907 = vpack.c.b16 %v5452, %v5447
          %v5908 = vpack.c.b16 %v5458, %v5453
          %v5909 = vpack.c.b16 %v5459, %v5454
          %v5910 = vpack.c.b16 %v5460, %v5455
          %v5911 = vpack.c.b16 %v5461, %v5456
          %v5912 = vpack.c.b16 %v5462, %v5457
          %v5913 = vpack.c.b16 %v5468, %v5463
          %v5914 = vpack.c.b16 %v5469, %v5464
          %v5915 = vpack.c.b16 %v5470, %v5465
          %v5916 = vpack.c.b16 %v5471, %v5466
          %v5917 = vpack.c.b16 %v5472, %v5467
          %v5918 = vpack.c.b16 %v5478, %v5473
          %v5919 = vpack.c.b16 %v5479, %v5474
          %v5920 = vpack.c.b16 %v5480, %v5475
          %v5921 = vpack.c.b16 %v5481, %v5476
          %v5922 = vpack.c.b16 %v5482, %v5477
          %v5923 = vpack.c.b16 %v5488, %v5483
          %v5924 = vpack.c.b16 %v5489, %v5484
          %v5925 = vpack.c.b16 %v5490, %v5485
          %v5926 = vpack.c.b16 %v5491, %v5486
          %v5927 = vpack.c.b16 %v5492, %v5487
          %v5928 = vpack.c.b16 %v5498, %v5493
          %v5929 = vpack.c.b16 %v5499, %v5494
          %v5930 = vpack.c.b16 %v5500, %v5495
          %v5931 = vpack.c.b16 %v5501, %v5496
          %v5932 = vpack.c.b16 %v5502, %v5497
          %v5933 = vpack.c.b16 %v5508, %v5503
          %v5934 = vpack.c.b16 %v5509, %v5504
          %v5935 = vpack.c.b16 %v5510, %v5505
          %v5936 = vpack.c.b16 %v5511, %v5506
          %v5937 = vpack.c.b16 %v5512, %v5507
          %v5938 = vpack.c.b16 %v5518, %v5513
          %v5939 = vpack.c.b16 %v5519, %v5514
          %v5940 = vpack.c.b16 %v5520, %v5515
          %v5941 = vpack.c.b16 %v5521, %v5516
          %v5942 = vpack.c.b16 %v5522, %v5517
          %v5943 = vpack.c.b16 %v5528, %v5523
          %v5944 = vpack.c.b16 %v5529, %v5524
          %v5945 = vpack.c.b16 %v5530, %v5525
          %v5946 = vpack.c.b16 %v5531, %v5526
          %v5947 = vpack.c.b16 %v5532, %v5527
          %v5948 = vpack.c.b16 %v5538, %v5533
          %v5949 = vpack.c.b16 %v5539, %v5534
          %v5950 = vpack.c.b16 %v5540, %v5535
          %v5951 = vpack.c.b16 %v5541, %v5536
          %v5952 = vpack.c.b16 %v5542, %v5537
          %v5953 = vpack.c.b16 %v5548, %v5543
          %v5954 = vpack.c.b16 %v5549, %v5544
          %v5955 = vpack.c.b16 %v5550, %v5545
          %v5956 = vpack.c.b16 %v5551, %v5546
          %v5957 = vpack.c.b16 %v5552, %v5547
          %v5958 = vpack.c.b16 %v5558, %v5553
          %v5959 = vpack.c.b16 %v5559, %v5554
          %v5960 = vpack.c.b16 %v5560, %v5555
          %v5961 = vpack.c.b16 %v5561, %v5556
          %v5962 = vpack.c.b16 %v5562, %v5557
          %v5963 = vpack.c.b16 %v5568, %v5563
          %v5964 = vpack.c.b16 %v5569, %v5564
          %v5965 = vpack.c.b16 %v5570, %v5565
          %v5966 = vpack.c.b16 %v5571, %v5566
          %v5967 = vpack.c.b16 %v5572, %v5567
          %v5968 = vpack.c.b16 %v5578, %v5573
          %v5969 = vpack.c.b16 %v5579, %v5574
          %v5970 = vpack.c.b16 %v5580, %v5575
          %v5971 = vpack.c.b16 %v5581, %v5576
          %v5972 = vpack.c.b16 %v5582, %v5577
          %v5973 = vpack.c.b16 %v5588, %v5583
          %v5974 = vpack.c.b16 %v5589, %v5584
          %v5975 = vpack.c.b16 %v5590, %v5585
          %v5976 = vpack.c.b16 %v5591, %v5586
          %v5977 = vpack.c.b16 %v5592, %v5587
          %v5978 = vpack.c.b16 %v5598, %v5593
          %v5979 = vpack.c.b16 %v5599, %v5594
          %v5980 = vpack.c.b16 %v5600, %v5595
          %v5981 = vpack.c.b16 %v5601, %v5596
          %v5982 = vpack.c.b16 %v5602, %v5597
          %v5983 = vpack.c.b16 %v5608, %v5603
          %v5984 = vpack.c.b16 %v5609, %v5604
          %v5985 = vpack.c.b16 %v5610, %v5605
          %v5986 = vpack.c.b16 %v5611, %v5606
          %v5987 = vpack.c.b16 %v5612, %v5607
          %v5988 = vpack.c.b16 %v5618, %v5613
          %v5989 = vpack.c.b16 %v5619, %v5614
          %v5990 = vpack.c.b16 %v5620, %v5615
          %v5991 = vpack.c.b16 %v5621, %v5616
          %v5992 = vpack.c.b16 %v5622, %v5617
          %v5993 = vpack.c.b16 %v5628, %v5623
          %v5994 = vpack.c.b16 %v5629, %v5624
          %v5995 = vpack.c.b16 %v5630, %v5625
          %v5996 = vpack.c.b16 %v5631, %v5626
          %v5997 = vpack.c.b16 %v5632, %v5627
          %v5998 = vpack.c.b16 %v5638, %v5633
          %v5999 = vpack.c.b16 %v5639, %v5634
          %v6000 = vpack.c.b16 %v5640, %v5635
          %v6001 = vpack.c.b16 %v5641, %v5636
          %v6002 = vpack.c.b16 %v5642, %v5637
          %v6003 = vpack.c.b16 %v5648, %v5643
          %v6004 = vpack.c.b16 %v5649, %v5644
          %v6005 = vpack.c.b16 %v5650, %v5645
          %v6006 = vpack.c.b16 %v5651, %v5646
          %v6007 = vpack.c.b16 %v5652, %v5647
          %v6008 = vpack.c.b16 %v5658, %v5653
          %v6009 = vpack.c.b16 %v5659, %v5654
          %v6010 = vpack.c.b16 %v5660, %v5655
          %v6011 = vpack.c.b16 %v5661, %v5656
          %v6012 = vpack.c.b16 %v5662, %v5657
          %v6013 = vpack.c.b16 %v5668, %v5663
          %v6014 = vpack.c.b16 %v5669, %v5664
          %v6015 = vpack.c.b16 %v5670, %v5665
          %v6016 = vpack.c.b16 %v5671, %v5666
          %v6017 = vpack.c.b16 %v5672, %v5667
          %v6018 = vpack.c.b16 %v5678, %v5673
          %v6019 = vpack.c.b16 %v5679, %v5674
          %v6020 = vpack.c.b16 %v5680, %v5675
          %v6021 = vpack.c.b16 %v5681, %v5676
          %v6022 = vpack.c.b16 %v5682, %v5677
          %v6023 = vpack.c.b16 %v5688, %v5683
          %v6024 = vpack.c.b16 %v5689, %v5684
          %v6025 = vpack.c.b16 %v5690, %v5685
          %v6026 = vpack.c.b16 %v5691, %v5686
          %v6027 = vpack.c.b16 %v5692, %v5687
          %v6028 = vpack.c.b16 %v5698, %v5693
          %v6029 = vpack.c.b16 %v5699, %v5694
          %v6030 = vpack.c.b16 %v5700, %v5695
          %v6031 = vpack.c.b16 %v5701, %v5696
          %v6032 = vpack.c.b16 %v5702, %v5697
          %v6033 = vpack.c.b16 %v5708, %v5703
          %v6034 = vpack.c.b16 %v5709, %v5704
          %v6035 = vpack.c.b16 %v5710, %v5705
          %v6036 = vpack.c.b16 %v5711, %v5706
          %v6037 = vpack.c.b16 %v5712, %v5707
          %v6038 = vpack.c.b16 %v5718, %v5713
          %v6039 = vpack.c.b16 %v5719, %v5714
          %v6040 = vpack.c.b16 %v5720, %v5715
          %v6041 = vpack.c.b16 %v5721, %v5716
          %v6042 = vpack.c.b16 %v5722, %v5717
          %6363 = vmatprep.subr.bf16.mxu0 %v5759
          %6364 = vmatpush1.bf16.msra.mxu0 %v5758
          %6365 = vmatprep.subr.bf16.mxu0 %v5754
          %6366 = vmatpush1.bf16.msra.mxu0 %v5753
          %6367 = vmatprep.subr.bf16.mxu0 %v5749
          %6368 = vmatpush1.bf16.msra.mxu0 %v5748
          %6369 = vmatprep.subr.bf16.mxu0 %v5744
          %6370 = vmatpush1.bf16.msra.mxu0 %v5743
          %6371 = vmatprep.subr.bf16.mxu0 %v5739
          %6372 = vmatpush1.bf16.msra.mxu0 %v5738
          %6373 = vmatprep.subr.bf16.mxu0 %v5734
          %6374 = vmatpush1.bf16.msra.mxu0 %v5733
          %6375 = vmatprep.subr.bf16.mxu0 %v5729
          %6376 = vmatpush1.bf16.msra.mxu0 %v5728
          %6377 = vmatprep.subr.bf16.mxu0 %v5724
          %6378 = vmatpush1.bf16.msra.mxu0 %v5723
          %6379 = vmatprep.subr.bf16.mxu0 %v5799
          %6380 = vmatpush2.bf16.msra.mxu0 %v5798
          %6381 = vmatprep.subr.bf16.mxu0 %v5794
          %6382 = vmatpush2.bf16.msra.mxu0 %v5793
          %6383 = vmatprep.subr.bf16.mxu0 %v5789
          %6384 = vmatpush2.bf16.msra.mxu0 %v5788
          %6385 = vmatprep.subr.bf16.mxu0 %v5784
          %6386 = vmatpush2.bf16.msra.mxu0 %v5783
          %6387 = vmatprep.subr.bf16.mxu0 %v5779
          %6388 = vmatpush2.bf16.msra.mxu0 %v5778
          %6389 = vmatprep.subr.bf16.mxu0 %v5774
          %6390 = vmatpush2.bf16.msra.mxu0 %v5773
          %6391 = vmatprep.subr.bf16.mxu0 %v5769
          %6392 = vmatpush2.bf16.msra.mxu0 %v5768
          %6393 = vmatprep.subr.bf16.mxu0 %v5764
          %6394 = vmatpush2.bf16.msra.mxu0 %v5763
          %6395 = vmatprep.mubr.bf16.mxu0 %v4281
          %6396 = vmatmul.mubr.bf16.gmra.mxu0 %v4280
          %v6397 = vpop.f32.mrf.mxu0
          %v6398 = vadd.f32 %v4677, %v6397
          %v6399 = vpop.f32.mrf.mxu0
          %v6400 = vadd.f32 %v4681, %v6399
          %v6401 = vpop.f32.mrf.mxu0
          %v6402 = vpop.f32.mrf.mxu0
          %6403 = vdwg.mxu0
          %6404 = vmatprep.subr.bf16.mxu0 %v5839
          %6405 = vmatpush1.bf16.msra.mxu0 %v5838
          %6406 = vmatprep.subr.bf16.mxu0 %v5834
          %6407 = vmatpush1.bf16.msra.mxu0 %v5833
          %6408 = vmatprep.subr.bf16.mxu0 %v5829
          %6409 = vmatpush1.bf16.msra.mxu0 %v5828
          %6410 = vmatprep.subr.bf16.mxu0 %v5824
          %6411 = vmatpush1.bf16.msra.mxu0 %v5823
          %6412 = vmatprep.subr.bf16.mxu0 %v5819
          %6413 = vmatpush1.bf16.msra.mxu0 %v5818
          %6414 = vmatprep.subr.bf16.mxu0 %v5814
          %6415 = vmatpush1.bf16.msra.mxu0 %v5813
          %6416 = vmatprep.subr.bf16.mxu0 %v5809
          %6417 = vmatpush1.bf16.msra.mxu0 %v5808
          %6418 = vmatprep.subr.bf16.mxu0 %v5804
          %6419 = vmatpush1.bf16.msra.mxu0 %v5803
          %6420 = vmatprep.subr.bf16.mxu0 %v5879
          %6421 = vmatpush2.bf16.msra.mxu0 %v5878
          %6422 = vmatprep.subr.bf16.mxu0 %v5874
          %6423 = vmatpush2.bf16.msra.mxu0 %v5873
          %6424 = vmatprep.subr.bf16.mxu0 %v5869
          %6425 = vmatpush2.bf16.msra.mxu0 %v5868
          %6426 = vmatprep.subr.bf16.mxu0 %v5864
          %6427 = vmatpush2.bf16.msra.mxu0 %v5863
          %6428 = vmatprep.subr.bf16.mxu0 %v5859
          %6429 = vmatpush2.bf16.msra.mxu0 %v5858
          %6430 = vmatprep.subr.bf16.mxu0 %v5854
          %6431 = vmatpush2.bf16.msra.mxu0 %v5853
          %6432 = vmatprep.subr.bf16.mxu0 %v5849
          %6433 = vmatpush2.bf16.msra.mxu0 %v5848
          %6434 = vmatprep.subr.bf16.mxu0 %v5844
          %6435 = vmatpush2.bf16.msra.mxu0 %v5843
          %6436 = vmatprep.mubr.bf16.mxu0 %v4283
          %6437 = vmatmul.mubr.bf16.gmra.mxu0 %v4282
          %v6438 = vpop.f32.mrf.mxu0
          %v6439 = vadd.f32 %v6398, %v6438
          %v6440 = vpop.f32.mrf.mxu0
          %v6441 = vadd.f32 %v6400, %v6440
          %v6442 = vpop.f32.mrf.mxu0
          %v6443 = vpop.f32.mrf.mxu0
          %6444 = vdwg.mxu0
          %6445 = vmatprep.subr.bf16.mxu0 %v5919
          %6446 = vmatpush1.bf16.msra.mxu0 %v5918
          %6447 = vmatprep.subr.bf16.mxu0 %v5914
          %6448 = vmatpush1.bf16.msra.mxu0 %v5913
          %6449 = vmatprep.subr.bf16.mxu0 %v5909
          %6450 = vmatpush1.bf16.msra.mxu0 %v5908
          %6451 = vmatprep.subr.bf16.mxu0 %v5904
          %6452 = vmatpush1.bf16.msra.mxu0 %v5903
          %6453 = vmatprep.subr.bf16.mxu0 %v5899
          %6454 = vmatpush1.bf16.msra.mxu0 %v5898
          %6455 = vmatprep.subr.bf16.mxu0 %v5894
          %6456 = vmatpush1.bf16.msra.mxu0 %v5893
          %6457 = vmatprep.subr.bf16.mxu0 %v5889
          %6458 = vmatpush1.bf16.msra.mxu0 %v5888
          %6459 = vmatprep.subr.bf16.mxu0 %v5884
          %6460 = vmatpush1.bf16.msra.mxu0 %v5883
          %6461 = vmatprep.subr.bf16.mxu0 %v5959
          %6462 = vmatpush2.bf16.msra.mxu0 %v5958
          %6463 = vmatprep.subr.bf16.mxu0 %v5954
          %6464 = vmatpush2.bf16.msra.mxu0 %v5953
          %6465 = vmatprep.subr.bf16.mxu0 %v5949
          %6466 = vmatpush2.bf16.msra.mxu0 %v5948
          %6467 = vmatprep.subr.bf16.mxu0 %v5944
          %6468 = vmatpush2.bf16.msra.mxu0 %v5943
          %6469 = vmatprep.subr.bf16.mxu0 %v5939
          %6470 = vmatpush2.bf16.msra.mxu0 %v5938
          %6471 = vmatprep.subr.bf16.mxu0 %v5934
          %6472 = vmatpush2.bf16.msra.mxu0 %v5933
          %6473 = vmatprep.subr.bf16.mxu0 %v5929
          %6474 = vmatpush2.bf16.msra.mxu0 %v5928
          %6475 = vmatprep.subr.bf16.mxu0 %v5924
          %6476 = vmatpush2.bf16.msra.mxu0 %v5923
          %6477 = vmatprep.mubr.bf16.mxu0 %v4285
          %6478 = vmatmul.mubr.bf16.gmra.mxu0 %v4284
          %v6479 = vpop.f32.mrf.mxu0
          %v6480 = vadd.f32 %v6439, %v6479
          %v6481 = vpop.f32.mrf.mxu0
          %v6482 = vadd.f32 %v6441, %v6481
          %v6483 = vpop.f32.mrf.mxu0
          %v6484 = vpop.f32.mrf.mxu0
          %6485 = vdwg.mxu0
          %6486 = vmatprep.subr.bf16.mxu0 %v5999
          %6487 = vmatpush1.bf16.msra.mxu0 %v5998
          %6488 = vmatprep.subr.bf16.mxu0 %v5994
          %6489 = vmatpush1.bf16.msra.mxu0 %v5993
          %6490 = vmatprep.subr.bf16.mxu0 %v5989
          %6491 = vmatpush1.bf16.msra.mxu0 %v5988
          %6492 = vmatprep.subr.bf16.mxu0 %v5984
          %6493 = vmatpush1.bf16.msra.mxu0 %v5983
          %6494 = vmatprep.subr.bf16.mxu0 %v5979
          %6495 = vmatpush1.bf16.msra.mxu0 %v5978
          %6496 = vmatprep.subr.bf16.mxu0 %v5974
          %6497 = vmatpush1.bf16.msra.mxu0 %v5973
          %6498 = vmatprep.subr.bf16.mxu0 %v5969
          %6499 = vmatpush1.bf16.msra.mxu0 %v5968
          %6500 = vmatprep.subr.bf16.mxu0 %v5964
          %6501 = vmatpush1.bf16.msra.mxu0 %v5963
          %6502 = vmatprep.subr.bf16.mxu0 %v6039
          %6503 = vmatpush2.bf16.msra.mxu0 %v6038
          %6504 = vmatprep.subr.bf16.mxu0 %v6034
          %6505 = vmatpush2.bf16.msra.mxu0 %v6033
          %6506 = vmatprep.subr.bf16.mxu0 %v6029
          %6507 = vmatpush2.bf16.msra.mxu0 %v6028
          %6508 = vmatprep.subr.bf16.mxu0 %v6024
          %6509 = vmatpush2.bf16.msra.mxu0 %v6023
          %6510 = vmatprep.subr.bf16.mxu0 %v6019
          %6511 = vmatpush2.bf16.msra.mxu0 %v6018
          %6512 = vmatprep.subr.bf16.mxu0 %v6014
          %6513 = vmatpush2.bf16.msra.mxu0 %v6013
          %6514 = vmatprep.subr.bf16.mxu0 %v6009
          %6515 = vmatpush2.bf16.msra.mxu0 %v6008
          %6516 = vmatprep.subr.bf16.mxu0 %v6004
          %6517 = vmatpush2.bf16.msra.mxu0 %v6003
          %6518 = vmatprep.mubr.bf16.mxu0 %v4287
          %6519 = vmatmul.mubr.bf16.gmra.mxu0 %v4286
          %v6520 = vpop.f32.mrf.mxu0
          %v6521 = vadd.f32 %v6480, %v6520
          %v6522 = vpop.f32.mrf.mxu0
          %v6523 = vadd.f32 %v6482, %v6522
          %v6524 = vpop.f32.mrf.mxu0
          %v6525 = vpop.f32.mrf.mxu0
          %6526 = vdwg.mxu0
          %6527 = vmatprep.subr.bf16.mxu0 %v5761
          %6528 = vmatpush1.bf16.msra.mxu0 %v5760
          %6529 = vmatprep.subr.bf16.mxu0 %v5756
          %6530 = vmatpush1.bf16.msra.mxu0 %v5755
          %6531 = vmatprep.subr.bf16.mxu0 %v5751
          %6532 = vmatpush1.bf16.msra.mxu0 %v5750
          %6533 = vmatprep.subr.bf16.mxu0 %v5746
          %6534 = vmatpush1.bf16.msra.mxu0 %v5745
          %6535 = vmatprep.subr.bf16.mxu0 %v5741
          %6536 = vmatpush1.bf16.msra.mxu0 %v5740
          %6537 = vmatprep.subr.bf16.mxu0 %v5736
          %6538 = vmatpush1.bf16.msra.mxu0 %v5735
          %6539 = vmatprep.subr.bf16.mxu0 %v5731
          %6540 = vmatpush1.bf16.msra.mxu0 %v5730
          %6541 = vmatprep.subr.bf16.mxu0 %v5726
          %6542 = vmatpush1.bf16.msra.mxu0 %v5725
          %6543 = vmatprep.subr.bf16.mxu0 %v5801
          %6544 = vmatpush2.bf16.msra.mxu0 %v5800
          %6545 = vmatprep.subr.bf16.mxu0 %v5796
          %6546 = vmatpush2.bf16.msra.mxu0 %v5795
          %6547 = vmatprep.subr.bf16.mxu0 %v5791
          %6548 = vmatpush2.bf16.msra.mxu0 %v5790
          %6549 = vmatprep.subr.bf16.mxu0 %v5786
          %6550 = vmatpush2.bf16.msra.mxu0 %v5785
          %6551 = vmatprep.subr.bf16.mxu0 %v5781
          %6552 = vmatpush2.bf16.msra.mxu0 %v5780
          %6553 = vmatprep.subr.bf16.mxu0 %v5776
          %6554 = vmatpush2.bf16.msra.mxu0 %v5775
          %6555 = vmatprep.subr.bf16.mxu0 %v5771
          %6556 = vmatpush2.bf16.msra.mxu0 %v5770
          %6557 = vmatprep.subr.bf16.mxu0 %v5766
          %6558 = vmatpush2.bf16.msra.mxu0 %v5765
          %6559 = vmatprep.mubr.bf16.mxu0 %v4281
          %6560 = vmatmul.mubr.bf16.gmra.mxu0 %v4280
          %v6561 = vpop.f32.mrf.mxu0
          %v6562 = vadd.f32 %v4685, %v6561
          %v6563 = vpop.f32.mrf.mxu0
          %v6564 = vadd.f32 %v4689, %v6563
          %v6565 = vpop.f32.mrf.mxu0
          %v6566 = vpop.f32.mrf.mxu0
          %6567 = vdwg.mxu0
          %6568 = vmatprep.subr.bf16.mxu0 %v5841
          %6569 = vmatpush1.bf16.msra.mxu0 %v5840
          %6570 = vmatprep.subr.bf16.mxu0 %v5836
          %6571 = vmatpush1.bf16.msra.mxu0 %v5835
          %6572 = vmatprep.subr.bf16.mxu0 %v5831
          %6573 = vmatpush1.bf16.msra.mxu0 %v5830
          %6574 = vmatprep.subr.bf16.mxu0 %v5826
          %6575 = vmatpush1.bf16.msra.mxu0 %v5825
          %6576 = vmatprep.subr.bf16.mxu0 %v5821
          %6577 = vmatpush1.bf16.msra.mxu0 %v5820
          %6578 = vmatprep.subr.bf16.mxu0 %v5816
          %6579 = vmatpush1.bf16.msra.mxu0 %v5815
          %6580 = vmatprep.subr.bf16.mxu0 %v5811
          %6581 = vmatpush1.bf16.msra.mxu0 %v5810
          %6582 = vmatprep.subr.bf16.mxu0 %v5806
          %6583 = vmatpush1.bf16.msra.mxu0 %v5805
          %6584 = vmatprep.subr.bf16.mxu0 %v5881
          %6585 = vmatpush2.bf16.msra.mxu0 %v5880
          %6586 = vmatprep.subr.bf16.mxu0 %v5876
          %6587 = vmatpush2.bf16.msra.mxu0 %v5875
          %6588 = vmatprep.subr.bf16.mxu0 %v5871
          %6589 = vmatpush2.bf16.msra.mxu0 %v5870
          %6590 = vmatprep.subr.bf16.mxu0 %v5866
          %6591 = vmatpush2.bf16.msra.mxu0 %v5865
          %6592 = vmatprep.subr.bf16.mxu0 %v5861
          %6593 = vmatpush2.bf16.msra.mxu0 %v5860
          %6594 = vmatprep.subr.bf16.mxu0 %v5856
          %6595 = vmatpush2.bf16.msra.mxu0 %v5855
          %6596 = vmatprep.subr.bf16.mxu0 %v5851
          %6597 = vmatpush2.bf16.msra.mxu0 %v5850
          %6598 = vmatprep.subr.bf16.mxu0 %v5846
          %6599 = vmatpush2.bf16.msra.mxu0 %v5845
          %6600 = vmatprep.mubr.bf16.mxu0 %v4283
          %6601 = vmatmul.mubr.bf16.gmra.mxu0 %v4282
          %v6602 = vpop.f32.mrf.mxu0
          %v6603 = vadd.f32 %v6562, %v6602
          %v6604 = vpop.f32.mrf.mxu0
          %v6605 = vadd.f32 %v6564, %v6604
          %v6606 = vpop.f32.mrf.mxu0
          %v6607 = vpop.f32.mrf.mxu0
          %6608 = vdwg.mxu0
          %6609 = vmatprep.subr.bf16.mxu0 %v5921
          %6610 = vmatpush1.bf16.msra.mxu0 %v5920
          %6611 = vmatprep.subr.bf16.mxu0 %v5916
          %6612 = vmatpush1.bf16.msra.mxu0 %v5915
          %6613 = vmatprep.subr.bf16.mxu0 %v5911
          %6614 = vmatpush1.bf16.msra.mxu0 %v5910
          %6615 = vmatprep.subr.bf16.mxu0 %v5906
          %6616 = vmatpush1.bf16.msra.mxu0 %v5905
          %6617 = vmatprep.subr.bf16.mxu0 %v5901
          %6618 = vmatpush1.bf16.msra.mxu0 %v5900
          %6619 = vmatprep.subr.bf16.mxu0 %v5896
          %6620 = vmatpush1.bf16.msra.mxu0 %v5895
          %6621 = vmatprep.subr.bf16.mxu0 %v5891
          %6622 = vmatpush1.bf16.msra.mxu0 %v5890
          %6623 = vmatprep.subr.bf16.mxu0 %v5886
          %6624 = vmatpush1.bf16.msra.mxu0 %v5885
          %6625 = vmatprep.subr.bf16.mxu0 %v5961
          %6626 = vmatpush2.bf16.msra.mxu0 %v5960
          %6627 = vmatprep.subr.bf16.mxu0 %v5956
          %6628 = vmatpush2.bf16.msra.mxu0 %v5955
          %6629 = vmatprep.subr.bf16.mxu0 %v5951
          %6630 = vmatpush2.bf16.msra.mxu0 %v5950
          %6631 = vmatprep.subr.bf16.mxu0 %v5946
          %6632 = vmatpush2.bf16.msra.mxu0 %v5945
          %6633 = vmatprep.subr.bf16.mxu0 %v5941
          %6634 = vmatpush2.bf16.msra.mxu0 %v5940
          %6635 = vmatprep.subr.bf16.mxu0 %v5936
          %6636 = vmatpush2.bf16.msra.mxu0 %v5935
          %6637 = vmatprep.subr.bf16.mxu0 %v5931
          %6638 = vmatpush2.bf16.msra.mxu0 %v5930
          %6639 = vmatprep.subr.bf16.mxu0 %v5926
          %6640 = vmatpush2.bf16.msra.mxu0 %v5925
          %6641 = vmatprep.mubr.bf16.mxu0 %v4285
          %6642 = vmatmul.mubr.bf16.gmra.mxu0 %v4284
          %v6643 = vpop.f32.mrf.mxu0
          %v6644 = vadd.f32 %v6603, %v6643
          %v6645 = vpop.f32.mrf.mxu0
          %v6646 = vadd.f32 %v6605, %v6645
          %v6647 = vpop.f32.mrf.mxu0
          %v6648 = vpop.f32.mrf.mxu0
          %6649 = vdwg.mxu0
          %6650 = vmatprep.subr.bf16.mxu0 %v6001
          %6651 = vmatpush1.bf16.msra.mxu0 %v6000
          %6652 = vmatprep.subr.bf16.mxu0 %v5996
          %6653 = vmatpush1.bf16.msra.mxu0 %v5995
          %6654 = vmatprep.subr.bf16.mxu0 %v5991
          %6655 = vmatpush1.bf16.msra.mxu0 %v5990
          %6656 = vmatprep.subr.bf16.mxu0 %v5986
          %6657 = vmatpush1.bf16.msra.mxu0 %v5985
          %6658 = vmatprep.subr.bf16.mxu0 %v5981
          %6659 = vmatpush1.bf16.msra.mxu0 %v5980
          %6660 = vmatprep.subr.bf16.mxu0 %v5976
          %6661 = vmatpush1.bf16.msra.mxu0 %v5975
          %6662 = vmatprep.subr.bf16.mxu0 %v5971
          %6663 = vmatpush1.bf16.msra.mxu0 %v5970
          %6664 = vmatprep.subr.bf16.mxu0 %v5966
          %6665 = vmatpush1.bf16.msra.mxu0 %v5965
          %6666 = vmatprep.subr.bf16.mxu0 %v6041
          %6667 = vmatpush2.bf16.msra.mxu0 %v6040
          %6668 = vmatprep.subr.bf16.mxu0 %v6036
          %6669 = vmatpush2.bf16.msra.mxu0 %v6035
          %6670 = vmatprep.subr.bf16.mxu0 %v6031
          %6671 = vmatpush2.bf16.msra.mxu0 %v6030
          %6672 = vmatprep.subr.bf16.mxu0 %v6026
          %6673 = vmatpush2.bf16.msra.mxu0 %v6025
          %6674 = vmatprep.subr.bf16.mxu0 %v6021
          %6675 = vmatpush2.bf16.msra.mxu0 %v6020
          %6676 = vmatprep.subr.bf16.mxu0 %v6016
          %6677 = vmatpush2.bf16.msra.mxu0 %v6015
          %6678 = vmatprep.subr.bf16.mxu0 %v6011
          %6679 = vmatpush2.bf16.msra.mxu0 %v6010
          %6680 = vmatprep.subr.bf16.mxu0 %v6006
          %6681 = vmatpush2.bf16.msra.mxu0 %v6005
          %6682 = vmatprep.mubr.bf16.mxu0 %v4287
          %6683 = vmatmul.mubr.bf16.gmra.mxu0 %v4286
          %v6684 = vpop.f32.mrf.mxu0
          %v6685 = vadd.f32 %v6644, %v6684
          %v6686 = vpop.f32.mrf.mxu0
          %v6687 = vadd.f32 %v6646, %v6686
          %v6688 = vpop.f32.mrf.mxu0
          %v6689 = vpop.f32.mrf.mxu0
          %6690 = vdwg.mxu0
          %6691 = vmatprep.subr.bf16.mxu0 0
          %6692 = vmatpush1.bf16.msra.mxu0 %v5762
          %6693 = vmatprep.subr.bf16.mxu0 0
          %6694 = vmatpush1.bf16.msra.mxu0 %v5757
          %6695 = vmatprep.subr.bf16.mxu0 0
          %6696 = vmatpush1.bf16.msra.mxu0 %v5752
          %6697 = vmatprep.subr.bf16.mxu0 0
          %6698 = vmatpush1.bf16.msra.mxu0 %v5747
          %6699 = vmatprep.subr.bf16.mxu0 0
          %6700 = vmatpush1.bf16.msra.mxu0 %v5742
          %6701 = vmatprep.subr.bf16.mxu0 0
          %6702 = vmatpush1.bf16.msra.mxu0 %v5737
          %6703 = vmatprep.subr.bf16.mxu0 0
          %6704 = vmatpush1.bf16.msra.mxu0 %v5732
          %6705 = vmatprep.subr.bf16.mxu0 0
          %6706 = vmatpush1.bf16.msra.mxu0 %v5727
          %6707 = vmatprep.subr.bf16.mxu0 0
          %6708 = vmatpush2.bf16.msra.mxu0 %v5802
          %6709 = vmatprep.subr.bf16.mxu0 0
          %6710 = vmatpush2.bf16.msra.mxu0 %v5797
          %6711 = vmatprep.subr.bf16.mxu0 0
          %6712 = vmatpush2.bf16.msra.mxu0 %v5792
          %6713 = vmatprep.subr.bf16.mxu0 0
          %6714 = vmatpush2.bf16.msra.mxu0 %v5787
          %6715 = vmatprep.subr.bf16.mxu0 0
          %6716 = vmatpush2.bf16.msra.mxu0 %v5782
          %6717 = vmatprep.subr.bf16.mxu0 0
          %6718 = vmatpush2.bf16.msra.mxu0 %v5777
          %6719 = vmatprep.subr.bf16.mxu0 0
          %6720 = vmatpush2.bf16.msra.mxu0 %v5772
          %6721 = vmatprep.subr.bf16.mxu0 0
          %6722 = vmatpush2.bf16.msra.mxu0 %v5767
          %6723 = vmatprep.mubr.bf16.mxu0 %v4281
          %6724 = vmatmul.mubr.bf16.gmra.mxu0 %v4280
          %v6725 = vpop.f32.mrf.mxu0
          %v6726 = vadd.f32 %v4693, %v6725
          %v6727 = vpop.f32.mrf.mxu0
          %v6728 = vpop.f32.mrf.mxu0
          %v6729 = vpop.f32.mrf.mxu0
          %6730 = vdwg.mxu0
          %6731 = vmatprep.subr.bf16.mxu0 0
          %6732 = vmatpush1.bf16.msra.mxu0 %v5842
          %6733 = vmatprep.subr.bf16.mxu0 0
          %6734 = vmatpush1.bf16.msra.mxu0 %v5837
          %6735 = vmatprep.subr.bf16.mxu0 0
          %6736 = vmatpush1.bf16.msra.mxu0 %v5832
          %6737 = vmatprep.subr.bf16.mxu0 0
          %6738 = vmatpush1.bf16.msra.mxu0 %v5827
          %6739 = vmatprep.subr.bf16.mxu0 0
          %6740 = vmatpush1.bf16.msra.mxu0 %v5822
          %6741 = vmatprep.subr.bf16.mxu0 0
          %6742 = vmatpush1.bf16.msra.mxu0 %v5817
          %6743 = vmatprep.subr.bf16.mxu0 0
          %6744 = vmatpush1.bf16.msra.mxu0 %v5812
          %6745 = vmatprep.subr.bf16.mxu0 0
          %6746 = vmatpush1.bf16.msra.mxu0 %v5807
          %6747 = vmatprep.subr.bf16.mxu0 0
          %6748 = vmatpush2.bf16.msra.mxu0 %v5882
          %6749 = vmatprep.subr.bf16.mxu0 0
          %6750 = vmatpush2.bf16.msra.mxu0 %v5877
          %6751 = vmatprep.subr.bf16.mxu0 0
          %6752 = vmatpush2.bf16.msra.mxu0 %v5872
          %6753 = vmatprep.subr.bf16.mxu0 0
          %6754 = vmatpush2.bf16.msra.mxu0 %v5867
          %6755 = vmatprep.subr.bf16.mxu0 0
          %6756 = vmatpush2.bf16.msra.mxu0 %v5862
          %6757 = vmatprep.subr.bf16.mxu0 0
          %6758 = vmatpush2.bf16.msra.mxu0 %v5857
          %6759 = vmatprep.subr.bf16.mxu0 0
          %6760 = vmatpush2.bf16.msra.mxu0 %v5852
          %6761 = vmatprep.subr.bf16.mxu0 0
          %6762 = vmatpush2.bf16.msra.mxu0 %v5847
          %6763 = vmatprep.mubr.bf16.mxu0 %v4283
          %6764 = vmatmul.mubr.bf16.gmra.mxu0 %v4282
          %v6765 = vpop.f32.mrf.mxu0
          %v6766 = vadd.f32 %v6726, %v6765
          %v6767 = vpop.f32.mrf.mxu0
          %v6768 = vpop.f32.mrf.mxu0
          %v6769 = vpop.f32.mrf.mxu0
          %6770 = vdwg.mxu0
          %6771 = vmatprep.subr.bf16.mxu0 0
          %6772 = vmatpush1.bf16.msra.mxu0 %v5922
          %6773 = vmatprep.subr.bf16.mxu0 0
          %6774 = vmatpush1.bf16.msra.mxu0 %v5917
          %6775 = vmatprep.subr.bf16.mxu0 0
          %6776 = vmatpush1.bf16.msra.mxu0 %v5912
          %6777 = vmatprep.subr.bf16.mxu0 0
          %6778 = vmatpush1.bf16.msra.mxu0 %v5907
          %6779 = vmatprep.subr.bf16.mxu0 0
          %6780 = vmatpush1.bf16.msra.mxu0 %v5902
          %6781 = vmatprep.subr.bf16.mxu0 0
          %6782 = vmatpush1.bf16.msra.mxu0 %v5897
          %6783 = vmatprep.subr.bf16.mxu0 0
          %6784 = vmatpush1.bf16.msra.mxu0 %v5892
          %6785 = vmatprep.subr.bf16.mxu0 0
          %6786 = vmatpush1.bf16.msra.mxu0 %v5887
          %6787 = vmatprep.subr.bf16.mxu0 0
          %6788 = vmatpush2.bf16.msra.mxu0 %v5962
          %6789 = vmatprep.subr.bf16.mxu0 0
          %6790 = vmatpush2.bf16.msra.mxu0 %v5957
          %6791 = vmatprep.subr.bf16.mxu0 0
          %6792 = vmatpush2.bf16.msra.mxu0 %v5952
          %6793 = vmatprep.subr.bf16.mxu0 0
          %6794 = vmatpush2.bf16.msra.mxu0 %v5947
          %6795 = vmatprep.subr.bf16.mxu0 0
          %6796 = vmatpush2.bf16.msra.mxu0 %v5942
          %6797 = vmatprep.subr.bf16.mxu0 0
          %6798 = vmatpush2.bf16.msra.mxu0 %v5937
          %6799 = vmatprep.subr.bf16.mxu0 0
          %6800 = vmatpush2.bf16.msra.mxu0 %v5932
          %6801 = vmatprep.subr.bf16.mxu0 0
          %6802 = vmatpush2.bf16.msra.mxu0 %v5927
          %6803 = vmatprep.mubr.bf16.mxu0 %v4285
          %6804 = vmatmul.mubr.bf16.gmra.mxu0 %v4284
          %v6805 = vpop.f32.mrf.mxu0
          %v6806 = vadd.f32 %v6766, %v6805
          %v6807 = vpop.f32.mrf.mxu0
          %v6808 = vpop.f32.mrf.mxu0
          %v6809 = vpop.f32.mrf.mxu0
          %6810 = vdwg.mxu0
          %6811 = vmatprep.subr.bf16.mxu0 0
          %6812 = vmatpush1.bf16.msra.mxu0 %v6002
          %6813 = vmatprep.subr.bf16.mxu0 0
          %6814 = vmatpush1.bf16.msra.mxu0 %v5997
          %6815 = vmatprep.subr.bf16.mxu0 0
          %6816 = vmatpush1.bf16.msra.mxu0 %v5992
          %6817 = vmatprep.subr.bf16.mxu0 0
          %6818 = vmatpush1.bf16.msra.mxu0 %v5987
          %6819 = vmatprep.subr.bf16.mxu0 0
          %6820 = vmatpush1.bf16.msra.mxu0 %v5982
          %6821 = vmatprep.subr.bf16.mxu0 0
          %6822 = vmatpush1.bf16.msra.mxu0 %v5977
          %6823 = vmatprep.subr.bf16.mxu0 0
          %6824 = vmatpush1.bf16.msra.mxu0 %v5972
          %6825 = vmatprep.subr.bf16.mxu0 0
          %6826 = vmatpush1.bf16.msra.mxu0 %v5967
          %6827 = vmatprep.subr.bf16.mxu0 0
          %6828 = vmatpush2.bf16.msra.mxu0 %v6042
          %6829 = vmatprep.subr.bf16.mxu0 0
          %6830 = vmatpush2.bf16.msra.mxu0 %v6037
          %6831 = vmatprep.subr.bf16.mxu0 0
          %6832 = vmatpush2.bf16.msra.mxu0 %v6032
          %6833 = vmatprep.subr.bf16.mxu0 0
          %6834 = vmatpush2.bf16.msra.mxu0 %v6027
          %6835 = vmatprep.subr.bf16.mxu0 0
          %6836 = vmatpush2.bf16.msra.mxu0 %v6022
          %6837 = vmatprep.subr.bf16.mxu0 0
          %6838 = vmatpush2.bf16.msra.mxu0 %v6017
          %6839 = vmatprep.subr.bf16.mxu0 0
          %6840 = vmatpush2.bf16.msra.mxu0 %v6012
          %6841 = vmatprep.subr.bf16.mxu0 0
          %6842 = vmatpush2.bf16.msra.mxu0 %v6007
          %6843 = vmatprep.mubr.bf16.mxu0 %v4287
          %6844 = vmatmul.mubr.bf16.gmra.mxu0 %v4286
          %v6845 = vpop.f32.mrf.mxu0
          %v6846 = vadd.f32 %v6806, %v6845
          %v6847 = vpop.f32.mrf.mxu0
          %v6848 = vpop.f32.mrf.mxu0
          %v6849 = vpop.f32.mrf.mxu0
          %6850 = vdwg.mxu0
          %v6851 = vmax.f32 %v6521, 0.0
          %v6852 = vmax.f32 %v6523, 0.0
          %v6853 = vmax.f32 %v6685, 0.0
          %v6854 = vmax.f32 %v6687, 0.0
          %v6855 = vmax.f32 %v6846, 0.0
          %v6856 = vpack.c.bf16 %v6851, %v6851
          %v6857 = vpack.c.bf16 %v6852, %v6852
          %v6858 = vpack.c.bf16 %v6853, %v6853
          %v6859 = vpack.c.bf16 %v6854, %v6854
          %v6860 = vpack.c.bf16 %v6855, %v6855
          %v6861 = vld [vmem:[#allocation12] sm:$0xf]
          %v6862 = vld [vmem:[#allocation12 + $0x4] sm:$0xf]
          %v6863 = vld [vmem:[#allocation12 + $0x8] sm:$0xf]
          %v6864 = vld [vmem:[#allocation12 + $0xc] sm:$0xf]
          %v6865 = vld [vmem:[#allocation12 + $0x10] sm:$0xf]
          %v6866 = vld [vmem:[#allocation12 + $0x14] sm:$0xf]
          %v6867 = vld [vmem:[#allocation12 + $0x18] sm:$0xf]
          %v6868 = vld [vmem:[#allocation12 + $0x1c] sm:$0xf]
          %v6869 = vld [vmem:[#allocation12 + $0x20] sm:$0xf]
          %v6870 = vld [vmem:[#allocation12 + $0x24] sm:$0xf]
          %v6871 = vld [vmem:[#allocation12 + $0x28] sm:$0xf]
          %v6872 = vld [vmem:[#allocation12 + $0x2c] sm:$0xf]
          %v6873 = vld [vmem:[#allocation12 + $0x30] sm:$0xf]
          %v6874 = vld [vmem:[#allocation12 + $0x34] sm:$0xf]
          %v6875 = vld [vmem:[#allocation12 + $0x38] sm:$0xf]
          %v6876 = vld [vmem:[#allocation12 + $0x3c] sm:$0xf]
          %v6877 = vld [vmem:[#allocation12 + $0x40] sm:$0xf]
          %v6878 = vld [vmem:[#allocation12 + $0x44] sm:$0xf]
          %v6879 = vld [vmem:[#allocation12 + $0x48] sm:$0xf]
          %v6880 = vld [vmem:[#allocation12 + $0x4c] sm:$0xf]
          %v6881 = vld [vmem:[#allocation12 + $0x50] sm:$0xf]
          %v6882 = vld [vmem:[#allocation12 + $0x54] sm:$0xf]
          %v6883 = vld [vmem:[#allocation12 + $0x58] sm:$0xf]
          %v6884 = vld [vmem:[#allocation12 + $0x5c] sm:$0xf]
          %v6885 = vld [vmem:[#allocation12 + $0x60] sm:$0xf]
          %v6886 = vld [vmem:[#allocation12 + $0x64] sm:$0xf]
          %v6887 = vld [vmem:[#allocation12 + $0x68] sm:$0xf]
          %v6888 = vld [vmem:[#allocation12 + $0x6c] sm:$0xf]
          %v6889 = vld [vmem:[#allocation12 + $0x70] sm:$0xf]
          %v6890 = vld [vmem:[#allocation12 + $0x74] sm:$0xf]
          %v6891 = vld [vmem:[#allocation12 + $0x78] sm:$0xf]
          %v6892 = vld [vmem:[#allocation12 + $0x7c] sm:$0xf]
          %v6893 = vld [vmem:[#allocation12 + $0x80] sm:$0xf]
          %v6894 = vld [vmem:[#allocation12 + $0x84] sm:$0xf]
          %v6895 = vld [vmem:[#allocation12 + $0x88] sm:$0xf]
          %v6896 = vld [vmem:[#allocation12 + $0x8c] sm:$0xf]
          %v6897 = vld [vmem:[#allocation12 + $0x90] sm:$0xf]
          %v6898 = vld [vmem:[#allocation12 + $0x94] sm:$0xf]
          %v6899 = vld [vmem:[#allocation12 + $0x98] sm:$0xf]
          %v6900 = vld [vmem:[#allocation12 + $0x9c] sm:$0xf]
          %v6901 = vld [vmem:[#allocation12 + $0xa0] sm:$0xf]
          %v6902 = vld [vmem:[#allocation12 + $0xa4] sm:$0xf]
          %v6903 = vld [vmem:[#allocation12 + $0xa8] sm:$0xf]
          %v6904 = vld [vmem:[#allocation12 + $0xac] sm:$0xf]
          %v6905 = vld [vmem:[#allocation12 + $0xb0] sm:$0xf]
          %v6906 = vld [vmem:[#allocation12 + $0xb4] sm:$0xf]
          %v6907 = vld [vmem:[#allocation12 + $0xb8] sm:$0xf]
          %v6908 = vld [vmem:[#allocation12 + $0xbc] sm:$0xf]
          %v6909 = vld [vmem:[#allocation12 + $0xc0] sm:$0xf]
          %v6910 = vld [vmem:[#allocation12 + $0xc4] sm:$0xf]
          %v6911 = vld [vmem:[#allocation12 + $0xc8] sm:$0xf]
          %v6912 = vld [vmem:[#allocation12 + $0xcc] sm:$0xf]
          %v6913 = vld [vmem:[#allocation12 + $0xd0] sm:$0xf]
          %v6914 = vld [vmem:[#allocation12 + $0xd4] sm:$0xf]
          %v6915 = vld [vmem:[#allocation12 + $0xd8] sm:$0xf]
          %v6916 = vld [vmem:[#allocation12 + $0xdc] sm:$0xf]
          %v6917 = vld [vmem:[#allocation12 + $0xe0] sm:$0xf]
          %v6918 = vld [vmem:[#allocation12 + $0xe4] sm:$0xf]
          %v6919 = vld [vmem:[#allocation12 + $0xe8] sm:$0xf]
          %v6920 = vld [vmem:[#allocation12 + $0xec] sm:$0xf]
          %v6921 = vld [vmem:[#allocation12 + $0xf0] sm:$0xf]
          %v6922 = vld [vmem:[#allocation12 + $0xf4] sm:$0xf]
          %v6923 = vld [vmem:[#allocation12 + $0xf8] sm:$0xf]
          %v6924 = vld [vmem:[#allocation12 + $0xfc] sm:$0xf]
          %v6925 = vld [vmem:[#allocation12 + $0x100] sm:$0xf]
          %v6926 = vld [vmem:[#allocation12 + $0x104] sm:$0xf]
          %v6927 = vld [vmem:[#allocation12 + $0x108] sm:$0xf]
          %v6928 = vld [vmem:[#allocation12 + $0x10c] sm:$0xf]
          %v6929 = vld [vmem:[#allocation12 + $0x110] sm:$0xf]
          %v6930 = vld [vmem:[#allocation12 + $0x114] sm:$0xf]
          %v6931 = vld [vmem:[#allocation12 + $0x118] sm:$0xf]
          %v6932 = vld [vmem:[#allocation12 + $0x11c] sm:$0xf]
          %v6933 = vld [vmem:[#allocation12 + $0x120] sm:$0xf]
          %v6934 = vld [vmem:[#allocation12 + $0x124] sm:$0xf]
          %v6935 = vld [vmem:[#allocation12 + $0x128] sm:$0xf]
          %v6936 = vld [vmem:[#allocation12 + $0x12c] sm:$0xf]
          %v6937 = vld [vmem:[#allocation12 + $0x130] sm:$0xf]
          %v6938 = vld [vmem:[#allocation12 + $0x134] sm:$0xf]
          %v6939 = vld [vmem:[#allocation12 + $0x138] sm:$0xf]
          %v6940 = vld [vmem:[#allocation12 + $0x13c] sm:$0xf]
          %v6941 = vld [vmem:[#allocation14] sm:$0x1]
          %v6943 = vlaneseq
          %v6944 = vshrl.u32 %v6943, 7
          %v6945 = vsub.s32 0, %v6944
          %v6946 = vrot.slane %v6941, %v6945
          %v7028 = vunpack.c.l.b16 %v6861
          %v7029 = vunpack.c.l.b16 %v6862
          %v7030 = vunpack.c.l.b16 %v6863
          %v7031 = vunpack.c.l.b16 %v6864
          %v7032 = vunpack.c.l.b16 %v6865
          %v7033 = vunpack.c.l.b16 %v6866
          %v7034 = vunpack.c.l.b16 %v6867
          %v7035 = vunpack.c.l.b16 %v6868
          %v7036 = vunpack.c.l.b16 %v6869
          %v7037 = vunpack.c.l.b16 %v6870
          %v7038 = vunpack.c.l.b16 %v6871
          %v7039 = vunpack.c.l.b16 %v6872
          %v7040 = vunpack.c.l.b16 %v6873
          %v7041 = vunpack.c.l.b16 %v6874
          %v7042 = vunpack.c.l.b16 %v6875
          %v7043 = vunpack.c.l.b16 %v6876
          %v7044 = vunpack.c.l.b16 %v6877
          %v7045 = vunpack.c.l.b16 %v6878
          %v7046 = vunpack.c.l.b16 %v6879
          %v7047 = vunpack.c.l.b16 %v6880
          %v7048 = vunpack.c.l.b16 %v6881
          %v7049 = vunpack.c.l.b16 %v6882
          %v7050 = vunpack.c.l.b16 %v6883
          %v7051 = vunpack.c.l.b16 %v6884
          %v7052 = vunpack.c.l.b16 %v6885
          %v7053 = vunpack.c.l.b16 %v6886
          %v7054 = vunpack.c.l.b16 %v6887
          %v7055 = vunpack.c.l.b16 %v6888
          %v7056 = vunpack.c.l.b16 %v6889
          %v7057 = vunpack.c.l.b16 %v6890
          %v7058 = vunpack.c.l.b16 %v6891
          %v7059 = vunpack.c.l.b16 %v6892
          %v7060 = vunpack.c.l.b16 %v6893
          %v7061 = vunpack.c.l.b16 %v6894
          %v7062 = vunpack.c.l.b16 %v6895
          %v7063 = vunpack.c.l.b16 %v6896
          %v7064 = vunpack.c.l.b16 %v6897
          %v7065 = vunpack.c.l.b16 %v6898
          %v7066 = vunpack.c.l.b16 %v6899
          %v7067 = vunpack.c.l.b16 %v6900
          %v7068 = vunpack.c.l.b16 %v6901
          %v7069 = vunpack.c.l.b16 %v6902
          %v7070 = vunpack.c.l.b16 %v6903
          %v7071 = vunpack.c.l.b16 %v6904
          %v7072 = vunpack.c.l.b16 %v6905
          %v7073 = vunpack.c.l.b16 %v6906
          %v7074 = vunpack.c.l.b16 %v6907
          %v7075 = vunpack.c.l.b16 %v6908
          %v7076 = vunpack.c.l.b16 %v6909
          %v7077 = vunpack.c.l.b16 %v6910
          %v7078 = vunpack.c.l.b16 %v6911
          %v7079 = vunpack.c.l.b16 %v6912
          %v7080 = vunpack.c.l.b16 %v6913
          %v7081 = vunpack.c.l.b16 %v6914
          %v7082 = vunpack.c.l.b16 %v6915
          %v7083 = vunpack.c.l.b16 %v6916
          %v7084 = vunpack.c.l.b16 %v6917
          %v7085 = vunpack.c.l.b16 %v6918
          %v7086 = vunpack.c.l.b16 %v6919
          %v7087 = vunpack.c.l.b16 %v6920
          %v7088 = vunpack.c.l.b16 %v6921
          %v7089 = vunpack.c.l.b16 %v6922
          %v7090 = vunpack.c.l.b16 %v6923
          %v7091 = vunpack.c.l.b16 %v6924
          %v7092 = vunpack.c.l.b16 %v6925
          %v7093 = vunpack.c.l.b16 %v6926
          %v7094 = vunpack.c.l.b16 %v6927
          %v7095 = vunpack.c.l.b16 %v6928
          %v7096 = vunpack.c.l.b16 %v6929
          %v7097 = vunpack.c.l.b16 %v6930
          %v7098 = vunpack.c.l.b16 %v6931
          %v7099 = vunpack.c.l.b16 %v6932
          %v7100 = vunpack.c.l.b16 %v6933
          %v7101 = vunpack.c.l.b16 %v6934
          %v7102 = vunpack.c.l.b16 %v6935
          %v7103 = vunpack.c.l.b16 %v6936
          %v7104 = vunpack.c.l.b16 %v6937
          %v7105 = vunpack.c.l.b16 %v6938
          %v7106 = vunpack.c.l.b16 %v6939
          %v7107 = vunpack.c.l.b16 %v6940
          %v7108 = vpack.c.b16 %v7029, %v7028
          %v7109 = vpack.c.b16 %v7031, %v7030
          %v7110 = vpack.c.b16 %v7033, %v7032
          %v7111 = vpack.c.b16 %v7035, %v7034
          %v7112 = vpack.c.b16 %v7037, %v7036
          %v7113 = vpack.c.b16 %v7039, %v7038
          %v7114 = vpack.c.b16 %v7041, %v7040
          %v7115 = vpack.c.b16 %v7043, %v7042
          %v7116 = vpack.c.b16 %v7045, %v7044
          %v7117 = vpack.c.b16 %v7047, %v7046
          %v7118 = vpack.c.b16 %v7049, %v7048
          %v7119 = vpack.c.b16 %v7051, %v7050
          %v7120 = vpack.c.b16 %v7053, %v7052
          %v7121 = vpack.c.b16 %v7055, %v7054
          %v7122 = vpack.c.b16 %v7057, %v7056
          %v7123 = vpack.c.b16 %v7059, %v7058
          %v7124 = vpack.c.b16 %v7061, %v7060
          %v7125 = vpack.c.b16 %v7063, %v7062
          %v7126 = vpack.c.b16 %v7065, %v7064
          %v7127 = vpack.c.b16 %v7067, %v7066
          %v7128 = vpack.c.b16 %v7069, %v7068
          %v7129 = vpack.c.b16 %v7071, %v7070
          %v7130 = vpack.c.b16 %v7073, %v7072
          %v7131 = vpack.c.b16 %v7075, %v7074
          %v7132 = vpack.c.b16 %v7077, %v7076
          %v7133 = vpack.c.b16 %v7079, %v7078
          %v7134 = vpack.c.b16 %v7081, %v7080
          %v7135 = vpack.c.b16 %v7083, %v7082
          %v7136 = vpack.c.b16 %v7085, %v7084
          %v7137 = vpack.c.b16 %v7087, %v7086
          %v7138 = vpack.c.b16 %v7089, %v7088
          %v7139 = vpack.c.b16 %v7091, %v7090
          %v7140 = vpack.c.b16 %v7093, %v7092
          %v7141 = vpack.c.b16 %v7095, %v7094
          %v7142 = vpack.c.b16 %v7097, %v7096
          %v7143 = vpack.c.b16 %v7099, %v7098
          %v7144 = vpack.c.b16 %v7101, %v7100
          %v7145 = vpack.c.b16 %v7103, %v7102
          %v7146 = vpack.c.b16 %v7105, %v7104
          %v7147 = vpack.c.b16 %v7107, %v7106
          %7188 = vmatprep.subr.bf16.mxu0 0
          %7189 = vmatpush1.bf16.msra.mxu0 %v7115
          %7190 = vmatprep.subr.bf16.mxu0 0
          %7191 = vmatpush1.bf16.msra.mxu0 %v7114
          %7192 = vmatprep.subr.bf16.mxu0 0
          %7193 = vmatpush1.bf16.msra.mxu0 %v7113
          %7194 = vmatprep.subr.bf16.mxu0 0
          %7195 = vmatpush1.bf16.msra.mxu0 %v7112
          %7196 = vmatprep.subr.bf16.mxu0 0
          %7197 = vmatpush1.bf16.msra.mxu0 %v7111
          %7198 = vmatprep.subr.bf16.mxu0 0
          %7199 = vmatpush1.bf16.msra.mxu0 %v7110
          %7200 = vmatprep.subr.bf16.mxu0 0
          %7201 = vmatpush1.bf16.msra.mxu0 %v7109
          %7202 = vmatprep.subr.bf16.mxu0 0
          %7203 = vmatpush1.bf16.msra.mxu0 %v7108
          %7204 = vmatprep.subr.bf16.mxu0 0
          %7205 = vmatpush2.bf16.msra.mxu0 %v7123
          %7206 = vmatprep.subr.bf16.mxu0 0
          %7207 = vmatpush2.bf16.msra.mxu0 %v7122
          %7208 = vmatprep.subr.bf16.mxu0 0
          %7209 = vmatpush2.bf16.msra.mxu0 %v7121
          %7210 = vmatprep.subr.bf16.mxu0 0
          %7211 = vmatpush2.bf16.msra.mxu0 %v7120
          %7212 = vmatprep.subr.bf16.mxu0 0
          %7213 = vmatpush2.bf16.msra.mxu0 %v7119
          %7214 = vmatprep.subr.bf16.mxu0 0
          %7215 = vmatpush2.bf16.msra.mxu0 %v7118
          %7216 = vmatprep.subr.bf16.mxu0 0
          %7217 = vmatpush2.bf16.msra.mxu0 %v7117
          %7218 = vmatprep.subr.bf16.mxu0 0
          %7219 = vmatpush2.bf16.msra.mxu0 %v7116
          %7220 = vmatprep.mubr.bf16.mxu0 %v6857
          %7221 = vmatmul.mubr.bf16.gmra.mxu0 %v6856
          %v7222 = vpop.f32.mrf.mxu0
          %v7223 = vadd.f32 %v6946, %v7222
          %v7224 = vpop.f32.mrf.mxu0
          %v7225 = vpop.f32.mrf.mxu0
          %v7226 = vpop.f32.mrf.mxu0
          %7227 = vdwg.mxu0
          %7228 = vmatprep.subr.bf16.mxu0 0
          %7229 = vmatpush1.bf16.msra.mxu0 %v7131
          %7230 = vmatprep.subr.bf16.mxu0 0
          %7231 = vmatpush1.bf16.msra.mxu0 %v7130
          %7232 = vmatprep.subr.bf16.mxu0 0
          %7233 = vmatpush1.bf16.msra.mxu0 %v7129
          %7234 = vmatprep.subr.bf16.mxu0 0
          %7235 = vmatpush1.bf16.msra.mxu0 %v7128
          %7236 = vmatprep.subr.bf16.mxu0 0
          %7237 = vmatpush1.bf16.msra.mxu0 %v7127
          %7238 = vmatprep.subr.bf16.mxu0 0
          %7239 = vmatpush1.bf16.msra.mxu0 %v7126
          %7240 = vmatprep.subr.bf16.mxu0 0
          %7241 = vmatpush1.bf16.msra.mxu0 %v7125
          %7242 = vmatprep.subr.bf16.mxu0 0
          %7243 = vmatpush1.bf16.msra.mxu0 %v7124
          %7244 = vmatprep.subr.bf16.mxu0 0
          %7245 = vmatpush2.bf16.msra.mxu0 %v7139
          %7246 = vmatprep.subr.bf16.mxu0 0
          %7247 = vmatpush2.bf16.msra.mxu0 %v7138
          %7248 = vmatprep.subr.bf16.mxu0 0
          %7249 = vmatpush2.bf16.msra.mxu0 %v7137
          %7250 = vmatprep.subr.bf16.mxu0 0
          %7251 = vmatpush2.bf16.msra.mxu0 %v7136
          %7252 = vmatprep.subr.bf16.mxu0 0
          %7253 = vmatpush2.bf16.msra.mxu0 %v7135
          %7254 = vmatprep.subr.bf16.mxu0 0
          %7255 = vmatpush2.bf16.msra.mxu0 %v7134
          %7256 = vmatprep.subr.bf16.mxu0 0
          %7257 = vmatpush2.bf16.msra.mxu0 %v7133
          %7258 = vmatprep.subr.bf16.mxu0 0
          %7259 = vmatpush2.bf16.msra.mxu0 %v7132
          %7260 = vmatprep.mubr.bf16.mxu0 %v6859
          %7261 = vmatmul.mubr.bf16.gmra.mxu0 %v6858
          %v7262 = vpop.f32.mrf.mxu0
          %v7263 = vadd.f32 %v7223, %v7262
          %v7264 = vpop.f32.mrf.mxu0
          %v7265 = vpop.f32.mrf.mxu0
          %v7266 = vpop.f32.mrf.mxu0
          %7267 = vdwg.mxu0
          %7268 = vmatprep.subr.bf16.mxu0 0
          %7269 = vmatpush1.bf16.msra.mxu0 %v7147
          %7270 = vmatprep.subr.bf16.mxu0 0
          %7271 = vmatpush1.bf16.msra.mxu0 %v7146
          %7272 = vmatprep.subr.bf16.mxu0 0
          %7273 = vmatpush1.bf16.msra.mxu0 %v7145
          %7274 = vmatprep.subr.bf16.mxu0 0
          %7275 = vmatpush1.bf16.msra.mxu0 %v7144
          %7276 = vmatprep.subr.bf16.mxu0 0
          %7277 = vmatpush1.bf16.msra.mxu0 %v7143
          %7278 = vmatprep.subr.bf16.mxu0 0
          %7279 = vmatpush1.bf16.msra.mxu0 %v7142
          %7280 = vmatprep.subr.bf16.mxu0 0
          %7281 = vmatpush1.bf16.msra.mxu0 %v7141
          %7282 = vmatprep.subr.bf16.mxu0 0
          %7283 = vmatpush1.bf16.msra.mxu0 %v7140
          %7284 = vmatprep.subr.bf16.mxu0 0
          %7285 = vmatpush2.bf16.msra.mxu0 0
          %7286 = vmatprep.subr.bf16.mxu0 0
          %7287 = vmatpush2.bf16.msra.mxu0 0
          %7288 = vmatprep.subr.bf16.mxu0 0
          %7289 = vmatpush2.bf16.msra.mxu0 0
          %7290 = vmatprep.subr.bf16.mxu0 0
          %7291 = vmatpush2.bf16.msra.mxu0 0
          %7292 = vmatprep.subr.bf16.mxu0 0
          %7293 = vmatpush2.bf16.msra.mxu0 0
          %7294 = vmatprep.subr.bf16.mxu0 0
          %7295 = vmatpush2.bf16.msra.mxu0 0
          %7296 = vmatprep.subr.bf16.mxu0 0
          %7297 = vmatpush2.bf16.msra.mxu0 0
          %7298 = vmatprep.subr.bf16.mxu0 0
          %7299 = vmatpush2.bf16.msra.mxu0 0
          %7300 = vmatprep.mubr.bf16.mxu0 0
          %7301 = vmatmul.mubr.bf16.gmra.mxu0 %v6860
          %v7302 = vpop.f32.mrf.mxu0
          %v7303 = vadd.f32 %v7263, %v7302
          %v7304 = vpop.f32.mrf.mxu0
          %v7305 = vpop.f32.mrf.mxu0
          %v7306 = vpop.f32.mrf.mxu0
          %7307 = vdwg.mxu0
          %7308 = vst [vmem:[#allocation15] sm:$0xff] %v7303
        $region84: #{tpu_custom_call.1} parent=47 // pred_fallthru
          _
        // Predicated region
        $region85: #{tpu_custom_call.1} parent=47 // pred_check
          %p7309 = pneg %p216
        $region86: #{tpu_custom_call.1} parent=47 // pred_check_branch
          %7311 = sbr.rel (%p7309) target = $region88
        $region87: #{tpu_custom_call.1} parent=47 // pred_region
          %s7313 = ssub.s32 128, 128
          %7314 = vsyncadd [#allocation5], %s7313
          %s7315 = smul.addr %s31, 128
          %s7316 = scalar_lea.hbm %s7, %s7315
          %s7318 = sshll.u32 [#allocation15], 4
          %s7319 = int_to_ptr.vmem [resolvable:$true] %s7318
          %7321 = dma.vmem_to_hbm [thread:$0]  %s7319, 128, %s7316, [#allocation5]
        $region88: #{tpu_custom_call.1} parent=47 // pred_fallthru
          _
        // Predicated region
        $region89: #{tpu_custom_call.1} parent=47 // pred_check
          %p7322 = pneg %p216
        $region90: #{tpu_custom_call.1} parent=47 // pred_check_branch
          %7324 = sbr.rel (%p7322) target = $region92
        $region91: #{tpu_custom_call.1} parent=47 // pred_region
          %7325 = dma.done [#allocation5], 128
        $region92: #{tpu_custom_call.1} parent=47 // pred_fallthru
          _
      $region48: #{tpu_custom_call.1} parent=5 // pred_fallthru
        _
      %p7326 = scmp.le.s32.totalorder 2, %s22
      // Predicated region
      $region93: #{tpu_custom_call.1} parent=5 // pred_check
        %p7327 = pneg %p7326
      $region94: #{tpu_custom_call.1} parent=5 // pred_check_branch
        %7329 = sbr.rel (%p7327) target = $region96
      $region95: #{tpu_custom_call.1} parent=5 // pred_region
        %s7330 = ssub.s32 %s22, 2
      $region96: #{tpu_custom_call.1} parent=5 // pred_fallthru
        _
    $region6: #{tpu_custom_call.1} parent=1 // loop_footer
      %s26 = sadd.s32 1, %s22
    $region7: #{tpu_custom_call.1} parent=1 // loop_footer_branch
      %21 = sbr.rel target = $region3
    $region8: #{tpu_custom_call.1} parent=1 // loop_exit
      _
    %7331 = vsyncpa [#allocation4], 1
    %s7332 = scalar_lea.sflag [#allocation4], 1
    %7333 = vsyncpa %s7332, 1
    %7334 = vsyncpa [#allocation7], 1
    %s7335 = scalar_lea.sflag [#allocation7], 1
    %7336 = vsyncpa %s7335, 1
    %7337 = vsyncpa [#allocation10], 1
    %7338 = vsyncpa [#allocation13], 1
    %7339 = vsyncpa [#allocation5], 1
    %s7340 = scalar_lea.sflag [#allocation5], 1
    %7341 = vsyncpa %s7340, 1

</llo_original>
